<compile_context>
chip_gen: v7x
topology: tpu7x:2x2x1
jax: 0.10.0
libtpu: 0.0.40
codegen_flags: <defaults>
</compile_context>

<pallas_src>
import functools
import math

import numpy as np
import jax
import jax.numpy as jnp
from jax.experimental import pallas as pl
from jax.experimental.pallas import tpu as pltpu


# ------------------------------ fused kernel ---------------------------------

def fused_block_kernel(x_ref, wk_ref, cb_ref, w0t_ref, b0_ref, w1t_ref, b1_ref,
                       o_ref, xcol_ref, *, H):
    """conv3x3(+bias) -> lin0 -> lin1 -> relu for Bt batch elements.

    x_ref   : (M, W)   f32   M = Bt*C*H rows of the NCHW slab, W=256 on lanes
    wk_ref  : (R, 9R)  bf16  Kronecker-expanded conv weight, R = C*H
    cb_ref  : (R, 1)   f32   conv bias per (c, h) row
    w0t_ref : (W, W)   bf16  lin0.weight.T (in, out), pre-transposed
    b0_ref  : (1, W)   f32
    w1t_ref : (W, W)   bf16  lin1.weight.T (in, out), pre-transposed
    b1_ref  : (1, W)   f32
    o_ref   : (M, W)   f32
    xcol_ref: (9R, W)  bf16  VMEM scratch: per-batch-element im2col matrix
    """
    M, W = x_ref.shape
    R = wk_ref.shape[0]
    Bt = M // R

    s = x_ref[...]                                            # (M, W) f32

    # Skinny index masks (broadcast inside the selects).
    rid = jax.lax.broadcasted_iota(jnp.int32, (M, 1), 0) % H  # h position of row
    wid = jax.lax.broadcasted_iota(jnp.int32, (1, W), 1)      # lane position

    # Row (h) shifts via sublane roll over the whole stack (non-negative
    # shifts).  The rid masks zero every wrapped row: channel boundaries,
    # batch boundaries and the stack wrap all land on h==0 / h==H-1, so no
    # explicit zero-padding rows are needed.  Masks are applied in f32.
    rows = {
        0: s,
        1: jnp.where(rid != H - 1, pltpu.roll(s, M - 1, axis=0), 0.0),  # t[r]=s[r+1]
        -1: jnp.where(rid != 0, pltpu.roll(s, 1, axis=0), 0.0),         # t[r]=s[r-1]
    }
    col_ok = {0: None, 1: wid != W - 1, -1: wid != 0}          # width-edge pad

    # ---- conv: per batch element, stream the 9 taps into VMEM scratch and
    #      hit the MXU once with K = 9*C*H.  wk is shared across elements, so
    #      the conv matmul is per-element; lin0/lin1 below see all M rows.
    conv_parts = []
    for b in range(Bt):
        for kh in range(3):
            dh = kh - 1
            base = rows[dh][b * R:(b + 1) * R, :]              # (R, W) f32
            for kw in range(3):
                dw = kw - 1
                # t[:, w] = base[:, w + dw]  (lane rotate, non-negative shift)
                t = base if dw == 0 else pltpu.roll(base, (W - dw) % W, axis=1)
                if col_ok[dw] is not None:
                    t = jnp.where(col_ok[dw], t, 0.0)          # mask in f32
                tap = kh * 3 + kw
                xcol_ref[tap * R:(tap + 1) * R, :] = t.astype(jnp.bfloat16)
        conv_b = jax.lax.dot_general(
            wk_ref[...], xcol_ref[...], (((1,), (0,)), ((), ())),
            preferred_element_type=jnp.float32)                # (R, W) f32
        conv_parts.append(conv_b + cb_ref[...])
    conv = conv_parts[0] if Bt == 1 else jnp.concatenate(conv_parts, axis=0)

    # ---- lin0 (pre-transposed weight -> contract rhs dim 0, no vxpose) -----
    h0 = jax.lax.dot_general(
        conv.astype(jnp.bfloat16), w0t_ref[...], (((1,), (0,)), ((), ())),
        preferred_element_type=jnp.float32) + b0_ref[...]

    # TODO(synk): pipe_split() is a pipeline-stage marker with no compute, and
    # the reference's non-in-place x.add(constant) result is discarded, so
    # neither affects the forward output.

    # ---- lin1 + relu --------------------------------------------------------
    y = jax.lax.dot_general(
        h0.astype(jnp.bfloat16), w1t_ref[...], (((1,), (0,)), ((), ())),
        preferred_element_type=jnp.float32) + b1_ref[...]

    o_ref[...] = jnp.maximum(y, 0.0).astype(o_ref.dtype)


# ------------------------------- wrapper --------------------------------------

def prepare_params(params, H):
    """One-time parameter preprocessing (kept out of the per-step forward)."""
    conv_w = params["conv_w"]                              # (16, 16, 3, 3) OIHW
    C = conv_w.shape[0]
    W = params["lin0_w"].shape[0]
    eye_h = jnp.eye(H, dtype=jnp.float32)
    # WK[(co,h), tap*C*H + (ci,h')] = conv_w[co, ci, kh, kw] * delta(h, h')
    wk = jnp.concatenate(
        [jnp.kron(conv_w[:, :, kh, kw], eye_h)
         for kh in range(3) for kw in range(3)],
        axis=1).astype(jnp.bfloat16)                       # (C*H, 9*C*H)
    return dict(
        wk=wk,
        cb=jnp.repeat(params["conv_b"], H).reshape(C * H, 1).astype(jnp.float32),
        w0t=params["lin0_w"].T.astype(jnp.bfloat16),       # (in, out)
        b0=params["lin0_b"].reshape(1, W).astype(jnp.float32),
        w1t=params["lin1_w"].T.astype(jnp.bfloat16),       # (in, out)
        b1=params["lin1_b"].reshape(1, W).astype(jnp.float32),
    )


def _choose_bt(B, R):
    """Batch elements per grid step.

    Target M = Bt*R ~ 256 rows: full MXU row fill on v6e/v7x (2x256x256) and
    two full passes on v5e (4x128x128), while requiring B % Bt == 0.  On v7x
    with a batch large enough for >= 2 steps, the "parallel" grid axis still
    gives both TensorCores work.
    """
    target = max(1, 256 // R)
    for bt in range(min(B, target), 0, -1):
        if B % bt == 0:
            return bt
    return 1


@functools.partial(jax.jit, static_argnames=("H", "bt"))
def _block_forward_impl(x_rows, wk, cb, w0t, b0, w1t, b1, *, H, bt):
    Mtot, W = x_rows.shape
    R = wk.shape[0]
    M = bt * R
    steps = Mtot // M
    return pl.pallas_call(
        functools.partial(fused_block_kernel, H=H),
        out_shape=jax.ShapeDtypeStruct((Mtot, W), jnp.float32),
        grid=(steps,),
        in_specs=[
            pl.BlockSpec((M, W), lambda i: (i, 0)),
            pl.BlockSpec((R, 9 * R), lambda i: (0, 0)),
            pl.BlockSpec((R, 1), lambda i: (0, 0)),
            pl.BlockSpec((W, W), lambda i: (0, 0)),
            pl.BlockSpec((1, W), lambda i: (0, 0)),
            pl.BlockSpec((W, W), lambda i: (0, 0)),
            pl.BlockSpec((1, W), lambda i: (0, 0)),
        ],
        out_specs=pl.BlockSpec((M, W), lambda i: (i, 0)),
        scratch_shapes=[pltpu.VMEM((9 * R, W), jnp.bfloat16)],
        compiler_params=pltpu.CompilerParams(
            dimension_semantics=("parallel",)),
    )(x_rows, wk, cb, w0t, b0, w1t, b1)


def block_forward(x_nchw, prepped, constant=None):
    """Pallas version of Block.forward.  x_nchw: f32 [B, 16, H, 256]."""
    B, C, H, W = x_nchw.shape
    assert C == 16 and W == 256
    del constant  # non-in-place x.add(constant) is discarded in the reference
    R = C * H
    bt = _choose_bt(B, R)
    x_rows = x_nchw.reshape(B * R, W)         # free (contiguous) reshape
    out = _block_forward_impl(x_rows, prepped["wk"], prepped["cb"],
                              prepped["w0t"], prepped["b0"],
                              prepped["w1t"], prepped["b1"], H=H, bt=bt)
    return out.reshape(B, C, H, W)


# ---------------------------- reference (plain JAX) ----------------------------

def block_forward_ref(x, p):
    conv = jax.lax.conv_general_dilated(
        x, p["conv_w"], window_strides=(1, 1), padding="SAME",
        dimension_numbers=("NCHW", "OIHW", "NCHW"))
    conv = conv + p["conv_b"].reshape(1, 16, 1, 1)
    h = jnp.matmul(conv, p["lin0_w"].T) + p["lin0_b"]
    y = jnp.matmul(h, p["lin1_w"].T) + p["lin1_b"]
    return jnp.maximum(y, 0.0)


# ---------------------------------- main ---------------------------------------

if __name__ == "__main__":
    key = jax.random.PRNGKey(0)
    ks = jax.random.split(key, 8)

    # deterministic PyTorch-style (uniform +-1/sqrt(fan_in)) init
    k_conv = 1.0 / math.sqrt(16 * 3 * 3)
    k_lin = 1.0 / math.sqrt(256)
    params = {
        "conv_w": jax.random.uniform(ks[0], (16, 16, 3, 3), jnp.float32,
                                     -k_conv, k_conv),
        "conv_b": jax.random.uniform(ks[1], (16,), jnp.float32, -k_conv, k_conv),
        "lin0_w": jax.random.uniform(ks[2], (256, 256), jnp.float32,
                                     -k_lin, k_lin),
        "lin0_b": jax.random.uniform(ks[3], (256,), jnp.float32, -k_lin, k_lin),
        "lin1_w": jax.random.uniform(ks[4], (256, 256), jnp.float32,
                                     -k_lin, k_lin),
        "lin1_b": jax.random.uniform(ks[5], (256,), jnp.float32, -k_lin, k_lin),
    }

    # small input consistent with the module: 16 channels, last dim 256
    x = jax.random.normal(ks[6], (2, 16, 4, 256), jnp.float32)
    constant = jax.random.normal(ks[7], (2, 16, 4, 256), jnp.float32)

    prepped = prepare_params(params, H=x.shape[2])
    out = jax.block_until_ready(block_forward(x, prepped, constant=constant))

    ref = jax.block_until_ready(block_forward_ref(x, params))
    np.testing.assert_allclose(np.asarray(out), np.asarray(ref),
                               rtol=5e-2, atol=5e-2)

    print("KERNEL_OK")
</pallas_src>

<mosaic_0001>
module attributes {stable_mosaic.version = 11 : i64} {
  func.func @fused_block_kernel(%arg0: i32, %arg1: memref<128x256xf32, #tpu.memory_space<vmem>>, %arg2: memref<64x576xbf16, #tpu.memory_space<vmem>>, %arg3: memref<64x1xf32, #tpu.memory_space<vmem>>, %arg4: memref<256x256xbf16, #tpu.memory_space<vmem>>, %arg5: memref<1x256xf32, #tpu.memory_space<vmem>>, %arg6: memref<256x256xbf16, #tpu.memory_space<vmem>>, %arg7: memref<1x256xf32, #tpu.memory_space<vmem>>, %arg8: memref<128x256xf32, #tpu.memory_space<vmem>>, %arg9: memref<576x256xbf16, #tpu.memory_space<vmem>>) attributes {dimension_semantics = [#tpu.dimension_semantics<parallel>], iteration_bounds = array<i64: 1>, scalar_prefetch = 0 : i64, scratch_operands = 1 : i64, tpu.core_type = #tpu.core_type<tc>, window_params = [{transform_indices = @transform_0, window_bounds = array<i64: 128, 256>}, {pipeline_mode = #tpu.pipeline_mode<synchronous>, transform_indices = @transform_1, window_bounds = array<i64: 64, 576>}, {pipeline_mode = #tpu.pipeline_mode<synchronous>, transform_indices = @transform_2, window_bounds = array<i64: 64, 1>}, {pipeline_mode = #tpu.pipeline_mode<synchronous>, transform_indices = @transform_3, window_bounds = array<i64: 256, 256>}, {pipeline_mode = #tpu.pipeline_mode<synchronous>, transform_indices = @transform_4, window_bounds = array<i64: 1, 256>}, {pipeline_mode = #tpu.pipeline_mode<synchronous>, transform_indices = @transform_5, window_bounds = array<i64: 256, 256>}, {pipeline_mode = #tpu.pipeline_mode<synchronous>, transform_indices = @transform_6, window_bounds = array<i64: 1, 256>}, {transform_indices = @transform_7, window_bounds = array<i64: 128, 256>}]} {
    %c0 = arith.constant 0 : index
    %c0_0 = arith.constant 0 : index
    %0 = vector.load %arg1[%c0, %c0_0] : memref<128x256xf32, #tpu.memory_space<vmem>>, vector<128x256xf32>
    %1 = tpu.iota {dimensions = array<i32: 0>} : vector<128x1xi32>
    %c4_i32 = arith.constant 4 : i32
    %c0_i32 = arith.constant 0 : i32
    %2 = arith.cmpi eq, %c4_i32, %c0_i32 : i32
    %c1_i32 = arith.constant 1 : i32
    %3 = arith.select %2, %c1_i32, %c4_i32 : i32
    %4 = vector.broadcast %3 : i32 to vector<128x1xi32>
    %5 = arith.remsi %1, %4 : vector<128x1xi32>
    %c0_i32_1 = arith.constant 0 : i32
    %6 = vector.broadcast %c0_i32_1 : i32 to vector<128x1xi32>
    %7 = arith.cmpi ne, %5, %6 : vector<128x1xi32>
    %c0_i32_2 = arith.constant 0 : i32
    %8 = vector.broadcast %c0_i32_2 : i32 to vector<128x1xi32>
    %9 = arith.cmpi slt, %5, %8 : vector<128x1xi32>
    %c0_i32_3 = arith.constant 0 : i32
    %10 = arith.cmpi slt, %3, %c0_i32_3 : i32
    %11 = vector.broadcast %10 : i1 to vector<128x1xi1>
    %12 = vector.broadcast %11 : vector<128x1xi1> to vector<128x1xi1>
    %13 = arith.xori %9, %12 : vector<128x1xi1>
    %14 = arith.andi %13, %7 : vector<128x1xi1>
    %15 = vector.broadcast %3 : i32 to vector<128x1xi32>
    %16 = arith.addi %5, %15 : vector<128x1xi32>
    %17 = arith.select %14, %16, %5 : vector<128x1xi1>, vector<128x1xi32>
    %18 = tpu.iota {dimensions = array<i32: 1>} : vector<1x256xi32>
    %c3_i32 = arith.constant 3 : i32
    %19 = vector.broadcast %c3_i32 : i32 to vector<128x1xi32>
    %20 = arith.cmpi ne, %17, %19 : vector<128x1xi32>
    %c127_i32 = arith.constant 127 : i32
    %21 = tpu.dynamic_rotate %0 by %c127_i32 dim 0 : vector<128x256xf32>, i32 -> vector<128x256xf32>
    %cst = arith.constant 0.000000e+00 : f32
    %22 = vector.shape_cast %20 : vector<128x1xi1> to vector<128x1xi1>
    %23 = vector.broadcast %22 : vector<128x1xi1> to vector<128x256xi1>
    %24 = vector.broadcast %cst : f32 to vector<128x256xf32>
    %25 = arith.select %23, %21, %24 : vector<128x256xi1>, vector<128x256xf32>
    %c0_i32_4 = arith.constant 0 : i32
    %26 = vector.broadcast %c0_i32_4 : i32 to vector<128x1xi32>
    %27 = arith.cmpi ne, %17, %26 : vector<128x1xi32>
    %c1_i32_5 = arith.constant 1 : i32
    %28 = tpu.dynamic_rotate %0 by %c1_i32_5 dim 0 : vector<128x256xf32>, i32 -> vector<128x256xf32>
    %cst_6 = arith.constant 0.000000e+00 : f32
    %29 = vector.shape_cast %27 : vector<128x1xi1> to vector<128x1xi1>
    %30 = vector.broadcast %29 : vector<128x1xi1> to vector<128x256xi1>
    %31 = vector.broadcast %cst_6 : f32 to vector<128x256xf32>
    %32 = arith.select %30, %28, %31 : vector<128x256xi1>, vector<128x256xf32>
    %c255_i32 = arith.constant 255 : i32
    %33 = vector.broadcast %c255_i32 : i32 to vector<1x256xi32>
    %34 = arith.cmpi ne, %18, %33 : vector<1x256xi32>
    %c0_i32_7 = arith.constant 0 : i32
    %35 = vector.broadcast %c0_i32_7 : i32 to vector<1x256xi32>
    %36 = arith.cmpi ne, %18, %35 : vector<1x256xi32>
    %37 = vector.extract_strided_slice %32 {offsets = [0, 0], sizes = [64, 256], strides = [1, 1]} : vector<128x256xf32> to vector<64x256xf32>
    %c1_i32_8 = arith.constant 1 : i32
    %38 = tpu.dynamic_rotate %37 by %c1_i32_8 dim 1 : vector<64x256xf32>, i32 -> vector<64x256xf32>
    %cst_9 = arith.constant 0.000000e+00 : f32
    %39 = vector.shape_cast %36 : vector<1x256xi1> to vector<1x256xi1>
    %40 = vector.broadcast %39 : vector<1x256xi1> to vector<64x256xi1>
    %41 = vector.broadcast %cst_9 : f32 to vector<64x256xf32>
    %42 = arith.select %40, %38, %41 : vector<64x256xi1>, vector<64x256xf32>
    %43 = arith.truncf %42 : vector<64x256xf32> to vector<64x256xbf16>
    %c0_10 = arith.constant 0 : index
    %c0_11 = arith.constant 0 : index
    %44 = vector.load %arg9[%c0_10, %c0_11] : memref<576x256xbf16, #tpu.memory_space<vmem>>, vector<64x256xbf16>
    tpu.vector_store %arg9[%c0_10, %c0_11], %43 {strides = array<i32>} : memref<576x256xbf16, #tpu.memory_space<vmem>>, vector<64x256xbf16>,
    %45 = arith.truncf %37 : vector<64x256xf32> to vector<64x256xbf16>
    %c64 = arith.constant 64 : index
    %c0_12 = arith.constant 0 : index
    %46 = vector.load %arg9[%c64, %c0_12] : memref<576x256xbf16, #tpu.memory_space<vmem>>, vector<64x256xbf16>
    tpu.vector_store %arg9[%c64, %c0_12], %45 {strides = array<i32>} : memref<576x256xbf16, #tpu.memory_space<vmem>>, vector<64x256xbf16>,
    %c255_i32_13 = arith.constant 255 : i32
    %47 = tpu.dynamic_rotate %37 by %c255_i32_13 dim 1 : vector<64x256xf32>, i32 -> vector<64x256xf32>
    %cst_14 = arith.constant 0.000000e+00 : f32
    %48 = vector.shape_cast %34 : vector<1x256xi1> to vector<1x256xi1>
    %49 = vector.broadcast %48 : vector<1x256xi1> to vector<64x256xi1>
    %50 = vector.broadcast %cst_14 : f32 to vector<64x256xf32>
    %51 = arith.select %49, %47, %50 : vector<64x256xi1>, vector<64x256xf32>
    %52 = arith.truncf %51 : vector<64x256xf32> to vector<64x256xbf16>
    %c128 = arith.constant 128 : index
    %c0_15 = arith.constant 0 : index
    %53 = vector.load %arg9[%c128, %c0_15] : memref<576x256xbf16, #tpu.memory_space<vmem>>, vector<64x256xbf16>
    tpu.vector_store %arg9[%c128, %c0_15], %52 {strides = array<i32>} : memref<576x256xbf16, #tpu.memory_space<vmem>>, vector<64x256xbf16>,
    %54 = vector.extract_strided_slice %0 {offsets = [0, 0], sizes = [64, 256], strides = [1, 1]} : vector<128x256xf32> to vector<64x256xf32>
    %c1_i32_16 = arith.constant 1 : i32
    %55 = tpu.dynamic_rotate %54 by %c1_i32_16 dim 1 : vector<64x256xf32>, i32 -> vector<64x256xf32>
    %cst_17 = arith.constant 0.000000e+00 : f32
    %56 = vector.shape_cast %36 : vector<1x256xi1> to vector<1x256xi1>
    %57 = vector.broadcast %56 : vector<1x256xi1> to vector<64x256xi1>
    %58 = vector.broadcast %cst_17 : f32 to vector<64x256xf32>
    %59 = arith.select %57, %55, %58 : vector<64x256xi1>, vector<64x256xf32>
    %60 = arith.truncf %59 : vector<64x256xf32> to vector<64x256xbf16>
    %c192 = arith.constant 192 : index
    %c0_18 = arith.constant 0 : index
    %61 = vector.load %arg9[%c192, %c0_18] : memref<576x256xbf16, #tpu.memory_space<vmem>>, vector<64x256xbf16>
    tpu.vector_store %arg9[%c192, %c0_18], %60 {strides = array<i32>} : memref<576x256xbf16, #tpu.memory_space<vmem>>, vector<64x256xbf16>,
    %62 = arith.truncf %54 : vector<64x256xf32> to vector<64x256xbf16>
    %c256 = arith.constant 256 : index
    %c0_19 = arith.constant 0 : index
    %63 = vector.load %arg9[%c256, %c0_19] : memref<576x256xbf16, #tpu.memory_space<vmem>>, vector<64x256xbf16>
    tpu.vector_store %arg9[%c256, %c0_19], %62 {strides = array<i32>} : memref<576x256xbf16, #tpu.memory_space<vmem>>, vector<64x256xbf16>,
    %c255_i32_20 = arith.constant 255 : i32
    %64 = tpu.dynamic_rotate %54 by %c255_i32_20 dim 1 : vector<64x256xf32>, i32 -> vector<64x256xf32>
    %cst_21 = arith.constant 0.000000e+00 : f32
    %65 = vector.shape_cast %34 : vector<1x256xi1> to vector<1x256xi1>
    %66 = vector.broadcast %65 : vector<1x256xi1> to vector<64x256xi1>
    %67 = vector.broadcast %cst_21 : f32 to vector<64x256xf32>
    %68 = arith.select %66, %64, %67 : vector<64x256xi1>, vector<64x256xf32>
    %69 = arith.truncf %68 : vector<64x256xf32> to vector<64x256xbf16>
    %c320 = arith.constant 320 : index
    %c0_22 = arith.constant 0 : index
    %70 = vector.load %arg9[%c320, %c0_22] : memref<576x256xbf16, #tpu.memory_space<vmem>>, vector<64x256xbf16>
    tpu.vector_store %arg9[%c320, %c0_22], %69 {strides = array<i32>} : memref<576x256xbf16, #tpu.memory_space<vmem>>, vector<64x256xbf16>,
    %71 = vector.extract_strided_slice %25 {offsets = [0, 0], sizes = [64, 256], strides = [1, 1]} : vector<128x256xf32> to vector<64x256xf32>
    %c1_i32_23 = arith.constant 1 : i32
    %72 = tpu.dynamic_rotate %71 by %c1_i32_23 dim 1 : vector<64x256xf32>, i32 -> vector<64x256xf32>
    %cst_24 = arith.constant 0.000000e+00 : f32
    %73 = vector.shape_cast %36 : vector<1x256xi1> to vector<1x256xi1>
    %74 = vector.broadcast %73 : vector<1x256xi1> to vector<64x256xi1>
    %75 = vector.broadcast %cst_24 : f32 to vector<64x256xf32>
    %76 = arith.select %74, %72, %75 : vector<64x256xi1>, vector<64x256xf32>
    %77 = arith.truncf %76 : vector<64x256xf32> to vector<64x256xbf16>
    %c384 = arith.constant 384 : index
    %c0_25 = arith.constant 0 : index
    %78 = vector.load %arg9[%c384, %c0_25] : memref<576x256xbf16, #tpu.memory_space<vmem>>, vector<64x256xbf16>
    tpu.vector_store %arg9[%c384, %c0_25], %77 {strides = array<i32>} : memref<576x256xbf16, #tpu.memory_space<vmem>>, vector<64x256xbf16>,
    %79 = arith.truncf %71 : vector<64x256xf32> to vector<64x256xbf16>
    %c448 = arith.constant 448 : index
    %c0_26 = arith.constant 0 : index
    %80 = vector.load %arg9[%c448, %c0_26] : memref<576x256xbf16, #tpu.memory_space<vmem>>, vector<64x256xbf16>
    tpu.vector_store %arg9[%c448, %c0_26], %79 {strides = array<i32>} : memref<576x256xbf16, #tpu.memory_space<vmem>>, vector<64x256xbf16>,
    %c255_i32_27 = arith.constant 255 : i32
    %81 = tpu.dynamic_rotate %71 by %c255_i32_27 dim 1 : vector<64x256xf32>, i32 -> vector<64x256xf32>
    %cst_28 = arith.constant 0.000000e+00 : f32
    %82 = vector.shape_cast %34 : vector<1x256xi1> to vector<1x256xi1>
    %83 = vector.broadcast %82 : vector<1x256xi1> to vector<64x256xi1>
    %84 = vector.broadcast %cst_28 : f32 to vector<64x256xf32>
    %85 = arith.select %83, %81, %84 : vector<64x256xi1>, vector<64x256xf32>
    %86 = arith.truncf %85 : vector<64x256xf32> to vector<64x256xbf16>
    %c512 = arith.constant 512 : index
    %c0_29 = arith.constant 0 : index
    %87 = vector.load %arg9[%c512, %c0_29] : memref<576x256xbf16, #tpu.memory_space<vmem>>, vector<64x256xbf16>
    tpu.vector_store %arg9[%c512, %c0_29], %86 {strides = array<i32>} : memref<576x256xbf16, #tpu.memory_space<vmem>>, vector<64x256xbf16>,
    %c0_30 = arith.constant 0 : index
    %c0_31 = arith.constant 0 : index
    %88 = vector.load %arg2[%c0_30, %c0_31] : memref<64x576xbf16, #tpu.memory_space<vmem>>, vector<64x576xbf16>
    %c0_32 = arith.constant 0 : index
    %c0_33 = arith.constant 0 : index
    %89 = vector.load %arg9[%c0_32, %c0_33] : memref<576x256xbf16, #tpu.memory_space<vmem>>, vector<576x256xbf16>
    %cst_34 = arith.constant dense<0.000000e+00> : vector<64x256xf32>
    %90 = tpu.matmul %88, %89, %cst_34 {dimension_numbers = #tpu.dot_dimension_numbers<[1], [0], [0], [1], [0, 0, 1, 1], [], []>} : vector<64x576xbf16>, vector<576x256xbf16>, vector<64x256xf32> -> vector<64x256xf32>
    %c0_35 = arith.constant 0 : index
    %c0_36 = arith.constant 0 : index
    %91 = vector.load %arg3[%c0_35, %c0_36] : memref<64x1xf32, #tpu.memory_space<vmem>>, vector<64x1xf32>
    %92 = vector.broadcast %91 : vector<64x1xf32> to vector<64x256xf32>
    %93 = arith.addf %90, %92 : vector<64x256xf32>
    %94 = vector.extract_strided_slice %32 {offsets = [64, 0], sizes = [64, 256], strides = [1, 1]} : vector<128x256xf32> to vector<64x256xf32>
    %c1_i32_37 = arith.constant 1 : i32
    %95 = tpu.dynamic_rotate %94 by %c1_i32_37 dim 1 : vector<64x256xf32>, i32 -> vector<64x256xf32>
    %cst_38 = arith.constant 0.000000e+00 : f32
    %96 = vector.shape_cast %36 : vector<1x256xi1> to vector<1x256xi1>
    %97 = vector.broadcast %96 : vector<1x256xi1> to vector<64x256xi1>
    %98 = vector.broadcast %cst_38 : f32 to vector<64x256xf32>
    %99 = arith.select %97, %95, %98 : vector<64x256xi1>, vector<64x256xf32>
    %100 = arith.truncf %99 : vector<64x256xf32> to vector<64x256xbf16>
    %c0_39 = arith.constant 0 : index
    %c0_40 = arith.constant 0 : index
    %101 = vector.load %arg9[%c0_39, %c0_40] : memref<576x256xbf16, #tpu.memory_space<vmem>>, vector<64x256xbf16>
    tpu.vector_store %arg9[%c0_39, %c0_40], %100 {strides = array<i32>} : memref<576x256xbf16, #tpu.memory_space<vmem>>, vector<64x256xbf16>,
    %102 = arith.truncf %94 : vector<64x256xf32> to vector<64x256xbf16>
    %c64_41 = arith.constant 64 : index
    %c0_42 = arith.constant 0 : index
    %103 = vector.load %arg9[%c64_41, %c0_42] : memref<576x256xbf16, #tpu.memory_space<vmem>>, vector<64x256xbf16>
    tpu.vector_store %arg9[%c64_41, %c0_42], %102 {strides = array<i32>} : memref<576x256xbf16, #tpu.memory_space<vmem>>, vector<64x256xbf16>,
    %c255_i32_43 = arith.constant 255 : i32
    %104 = tpu.dynamic_rotate %94 by %c255_i32_43 dim 1 : vector<64x256xf32>, i32 -> vector<64x256xf32>
    %cst_44 = arith.constant 0.000000e+00 : f32
    %105 = vector.shape_cast %34 : vector<1x256xi1> to vector<1x256xi1>
    %106 = vector.broadcast %105 : vector<1x256xi1> to vector<64x256xi1>
    %107 = vector.broadcast %cst_44 : f32 to vector<64x256xf32>
    %108 = arith.select %106, %104, %107 : vector<64x256xi1>, vector<64x256xf32>
    %109 = arith.truncf %108 : vector<64x256xf32> to vector<64x256xbf16>
    %c128_45 = arith.constant 128 : index
    %c0_46 = arith.constant 0 : index
    %110 = vector.load %arg9[%c128_45, %c0_46] : memref<576x256xbf16, #tpu.memory_space<vmem>>, vector<64x256xbf16>
    tpu.vector_store %arg9[%c128_45, %c0_46], %109 {strides = array<i32>} : memref<576x256xbf16, #tpu.memory_space<vmem>>, vector<64x256xbf16>,
    %111 = vector.extract_strided_slice %0 {offsets = [64, 0], sizes = [64, 256], strides = [1, 1]} : vector<128x256xf32> to vector<64x256xf32>
    %c1_i32_47 = arith.constant 1 : i32
    %112 = tpu.dynamic_rotate %111 by %c1_i32_47 dim 1 : vector<64x256xf32>, i32 -> vector<64x256xf32>
    %cst_48 = arith.constant 0.000000e+00 : f32
    %113 = vector.shape_cast %36 : vector<1x256xi1> to vector<1x256xi1>
    %114 = vector.broadcast %113 : vector<1x256xi1> to vector<64x256xi1>
    %115 = vector.broadcast %cst_48 : f32 to vector<64x256xf32>
    %116 = arith.select %114, %112, %115 : vector<64x256xi1>, vector<64x256xf32>
    %117 = arith.truncf %116 : vector<64x256xf32> to vector<64x256xbf16>
    %c192_49 = arith.constant 192 : index
    %c0_50 = arith.constant 0 : index
    %118 = vector.load %arg9[%c192_49, %c0_50] : memref<576x256xbf16, #tpu.memory_space<vmem>>, vector<64x256xbf16>
    tpu.vector_store %arg9[%c192_49, %c0_50], %117 {strides = array<i32>} : memref<576x256xbf16, #tpu.memory_space<vmem>>, vector<64x256xbf16>,
    %119 = arith.truncf %111 : vector<64x256xf32> to vector<64x256xbf16>
    %c256_51 = arith.constant 256 : index
    %c0_52 = arith.constant 0 : index
    %120 = vector.load %arg9[%c256_51, %c0_52] : memref<576x256xbf16, #tpu.memory_space<vmem>>, vector<64x256xbf16>
    tpu.vector_store %arg9[%c256_51, %c0_52], %119 {strides = array<i32>} : memref<576x256xbf16, #tpu.memory_space<vmem>>, vector<64x256xbf16>,
    %c255_i32_53 = arith.constant 255 : i32
    %121 = tpu.dynamic_rotate %111 by %c255_i32_53 dim 1 : vector<64x256xf32>, i32 -> vector<64x256xf32>
    %cst_54 = arith.constant 0.000000e+00 : f32
    %122 = vector.shape_cast %34 : vector<1x256xi1> to vector<1x256xi1>
    %123 = vector.broadcast %122 : vector<1x256xi1> to vector<64x256xi1>
    %124 = vector.broadcast %cst_54 : f32 to vector<64x256xf32>
    %125 = arith.select %123, %121, %124 : vector<64x256xi1>, vector<64x256xf32>
    %126 = arith.truncf %125 : vector<64x256xf32> to vector<64x256xbf16>
    %c320_55 = arith.constant 320 : index
    %c0_56 = arith.constant 0 : index
    %127 = vector.load %arg9[%c320_55, %c0_56] : memref<576x256xbf16, #tpu.memory_space<vmem>>, vector<64x256xbf16>
    tpu.vector_store %arg9[%c320_55, %c0_56], %126 {strides = array<i32>} : memref<576x256xbf16, #tpu.memory_space<vmem>>, vector<64x256xbf16>,
    %128 = vector.extract_strided_slice %25 {offsets = [64, 0], sizes = [64, 256], strides = [1, 1]} : vector<128x256xf32> to vector<64x256xf32>
    %c1_i32_57 = arith.constant 1 : i32
    %129 = tpu.dynamic_rotate %128 by %c1_i32_57 dim 1 : vector<64x256xf32>, i32 -> vector<64x256xf32>
    %cst_58 = arith.constant 0.000000e+00 : f32
    %130 = vector.shape_cast %36 : vector<1x256xi1> to vector<1x256xi1>
    %131 = vector.broadcast %130 : vector<1x256xi1> to vector<64x256xi1>
    %132 = vector.broadcast %cst_58 : f32 to vector<64x256xf32>
    %133 = arith.select %131, %129, %132 : vector<64x256xi1>, vector<64x256xf32>
    %134 = arith.truncf %133 : vector<64x256xf32> to vector<64x256xbf16>
    %c384_59 = arith.constant 384 : index
    %c0_60 = arith.constant 0 : index
    %135 = vector.load %arg9[%c384_59, %c0_60] : memref<576x256xbf16, #tpu.memory_space<vmem>>, vector<64x256xbf16>
    tpu.vector_store %arg9[%c384_59, %c0_60], %134 {strides = array<i32>} : memref<576x256xbf16, #tpu.memory_space<vmem>>, vector<64x256xbf16>,
    %136 = arith.truncf %128 : vector<64x256xf32> to vector<64x256xbf16>
    %c448_61 = arith.constant 448 : index
    %c0_62 = arith.constant 0 : index
    %137 = vector.load %arg9[%c448_61, %c0_62] : memref<576x256xbf16, #tpu.memory_space<vmem>>, vector<64x256xbf16>
    tpu.vector_store %arg9[%c448_61, %c0_62], %136 {strides = array<i32>} : memref<576x256xbf16, #tpu.memory_space<vmem>>, vector<64x256xbf16>,
    %c255_i32_63 = arith.constant 255 : i32
    %138 = tpu.dynamic_rotate %128 by %c255_i32_63 dim 1 : vector<64x256xf32>, i32 -> vector<64x256xf32>
    %cst_64 = arith.constant 0.000000e+00 : f32
    %139 = vector.shape_cast %34 : vector<1x256xi1> to vector<1x256xi1>
    %140 = vector.broadcast %139 : vector<1x256xi1> to vector<64x256xi1>
    %141 = vector.broadcast %cst_64 : f32 to vector<64x256xf32>
    %142 = arith.select %140, %138, %141 : vector<64x256xi1>, vector<64x256xf32>
    %143 = arith.truncf %142 : vector<64x256xf32> to vector<64x256xbf16>
    %c512_65 = arith.constant 512 : index
    %c0_66 = arith.constant 0 : index
    %144 = vector.load %arg9[%c512_65, %c0_66] : memref<576x256xbf16, #tpu.memory_space<vmem>>, vector<64x256xbf16>
    tpu.vector_store %arg9[%c512_65, %c0_66], %143 {strides = array<i32>} : memref<576x256xbf16, #tpu.memory_space<vmem>>, vector<64x256xbf16>,
    %c0_67 = arith.constant 0 : index
    %c0_68 = arith.constant 0 : index
    %145 = vector.load %arg2[%c0_67, %c0_68] : memref<64x576xbf16, #tpu.memory_space<vmem>>, vector<64x576xbf16>
    %c0_69 = arith.constant 0 : index
    %c0_70 = arith.constant 0 : index
    %146 = vector.load %arg9[%c0_69, %c0_70] : memref<576x256xbf16, #tpu.memory_space<vmem>>, vector<576x256xbf16>
    %cst_71 = arith.constant dense<0.000000e+00> : vector<64x256xf32>
    %147 = tpu.matmul %145, %146, %cst_71 {dimension_numbers = #tpu.dot_dimension_numbers<[1], [0], [0], [1], [0, 0, 1, 1], [], []>} : vector<64x576xbf16>, vector<576x256xbf16>, vector<64x256xf32> -> vector<64x256xf32>
    %c0_72 = arith.constant 0 : index
    %c0_73 = arith.constant 0 : index
    %148 = vector.load %arg3[%c0_72, %c0_73] : memref<64x1xf32, #tpu.memory_space<vmem>>, vector<64x1xf32>
    %149 = vector.broadcast %148 : vector<64x1xf32> to vector<64x256xf32>
    %150 = arith.addf %147, %149 : vector<64x256xf32>
    %151 = tpu.concatenate %93, %150 in 0 : vector<64x256xf32>, vector<64x256xf32> -> vector<128x256xf32>
    %152 = arith.truncf %151 : vector<128x256xf32> to vector<128x256xbf16>
    %c0_74 = arith.constant 0 : index
    %c0_75 = arith.constant 0 : index
    %153 = vector.load %arg4[%c0_74, %c0_75] : memref<256x256xbf16, #tpu.memory_space<vmem>>, vector<256x256xbf16>
    %cst_76 = arith.constant dense<0.000000e+00> : vector<128x256xf32>
    %154 = tpu.matmul %152, %153, %cst_76 {dimension_numbers = #tpu.dot_dimension_numbers<[1], [0], [0], [1], [0, 0, 1, 1], [], []>} : vector<128x256xbf16>, vector<256x256xbf16>, vector<128x256xf32> -> vector<128x256xf32>
    %c0_77 = arith.constant 0 : index
    %c0_78 = arith.constant 0 : index
    %155 = vector.load %arg5[%c0_77, %c0_78] : memref<1x256xf32, #tpu.memory_space<vmem>>, vector<1x256xf32>
    %156 = vector.broadcast %155 : vector<1x256xf32> to vector<128x256xf32>
    %157 = arith.addf %154, %156 : vector<128x256xf32>
    %158 = arith.truncf %157 : vector<128x256xf32> to vector<128x256xbf16>
    %c0_79 = arith.constant 0 : index
    %c0_80 = arith.constant 0 : index
    %159 = vector.load %arg6[%c0_79, %c0_80] : memref<256x256xbf16, #tpu.memory_space<vmem>>, vector<256x256xbf16>
    %cst_81 = arith.constant dense<0.000000e+00> : vector<128x256xf32>
    %160 = tpu.matmul %158, %159, %cst_81 {dimension_numbers = #tpu.dot_dimension_numbers<[1], [0], [0], [1], [0, 0, 1, 1], [], []>} : vector<128x256xbf16>, vector<256x256xbf16>, vector<128x256xf32> -> vector<128x256xf32>
    %c0_82 = arith.constant 0 : index
    %c0_83 = arith.constant 0 : index
    %161 = vector.load %arg7[%c0_82, %c0_83] : memref<1x256xf32, #tpu.memory_space<vmem>>, vector<1x256xf32>
    %162 = vector.broadcast %161 : vector<1x256xf32> to vector<128x256xf32>
    %163 = arith.addf %160, %162 : vector<128x256xf32>
    %cst_84 = arith.constant 0.000000e+00 : f32
    %164 = vector.broadcast %cst_84 : f32 to vector<128x256xf32>
    %165 = arith.maximumf %163, %164 : vector<128x256xf32>
    %c0_85 = arith.constant 0 : index
    %c0_86 = arith.constant 0 : index
    %166 = vector.load %arg8[%c0_85, %c0_86] : memref<128x256xf32, #tpu.memory_space<vmem>>, vector<128x256xf32>
    tpu.vector_store %arg8[%c0_85, %c0_86], %165 {strides = array<i32>} : memref<128x256xf32, #tpu.memory_space<vmem>>, vector<128x256xf32>,
    return
  }
  func.func @transform_0(%arg0: i32) -> (i32, i32) {
    %c0_i32 = arith.constant 0 : i32
    %c0_i32_0 = arith.constant 0 : i32
    return %arg0, %c0_i32 : i32, i32
  }
  func.func @transform_1(%arg0: i32) -> (i32, i32) {
    %c0_i32 = arith.constant 0 : i32
    %c0_i32_0 = arith.constant 0 : i32
    %c0_i32_1 = arith.constant 0 : i32
    return %c0_i32, %c0_i32_0 : i32, i32
  }
  func.func @transform_2(%arg0: i32) -> (i32, i32) {
    %c0_i32 = arith.constant 0 : i32
    %c0_i32_0 = arith.constant 0 : i32
    %c0_i32_1 = arith.constant 0 : i32
    return %c0_i32, %c0_i32_0 : i32, i32
  }
  func.func @transform_3(%arg0: i32) -> (i32, i32) {
    %c0_i32 = arith.constant 0 : i32
    %c0_i32_0 = arith.constant 0 : i32
    %c0_i32_1 = arith.constant 0 : i32
    return %c0_i32, %c0_i32_0 : i32, i32
  }
  func.func @transform_4(%arg0: i32) -> (i32, i32) {
    %c0_i32 = arith.constant 0 : i32
    %c0_i32_0 = arith.constant 0 : i32
    %c0_i32_1 = arith.constant 0 : i32
    return %c0_i32, %c0_i32_0 : i32, i32
  }
  func.func @transform_5(%arg0: i32) -> (i32, i32) {
    %c0_i32 = arith.constant 0 : i32
    %c0_i32_0 = arith.constant 0 : i32
    %c0_i32_1 = arith.constant 0 : i32
    return %c0_i32, %c0_i32_0 : i32, i32
  }
  func.func @transform_6(%arg0: i32) -> (i32, i32) {
    %c0_i32 = arith.constant 0 : i32
    %c0_i32_0 = arith.constant 0 : i32
    %c0_i32_1 = arith.constant 0 : i32
    return %c0_i32, %c0_i32_0 : i32, i32
  }
  func.func @transform_7(%arg0: i32) -> (i32, i32) {
    %c0_i32 = arith.constant 0 : i32
    %c0_i32_0 = arith.constant 0 : i32
    return %arg0, %c0_i32 : i32, i32
  }
}

</mosaic_0001>

<llo_original>
// kernel: _block_forward_impl.1
$region0: #{_block_forward_impl.1}
  #allocation0 [shape = 'u32[]', space=smem, size = 0x4, offset = 0x4, fixed_abs, tag = 'smem constant byte address 0x4 - core index']
  #allocation1 [shape = 'u32[144,128]{1,0:T(1,128)}', space=vmem, size = 0x12000, scoped, tag = 'internal scratch']
  #allocation2 [shape = 'bf16[576,256]{1,0:T(16,128)(2,1)}', space=vmem, size = 0x48000, scoped, tag = 'scratch operand']
  %s0 = inlined_call_operand.hbm [shape: f32[128,256], index: 0, kind: input, shape index: {}]
  %s1 = inlined_call_operand.hbm [shape: bf16[64,576], index: 1, kind: input, shape index: {}]
  %s2 = inlined_call_operand.vmem [shape: f32[64,1], index: 2, kind: input, shape index: {}]
  %s3 = inlined_call_operand.hbm [shape: bf16[256,256], index: 3, kind: input, shape index: {}]
  %s4 = inlined_call_operand.vmem [shape: f32[1,256], index: 4, kind: input, shape index: {}]
  %s5 = inlined_call_operand.hbm [shape: bf16[256,256], index: 5, kind: input, shape index: {}]
  %s6 = inlined_call_operand.vmem [shape: f32[1,256], index: 6, kind: input, shape index: {}]
  %s7 = inlined_call_operand.hbm [shape: f32[128,256], index: 7, kind: output, shape index: {}]
  %s8 = sld [smem:[#allocation0]]
  $region54: #{_block_forward_impl.1} parent=0
    _
  %s10 = ssub.s32 1, %s8
  %s11 = scalar_select 0, %s10, %s8
  $region1: #{_block_forward_impl.1} parent=0
    #allocation3 [shape = 'u8[131072]{0}', space=vmem, size = 0x20000, scoped, tag = 'input window, operand 0, single buffered']
    #allocation4 [shape = 's32[1]{0}', space=sflag, size = 0x4, scoped, tag = 'scoped memory for _block_forward_impl.1']
    #allocation5 [shape = 's32[1]{0}', space=sflag, size = 0x4, scoped, tag = 'scoped memory for _block_forward_impl.1']
    #allocation6 [shape = 'u8[81920]{0}', space=vmem, size = 0x14000, scoped, tag = 'input window, operand 1, single buffered']
    #allocation7 [shape = 's32[1]{0}', space=sflag, size = 0x4, scoped, tag = 'scoped memory for _block_forward_impl.1']
    #allocation8 [shape = 'u8[131072]{0}', space=vmem, size = 0x20000, scoped, tag = 'input window, operand 3, single buffered']
    #allocation9 [shape = 'u8[131072]{0}', space=vmem, size = 0x20000, scoped, tag = 'input window, operand 5, single buffered']
    #allocation10 [shape = 's32[1]{0}', space=sflag, size = 0x4, scoped, tag = 'scoped memory for _block_forward_impl.1']
    #allocation11 [shape = 'u8[131072]{0}', space=vmem, size = 0x20000, scoped, tag = 'output window, operand 0, single buffered']
    %12 = vsyncpa [#allocation4], 0
    %13 = vsyncpa [#allocation7], 0
    %14 = vsyncpa [#allocation10], 0
    %15 = vsyncpa [#allocation5], 0
    // Predicated region
    $region2: #{_block_forward_impl.1} parent=1 // pred_check
      _
    $region3: #{_block_forward_impl.1} parent=1 // pred_check_branch
      %17 = sbr.rel (0) target = $region5
    $region4: #{_block_forward_impl.1} parent=1 // pred_region
      %s19 = ssub.s32 4096, 4096
      %20 = vsyncadd [#allocation4], %s19
      %s21 = sshll.u32 [#allocation3], 4
      %s22 = int_to_ptr.vmem [resolvable:$true] %s21
      %27 = dma.hbm_to_vmem [thread:$0]  %s0, 4096, %s22, [#allocation4], 256, 256, 16
    $region5: #{_block_forward_impl.1} parent=1 // pred_fallthru
      _
    // Predicated region
    $region6: #{_block_forward_impl.1} parent=1 // pred_check
      _
    $region7: #{_block_forward_impl.1} parent=1 // pred_check_branch
      %29 = sbr.rel (0) target = $region9
    $region8: #{_block_forward_impl.1} parent=1 // pred_region
      %s31 = ssub.s32 2560, 2560
      %32 = vsyncadd [#allocation7], %s31
      %s33 = sshll.u32 [#allocation6], 4
      %s34 = int_to_ptr.vmem [resolvable:$true] %s33
      %39 = dma.hbm_to_vmem [thread:$0]  %s1, 2560, %s34, [#allocation7], 320, 320, 20
    $region9: #{_block_forward_impl.1} parent=1 // pred_fallthru
      _
    // Predicated region
    $region10: #{_block_forward_impl.1} parent=1 // pred_check
      _
    $region11: #{_block_forward_impl.1} parent=1 // pred_check_branch
      %41 = sbr.rel (0) target = $region13
    $region12: #{_block_forward_impl.1} parent=1 // pred_region
      _
    $region13: #{_block_forward_impl.1} parent=1 // pred_fallthru
      _
    // Predicated region
    $region14: #{_block_forward_impl.1} parent=1 // pred_check
      _
    $region15: #{_block_forward_impl.1} parent=1 // pred_check_branch
      %43 = sbr.rel (0) target = $region17
    $region16: #{_block_forward_impl.1} parent=1 // pred_region
      %s45 = ssub.s32 4096, 4096
      %46 = vsyncadd [#allocation7], %s45
      %s47 = sshll.u32 [#allocation8], 4
      %s48 = int_to_ptr.vmem [resolvable:$true] %s47
      %53 = dma.hbm_to_vmem [thread:$0]  %s3, 4096, %s48, [#allocation7], 128, 128, 8
    $region17: #{_block_forward_impl.1} parent=1 // pred_fallthru
      _
    // Predicated region
    $region18: #{_block_forward_impl.1} parent=1 // pred_check
      _
    $region19: #{_block_forward_impl.1} parent=1 // pred_check_branch
      %55 = sbr.rel (0) target = $region21
    $region20: #{_block_forward_impl.1} parent=1 // pred_region
      _
    $region21: #{_block_forward_impl.1} parent=1 // pred_fallthru
      _
    // Predicated region
    $region22: #{_block_forward_impl.1} parent=1 // pred_check
      _
    $region23: #{_block_forward_impl.1} parent=1 // pred_check_branch
      %57 = sbr.rel (0) target = $region25
    $region24: #{_block_forward_impl.1} parent=1 // pred_region
      %s59 = ssub.s32 4096, 4096
      %60 = vsyncadd [#allocation10], %s59
      %s61 = sshll.u32 [#allocation9], 4
      %s62 = int_to_ptr.vmem [resolvable:$true] %s61
      %67 = dma.hbm_to_vmem [thread:$0]  %s5, 4096, %s62, [#allocation10], 128, 128, 8
    $region25: #{_block_forward_impl.1} parent=1 // pred_fallthru
      _
    // Predicated region
    $region26: #{_block_forward_impl.1} parent=1 // pred_check
      _
    $region27: #{_block_forward_impl.1} parent=1 // pred_check_branch
      %69 = sbr.rel (0) target = $region29
    $region28: #{_block_forward_impl.1} parent=1 // pred_region
      _
    $region29: #{_block_forward_impl.1} parent=1 // pred_fallthru
      _
    // Predicated region
    $region30: #{_block_forward_impl.1} parent=1 // pred_check
      _
    $region31: #{_block_forward_impl.1} parent=1 // pred_check_branch
      %71 = sbr.rel (0) target = $region33
    $region32: #{_block_forward_impl.1} parent=1 // pred_region
      %72 = dma.done [#allocation4], 4096
    $region33: #{_block_forward_impl.1} parent=1 // pred_fallthru
      _
    // Predicated region
    $region34: #{_block_forward_impl.1} parent=1 // pred_check
      _
    $region35: #{_block_forward_impl.1} parent=1 // pred_check_branch
      %74 = sbr.rel (0) target = $region37
    $region36: #{_block_forward_impl.1} parent=1 // pred_region
      %75 = dma.done [#allocation7], 2560
    $region37: #{_block_forward_impl.1} parent=1 // pred_fallthru
      _
    // Predicated region
    $region38: #{_block_forward_impl.1} parent=1 // pred_check
      _
    $region39: #{_block_forward_impl.1} parent=1 // pred_check_branch
      %77 = sbr.rel (0) target = $region41
    $region40: #{_block_forward_impl.1} parent=1 // pred_region
      %78 = dma.done [#allocation7], 4096
    $region41: #{_block_forward_impl.1} parent=1 // pred_fallthru
      _
    // Predicated region
    $region42: #{_block_forward_impl.1} parent=1 // pred_check
      _
    $region43: #{_block_forward_impl.1} parent=1 // pred_check_branch
      %80 = sbr.rel (0) target = $region45
    $region44: #{_block_forward_impl.1} parent=1 // pred_region
      %81 = dma.done [#allocation10], 4096
    $region45: #{_block_forward_impl.1} parent=1 // pred_fallthru
      _
    %v83 = vld [vmem:[#allocation3] sm:$0xff]
    %v84 = vld [vmem:[#allocation3 + $0x8] sm:$0xff]
    %v85 = vld [vmem:[#allocation3 + $0x10] sm:$0xff]
    %v86 = vld [vmem:[#allocation3 + $0x18] sm:$0xff]
    %v87 = vld [vmem:[#allocation3 + $0x20] sm:$0xff]
    %v88 = vld [vmem:[#allocation3 + $0x28] sm:$0xff]
    %v89 = vld [vmem:[#allocation3 + $0x30] sm:$0xff]
    %v90 = vld [vmem:[#allocation3 + $0x38] sm:$0xff]
    %v91 = vld [vmem:[#allocation3 + $0x40] sm:$0xff]
    %v92 = vld [vmem:[#allocation3 + $0x48] sm:$0xff]
    %v93 = vld [vmem:[#allocation3 + $0x50] sm:$0xff]
    %v94 = vld [vmem:[#allocation3 + $0x58] sm:$0xff]
    %v95 = vld [vmem:[#allocation3 + $0x60] sm:$0xff]
    %v96 = vld [vmem:[#allocation3 + $0x68] sm:$0xff]
    %v97 = vld [vmem:[#allocation3 + $0x70] sm:$0xff]
    %v98 = vld [vmem:[#allocation3 + $0x78] sm:$0xff]
    %v99 = vld [vmem:[#allocation3 + $0x80] sm:$0xff]
    %v100 = vld [vmem:[#allocation3 + $0x88] sm:$0xff]
    %v101 = vld [vmem:[#allocation3 + $0x90] sm:$0xff]
    %v102 = vld [vmem:[#allocation3 + $0x98] sm:$0xff]
    %v103 = vld [vmem:[#allocation3 + $0xa0] sm:$0xff]
    %v104 = vld [vmem:[#allocation3 + $0xa8] sm:$0xff]
    %v105 = vld [vmem:[#allocation3 + $0xb0] sm:$0xff]
    %v106 = vld [vmem:[#allocation3 + $0xb8] sm:$0xff]
    %v107 = vld [vmem:[#allocation3 + $0xc0] sm:$0xff]
    %v108 = vld [vmem:[#allocation3 + $0xc8] sm:$0xff]
    %v109 = vld [vmem:[#allocation3 + $0xd0] sm:$0xff]
    %v110 = vld [vmem:[#allocation3 + $0xd8] sm:$0xff]
    %v111 = vld [vmem:[#allocation3 + $0xe0] sm:$0xff]
    %v112 = vld [vmem:[#allocation3 + $0xe8] sm:$0xff]
    %v113 = vld [vmem:[#allocation3 + $0xf0] sm:$0xff]
    %v114 = vld [vmem:[#allocation3 + $0xf8] sm:$0xff]
    %v115 = vlaneseq
    %v116 = vshrl.u32 %v115, 7
    %v117 = vadd.s32 %v116, 8
    %v118 = vadd.s32 %v116, 16
    %v119 = vadd.s32 %v116, 24
    %v120 = vadd.s32 %v116, 32
    %v121 = vadd.s32 %v116, 40
    %v122 = vadd.s32 %v116, 48
    %v123 = vadd.s32 %v116, 56
    %v124 = vadd.s32 %v116, 64
    %v125 = vadd.s32 %v116, 72
    %v126 = vadd.s32 %v116, 80
    %v127 = vadd.s32 %v116, 88
    %v128 = vadd.s32 %v116, 96
    %v129 = vadd.s32 %v116, 104
    %v130 = vadd.s32 %v116, 112
    %v131 = vadd.s32 %v116, 120
    %vm132 = vcmp.lt.s32.totalorder %v116, 0
    %v133 = vsub.s32 0, %v116
    %v134 = vsel %vm132, %v133, %v116
    %v135 = vshrl.u32 %v134, 2
    %v136 = vand.u32 %v134, 3
    %v137 = vsub.s32 0, %v136
    %v138 = vsel %vm132, %v137, %v136
    %vm139 = vcmp.lt.s32.totalorder %v117, 0
    %v140 = vsub.s32 0, %v117
    %v141 = vsel %vm139, %v140, %v117
    %v142 = vshrl.u32 %v141, 2
    %v143 = vand.u32 %v141, 3
    %v144 = vsub.s32 0, %v143
    %v145 = vsel %vm139, %v144, %v143
    %vm146 = vcmp.lt.s32.totalorder %v118, 0
    %v147 = vsub.s32 0, %v118
    %v148 = vsel %vm146, %v147, %v118
    %v149 = vshrl.u32 %v148, 2
    %v150 = vand.u32 %v148, 3
    %v151 = vsub.s32 0, %v150
    %v152 = vsel %vm146, %v151, %v150
    %vm153 = vcmp.lt.s32.totalorder %v119, 0
    %v154 = vsub.s32 0, %v119
    %v155 = vsel %vm153, %v154, %v119
    %v156 = vshrl.u32 %v155, 2
    %v157 = vand.u32 %v155, 3
    %v158 = vsub.s32 0, %v157
    %v159 = vsel %vm153, %v158, %v157
    %vm160 = vcmp.lt.s32.totalorder %v120, 0
    %v161 = vsub.s32 0, %v120
    %v162 = vsel %vm160, %v161, %v120
    %v163 = vshrl.u32 %v162, 2
    %v164 = vand.u32 %v162, 3
    %v165 = vsub.s32 0, %v164
    %v166 = vsel %vm160, %v165, %v164
    %vm167 = vcmp.lt.s32.totalorder %v121, 0
    %v168 = vsub.s32 0, %v121
    %v169 = vsel %vm167, %v168, %v121
    %v170 = vshrl.u32 %v169, 2
    %v171 = vand.u32 %v169, 3
    %v172 = vsub.s32 0, %v171
    %v173 = vsel %vm167, %v172, %v171
    %vm174 = vcmp.lt.s32.totalorder %v122, 0
    %v175 = vsub.s32 0, %v122
    %v176 = vsel %vm174, %v175, %v122
    %v177 = vshrl.u32 %v176, 2
    %v178 = vand.u32 %v176, 3
    %v179 = vsub.s32 0, %v178
    %v180 = vsel %vm174, %v179, %v178
    %vm181 = vcmp.lt.s32.totalorder %v123, 0
    %v182 = vsub.s32 0, %v123
    %v183 = vsel %vm181, %v182, %v123
    %v184 = vshrl.u32 %v183, 2
    %v185 = vand.u32 %v183, 3
    %v186 = vsub.s32 0, %v185
    %v187 = vsel %vm181, %v186, %v185
    %vm188 = vcmp.lt.s32.totalorder %v124, 0
    %v189 = vsub.s32 0, %v124
    %v190 = vsel %vm188, %v189, %v124
    %v191 = vshrl.u32 %v190, 2
    %v192 = vand.u32 %v190, 3
    %v193 = vsub.s32 0, %v192
    %v194 = vsel %vm188, %v193, %v192
    %vm195 = vcmp.lt.s32.totalorder %v125, 0
    %v196 = vsub.s32 0, %v125
    %v197 = vsel %vm195, %v196, %v125
    %v198 = vshrl.u32 %v197, 2
    %v199 = vand.u32 %v197, 3
    %v200 = vsub.s32 0, %v199
    %v201 = vsel %vm195, %v200, %v199
    %vm202 = vcmp.lt.s32.totalorder %v126, 0
    %v203 = vsub.s32 0, %v126
    %v204 = vsel %vm202, %v203, %v126
    %v205 = vshrl.u32 %v204, 2
    %v206 = vand.u32 %v204, 3
    %v207 = vsub.s32 0, %v206
    %v208 = vsel %vm202, %v207, %v206
    %vm209 = vcmp.lt.s32.totalorder %v127, 0
    %v210 = vsub.s32 0, %v127
    %v211 = vsel %vm209, %v210, %v127
    %v212 = vshrl.u32 %v211, 2
    %v213 = vand.u32 %v211, 3
    %v214 = vsub.s32 0, %v213
    %v215 = vsel %vm209, %v214, %v213
    %vm216 = vcmp.lt.s32.totalorder %v128, 0
    %v217 = vsub.s32 0, %v128
    %v218 = vsel %vm216, %v217, %v128
    %v219 = vshrl.u32 %v218, 2
    %v220 = vand.u32 %v218, 3
    %v221 = vsub.s32 0, %v220
    %v222 = vsel %vm216, %v221, %v220
    %vm223 = vcmp.lt.s32.totalorder %v129, 0
    %v224 = vsub.s32 0, %v129
    %v225 = vsel %vm223, %v224, %v129
    %v226 = vshrl.u32 %v225, 2
    %v227 = vand.u32 %v225, 3
    %v228 = vsub.s32 0, %v227
    %v229 = vsel %vm223, %v228, %v227
    %vm230 = vcmp.lt.s32.totalorder %v130, 0
    %v231 = vsub.s32 0, %v130
    %v232 = vsel %vm230, %v231, %v130
    %v233 = vshrl.u32 %v232, 2
    %v234 = vand.u32 %v232, 3
    %v235 = vsub.s32 0, %v234
    %v236 = vsel %vm230, %v235, %v234
    %vm237 = vcmp.lt.s32.totalorder %v131, 0
    %v238 = vsub.s32 0, %v131
    %v239 = vsel %vm237, %v238, %v131
    %v240 = vshrl.u32 %v239, 2
    %v241 = vand.u32 %v239, 3
    %v242 = vsub.s32 0, %v241
    %v243 = vsel %vm237, %v242, %v241
    %vm244 = vcmp.ne.s32.totalorder %v138, 0
    %vm245 = vcmp.ne.s32.totalorder %v145, 0
    %vm246 = vcmp.ne.s32.totalorder %v152, 0
    %vm247 = vcmp.ne.s32.totalorder %v159, 0
    %vm248 = vcmp.ne.s32.totalorder %v166, 0
    %vm249 = vcmp.ne.s32.totalorder %v173, 0
    %vm250 = vcmp.ne.s32.totalorder %v180, 0
    %vm251 = vcmp.ne.s32.totalorder %v187, 0
    %vm252 = vcmp.ne.s32.totalorder %v194, 0
    %vm253 = vcmp.ne.s32.totalorder %v201, 0
    %vm254 = vcmp.ne.s32.totalorder %v208, 0
    %vm255 = vcmp.ne.s32.totalorder %v215, 0
    %vm256 = vcmp.ne.s32.totalorder %v222, 0
    %vm257 = vcmp.ne.s32.totalorder %v229, 0
    %vm258 = vcmp.ne.s32.totalorder %v236, 0
    %vm259 = vcmp.ne.s32.totalorder %v243, 0
    %vm260 = vcmp.lt.s32.totalorder %v138, 0
    %vm261 = vcmp.lt.s32.totalorder %v145, 0
    %vm262 = vcmp.lt.s32.totalorder %v152, 0
    %vm263 = vcmp.lt.s32.totalorder %v159, 0
    %vm264 = vcmp.lt.s32.totalorder %v166, 0
    %vm265 = vcmp.lt.s32.totalorder %v173, 0
    %vm266 = vcmp.lt.s32.totalorder %v180, 0
    %vm267 = vcmp.lt.s32.totalorder %v187, 0
    %vm268 = vcmp.lt.s32.totalorder %v194, 0
    %vm269 = vcmp.lt.s32.totalorder %v201, 0
    %vm270 = vcmp.lt.s32.totalorder %v208, 0
    %vm271 = vcmp.lt.s32.totalorder %v215, 0
    %vm272 = vcmp.lt.s32.totalorder %v222, 0
    %vm273 = vcmp.lt.s32.totalorder %v229, 0
    %vm274 = vcmp.lt.s32.totalorder %v236, 0
    %vm275 = vcmp.lt.s32.totalorder %v243, 0
    %vm276 = vmand %vm260, %vm244
    %vm277 = vmand %vm261, %vm245
    %vm278 = vmand %vm262, %vm246
    %vm279 = vmand %vm263, %vm247
    %vm280 = vmand %vm264, %vm248
    %vm281 = vmand %vm265, %vm249
    %vm282 = vmand %vm266, %vm250
    %vm283 = vmand %vm267, %vm251
    %vm284 = vmand %vm268, %vm252
    %vm285 = vmand %vm269, %vm253
    %vm286 = vmand %vm270, %vm254
    %vm287 = vmand %vm271, %vm255
    %vm288 = vmand %vm272, %vm256
    %vm289 = vmand %vm273, %vm257
    %vm290 = vmand %vm274, %vm258
    %vm291 = vmand %vm275, %vm259
    %v292 = vadd.s32 %v138, 4
    %v293 = vadd.s32 %v145, 4
    %v294 = vadd.s32 %v152, 4
    %v295 = vadd.s32 %v159, 4
    %v296 = vadd.s32 %v166, 4
    %v297 = vadd.s32 %v173, 4
    %v298 = vadd.s32 %v180, 4
    %v299 = vadd.s32 %v187, 4
    %v300 = vadd.s32 %v194, 4
    %v301 = vadd.s32 %v201, 4
    %v302 = vadd.s32 %v208, 4
    %v303 = vadd.s32 %v215, 4
    %v304 = vadd.s32 %v222, 4
    %v305 = vadd.s32 %v229, 4
    %v306 = vadd.s32 %v236, 4
    %v307 = vadd.s32 %v243, 4
    %v308 = vsel %vm276, %v292, %v138
    %v309 = vsel %vm277, %v293, %v145
    %v310 = vsel %vm278, %v294, %v152
    %v311 = vsel %vm279, %v295, %v159
    %v312 = vsel %vm280, %v296, %v166
    %v313 = vsel %vm281, %v297, %v173
    %v314 = vsel %vm282, %v298, %v180
    %v315 = vsel %vm283, %v299, %v187
    %v316 = vsel %vm284, %v300, %v194
    %v317 = vsel %vm285, %v301, %v201
    %v318 = vsel %vm286, %v302, %v208
    %v319 = vsel %vm287, %v303, %v215
    %v320 = vsel %vm288, %v304, %v222
    %v321 = vsel %vm289, %v305, %v229
    %v322 = vsel %vm290, %v306, %v236
    %v323 = vsel %vm291, %v307, %v243
    %v324 = vlaneseq
    %v325 = vand.u32 %v324, 127
    %v326 = vadd.s32 %v325, 128
    %vm327 = vcmp.ne.s32.totalorder %v308, 3
    %vm328 = vcmp.ne.s32.totalorder %v309, 3
    %vm329 = vcmp.ne.s32.totalorder %v310, 3
    %vm330 = vcmp.ne.s32.totalorder %v311, 3
    %vm331 = vcmp.ne.s32.totalorder %v312, 3
    %vm332 = vcmp.ne.s32.totalorder %v313, 3
    %vm333 = vcmp.ne.s32.totalorder %v314, 3
    %vm334 = vcmp.ne.s32.totalorder %v315, 3
    %vm335 = vcmp.ne.s32.totalorder %v316, 3
    %vm336 = vcmp.ne.s32.totalorder %v317, 3
    %vm337 = vcmp.ne.s32.totalorder %v318, 3
    %vm338 = vcmp.ne.s32.totalorder %v319, 3
    %vm339 = vcmp.ne.s32.totalorder %v320, 3
    %vm340 = vcmp.ne.s32.totalorder %v321, 3
    %vm341 = vcmp.ne.s32.totalorder %v322, 3
    %vm342 = vcmp.ne.s32.totalorder %v323, 3
    %v343 = vrot.slane %v83, 1
    %v344 = vrot.slane %v84, 1
    %v345 = vrot.slane %v85, 1
    %v346 = vrot.slane %v86, 1
    %v347 = vrot.slane %v87, 1
    %v348 = vrot.slane %v88, 1
    %v349 = vrot.slane %v89, 1
    %v350 = vrot.slane %v90, 1
    %v351 = vrot.slane %v91, 1
    %v352 = vrot.slane %v92, 1
    %v353 = vrot.slane %v93, 1
    %v354 = vrot.slane %v94, 1
    %v355 = vrot.slane %v95, 1
    %v356 = vrot.slane %v96, 1
    %v357 = vrot.slane %v97, 1
    %v358 = vrot.slane %v98, 1
    %v359 = vrot.slane %v99, 1
    %v360 = vrot.slane %v100, 1
    %v361 = vrot.slane %v101, 1
    %v362 = vrot.slane %v102, 1
    %v363 = vrot.slane %v103, 1
    %v364 = vrot.slane %v104, 1
    %v365 = vrot.slane %v105, 1
    %v366 = vrot.slane %v106, 1
    %v367 = vrot.slane %v107, 1
    %v368 = vrot.slane %v108, 1
    %v369 = vrot.slane %v109, 1
    %v370 = vrot.slane %v110, 1
    %v371 = vrot.slane %v111, 1
    %v372 = vrot.slane %v112, 1
    %v373 = vrot.slane %v113, 1
    %v374 = vrot.slane %v114, 1
    %vm375 = vcmp.lt.s32.totalorder %v116, 7
    %v376 = vsel %vm375, %v371, %v373
    %v377 = vsel %vm375, %v372, %v374
    %v378 = vsel %vm375, %v369, %v371
    %v379 = vsel %vm375, %v370, %v372
    %v380 = vsel %vm375, %v367, %v369
    %v381 = vsel %vm375, %v368, %v370
    %v382 = vsel %vm375, %v365, %v367
    %v383 = vsel %vm375, %v366, %v368
    %v384 = vsel %vm375, %v363, %v365
    %v385 = vsel %vm375, %v364, %v366
    %v386 = vsel %vm375, %v361, %v363
    %v387 = vsel %vm375, %v362, %v364
    %v388 = vsel %vm375, %v359, %v361
    %v389 = vsel %vm375, %v360, %v362
    %v390 = vsel %vm375, %v357, %v359
    %v391 = vsel %vm375, %v358, %v360
    %v392 = vsel %vm375, %v355, %v357
    %v393 = vsel %vm375, %v356, %v358
    %v394 = vsel %vm375, %v353, %v355
    %v395 = vsel %vm375, %v354, %v356
    %v396 = vsel %vm375, %v351, %v353
    %v397 = vsel %vm375, %v352, %v354
    %v398 = vsel %vm375, %v349, %v351
    %v399 = vsel %vm375, %v350, %v352
    %v400 = vsel %vm375, %v347, %v349
    %v401 = vsel %vm375, %v348, %v350
    %v402 = vsel %vm375, %v345, %v347
    %v403 = vsel %vm375, %v346, %v348
    %v404 = vsel %vm375, %v343, %v345
    %v405 = vsel %vm375, %v344, %v346
    %v406 = vsel %vm375, %v373, %v343
    %v407 = vsel %vm375, %v374, %v344
    %v408 = vsel %vm327, 1, 0
    %v409 = vsel %vm328, 1, 0
    %v410 = vsel %vm329, 1, 0
    %v411 = vsel %vm330, 1, 0
    %v412 = vsel %vm331, 1, 0
    %v413 = vsel %vm332, 1, 0
    %v414 = vsel %vm333, 1, 0
    %v415 = vsel %vm334, 1, 0
    %v416 = vsel %vm335, 1, 0
    %v417 = vsel %vm336, 1, 0
    %v418 = vsel %vm337, 1, 0
    %v419 = vsel %vm338, 1, 0
    %v420 = vsel %vm339, 1, 0
    %v421 = vsel %vm340, 1, 0
    %v422 = vsel %vm341, 1, 0
    %v423 = vsel %vm342, 1, 0
    %vm424 = vcmp.eq.s32.totalorder %v408, 1
    %vm425 = vcmp.eq.s32.totalorder %v409, 1
    %vm426 = vcmp.eq.s32.totalorder %v410, 1
    %vm427 = vcmp.eq.s32.totalorder %v411, 1
    %vm428 = vcmp.eq.s32.totalorder %v412, 1
    %vm429 = vcmp.eq.s32.totalorder %v413, 1
    %vm430 = vcmp.eq.s32.totalorder %v414, 1
    %vm431 = vcmp.eq.s32.totalorder %v415, 1
    %vm432 = vcmp.eq.s32.totalorder %v416, 1
    %vm433 = vcmp.eq.s32.totalorder %v417, 1
    %vm434 = vcmp.eq.s32.totalorder %v418, 1
    %vm435 = vcmp.eq.s32.totalorder %v419, 1
    %vm436 = vcmp.eq.s32.totalorder %v420, 1
    %vm437 = vcmp.eq.s32.totalorder %v421, 1
    %vm438 = vcmp.eq.s32.totalorder %v422, 1
    %vm439 = vcmp.eq.s32.totalorder %v423, 1
    %v440 = vsel %vm424, %v404, 0.0
    %v441 = vsel %vm424, %v405, 0.0
    %v442 = vsel %vm425, %v402, 0.0
    %v443 = vsel %vm425, %v403, 0.0
    %v444 = vsel %vm426, %v400, 0.0
    %v445 = vsel %vm426, %v401, 0.0
    %v446 = vsel %vm427, %v398, 0.0
    %v447 = vsel %vm427, %v399, 0.0
    %v448 = vsel %vm428, %v396, 0.0
    %v449 = vsel %vm428, %v397, 0.0
    %v450 = vsel %vm429, %v394, 0.0
    %v451 = vsel %vm429, %v395, 0.0
    %v452 = vsel %vm430, %v392, 0.0
    %v453 = vsel %vm430, %v393, 0.0
    %v454 = vsel %vm431, %v390, 0.0
    %v455 = vsel %vm431, %v391, 0.0
    %v456 = vsel %vm432, %v388, 0.0
    %v457 = vsel %vm432, %v389, 0.0
    %v458 = vsel %vm433, %v386, 0.0
    %v459 = vsel %vm433, %v387, 0.0
    %v460 = vsel %vm434, %v384, 0.0
    %v461 = vsel %vm434, %v385, 0.0
    %v462 = vsel %vm435, %v382, 0.0
    %v463 = vsel %vm435, %v383, 0.0
    %v464 = vsel %vm436, %v380, 0.0
    %v465 = vsel %vm436, %v381, 0.0
    %v466 = vsel %vm437, %v378, 0.0
    %v467 = vsel %vm437, %v379, 0.0
    %v468 = vsel %vm438, %v376, 0.0
    %v469 = vsel %vm438, %v377, 0.0
    %v470 = vsel %vm439, %v406, 0.0
    %v471 = vsel %vm439, %v407, 0.0
    %vm472 = vcmp.ne.s32.totalorder %v308, 0
    %vm473 = vcmp.ne.s32.totalorder %v309, 0
    %vm474 = vcmp.ne.s32.totalorder %v310, 0
    %vm475 = vcmp.ne.s32.totalorder %v311, 0
    %vm476 = vcmp.ne.s32.totalorder %v312, 0
    %vm477 = vcmp.ne.s32.totalorder %v313, 0
    %vm478 = vcmp.ne.s32.totalorder %v314, 0
    %vm479 = vcmp.ne.s32.totalorder %v315, 0
    %vm480 = vcmp.ne.s32.totalorder %v316, 0
    %vm481 = vcmp.ne.s32.totalorder %v317, 0
    %vm482 = vcmp.ne.s32.totalorder %v318, 0
    %vm483 = vcmp.ne.s32.totalorder %v319, 0
    %vm484 = vcmp.ne.s32.totalorder %v320, 0
    %vm485 = vcmp.ne.s32.totalorder %v321, 0
    %vm486 = vcmp.ne.s32.totalorder %v322, 0
    %vm487 = vcmp.ne.s32.totalorder %v323, 0
    %v488 = vrot.slane %v83, 7
    %v489 = vrot.slane %v84, 7
    %v490 = vrot.slane %v85, 7
    %v491 = vrot.slane %v86, 7
    %v492 = vrot.slane %v87, 7
    %v493 = vrot.slane %v88, 7
    %v494 = vrot.slane %v89, 7
    %v495 = vrot.slane %v90, 7
    %v496 = vrot.slane %v91, 7
    %v497 = vrot.slane %v92, 7
    %v498 = vrot.slane %v93, 7
    %v499 = vrot.slane %v94, 7
    %v500 = vrot.slane %v95, 7
    %v501 = vrot.slane %v96, 7
    %v502 = vrot.slane %v97, 7
    %v503 = vrot.slane %v98, 7
    %v504 = vrot.slane %v99, 7
    %v505 = vrot.slane %v100, 7
    %v506 = vrot.slane %v101, 7
    %v507 = vrot.slane %v102, 7
    %v508 = vrot.slane %v103, 7
    %v509 = vrot.slane %v104, 7
    %v510 = vrot.slane %v105, 7
    %v511 = vrot.slane %v106, 7
    %v512 = vrot.slane %v107, 7
    %v513 = vrot.slane %v108, 7
    %v514 = vrot.slane %v109, 7
    %v515 = vrot.slane %v110, 7
    %v516 = vrot.slane %v111, 7
    %v517 = vrot.slane %v112, 7
    %v518 = vrot.slane %v113, 7
    %v519 = vrot.slane %v114, 7
    %vm520 = vcmp.lt.s32.totalorder %v116, 1
    %v521 = vsel %vm520, %v516, %v518
    %v522 = vsel %vm520, %v517, %v519
    %v523 = vsel %vm520, %v514, %v516
    %v524 = vsel %vm520, %v515, %v517
    %v525 = vsel %vm520, %v512, %v514
    %v526 = vsel %vm520, %v513, %v515
    %v527 = vsel %vm520, %v510, %v512
    %v528 = vsel %vm520, %v511, %v513
    %v529 = vsel %vm520, %v508, %v510
    %v530 = vsel %vm520, %v509, %v511
    %v531 = vsel %vm520, %v506, %v508
    %v532 = vsel %vm520, %v507, %v509
    %v533 = vsel %vm520, %v504, %v506
    %v534 = vsel %vm520, %v505, %v507
    %v535 = vsel %vm520, %v502, %v504
    %v536 = vsel %vm520, %v503, %v505
    %v537 = vsel %vm520, %v500, %v502
    %v538 = vsel %vm520, %v501, %v503
    %v539 = vsel %vm520, %v498, %v500
    %v540 = vsel %vm520, %v499, %v501
    %v541 = vsel %vm520, %v496, %v498
    %v542 = vsel %vm520, %v497, %v499
    %v543 = vsel %vm520, %v494, %v496
    %v544 = vsel %vm520, %v495, %v497
    %v545 = vsel %vm520, %v492, %v494
    %v546 = vsel %vm520, %v493, %v495
    %v547 = vsel %vm520, %v490, %v492
    %v548 = vsel %vm520, %v491, %v493
    %v549 = vsel %vm520, %v488, %v490
    %v550 = vsel %vm520, %v489, %v491
    %v551 = vsel %vm520, %v518, %v488
    %v552 = vsel %vm520, %v519, %v489
    %v553 = vsel %vm472, 1, 0
    %v554 = vsel %vm473, 1, 0
    %v555 = vsel %vm474, 1, 0
    %v556 = vsel %vm475, 1, 0
    %v557 = vsel %vm476, 1, 0
    %v558 = vsel %vm477, 1, 0
    %v559 = vsel %vm478, 1, 0
    %v560 = vsel %vm479, 1, 0
    %v561 = vsel %vm480, 1, 0
    %v562 = vsel %vm481, 1, 0
    %v563 = vsel %vm482, 1, 0
    %v564 = vsel %vm483, 1, 0
    %v565 = vsel %vm484, 1, 0
    %v566 = vsel %vm485, 1, 0
    %v567 = vsel %vm486, 1, 0
    %v568 = vsel %vm487, 1, 0
    %vm569 = vcmp.eq.s32.totalorder %v553, 1
    %vm570 = vcmp.eq.s32.totalorder %v554, 1
    %vm571 = vcmp.eq.s32.totalorder %v555, 1
    %vm572 = vcmp.eq.s32.totalorder %v556, 1
    %vm573 = vcmp.eq.s32.totalorder %v557, 1
    %vm574 = vcmp.eq.s32.totalorder %v558, 1
    %vm575 = vcmp.eq.s32.totalorder %v559, 1
    %vm576 = vcmp.eq.s32.totalorder %v560, 1
    %vm577 = vcmp.eq.s32.totalorder %v561, 1
    %vm578 = vcmp.eq.s32.totalorder %v562, 1
    %vm579 = vcmp.eq.s32.totalorder %v563, 1
    %vm580 = vcmp.eq.s32.totalorder %v564, 1
    %vm581 = vcmp.eq.s32.totalorder %v565, 1
    %vm582 = vcmp.eq.s32.totalorder %v566, 1
    %vm583 = vcmp.eq.s32.totalorder %v567, 1
    %vm584 = vcmp.eq.s32.totalorder %v568, 1
    %v585 = vsel %vm569, %v551, 0.0
    %v586 = vsel %vm569, %v552, 0.0
    %v587 = vsel %vm570, %v549, 0.0
    %v588 = vsel %vm570, %v550, 0.0
    %v589 = vsel %vm571, %v547, 0.0
    %v590 = vsel %vm571, %v548, 0.0
    %v591 = vsel %vm572, %v545, 0.0
    %v592 = vsel %vm572, %v546, 0.0
    %v593 = vsel %vm573, %v543, 0.0
    %v594 = vsel %vm573, %v544, 0.0
    %v595 = vsel %vm574, %v541, 0.0
    %v596 = vsel %vm574, %v542, 0.0
    %v597 = vsel %vm575, %v539, 0.0
    %v598 = vsel %vm575, %v540, 0.0
    %v599 = vsel %vm576, %v537, 0.0
    %v600 = vsel %vm576, %v538, 0.0
    %v601 = vsel %vm577, %v535, 0.0
    %v602 = vsel %vm577, %v536, 0.0
    %v603 = vsel %vm578, %v533, 0.0
    %v604 = vsel %vm578, %v534, 0.0
    %v605 = vsel %vm579, %v531, 0.0
    %v606 = vsel %vm579, %v532, 0.0
    %v607 = vsel %vm580, %v529, 0.0
    %v608 = vsel %vm580, %v530, 0.0
    %v609 = vsel %vm581, %v527, 0.0
    %v610 = vsel %vm581, %v528, 0.0
    %v611 = vsel %vm582, %v525, 0.0
    %v612 = vsel %vm582, %v526, 0.0
    %v613 = vsel %vm583, %v523, 0.0
    %v614 = vsel %vm583, %v524, 0.0
    %v615 = vsel %vm584, %v521, 0.0
    %v616 = vsel %vm584, %v522, 0.0
    %vm617 = vcmp.ne.s32.totalorder %v325, 255
    %vm618 = vcmp.ne.s32.totalorder %v326, 255
    %vm619 = vcmp.ne.s32.totalorder %v325, 0
    %vm620 = vcmp.ne.s32.totalorder %v326, 0
    %621 = vrot.lane.b32.xlu0 %v585, 1
    %v622 = vpop.permute.xlu0 %621
    %623 = vrot.lane.b32.xlu0 %v587, 1
    %v624 = vpop.permute.xlu0 %623
    %625 = vrot.lane.b32.xlu0 %v589, 1
    %v626 = vpop.permute.xlu0 %625
    %627 = vrot.lane.b32.xlu0 %v591, 1
    %v628 = vpop.permute.xlu0 %627
    %629 = vrot.lane.b32.xlu0 %v593, 1
    %v630 = vpop.permute.xlu0 %629
    %631 = vrot.lane.b32.xlu0 %v595, 1
    %v632 = vpop.permute.xlu0 %631
    %633 = vrot.lane.b32.xlu0 %v597, 1
    %v634 = vpop.permute.xlu0 %633
    %635 = vrot.lane.b32.xlu0 %v599, 1
    %v636 = vpop.permute.xlu0 %635
    %637 = vrot.lane.b32.xlu0 %v586, 1
    %v638 = vpop.permute.xlu0 %637
    %639 = vrot.lane.b32.xlu0 %v588, 1
    %v640 = vpop.permute.xlu0 %639
    %641 = vrot.lane.b32.xlu0 %v590, 1
    %v642 = vpop.permute.xlu0 %641
    %643 = vrot.lane.b32.xlu0 %v592, 1
    %v644 = vpop.permute.xlu0 %643
    %645 = vrot.lane.b32.xlu0 %v594, 1
    %v646 = vpop.permute.xlu0 %645
    %647 = vrot.lane.b32.xlu0 %v596, 1
    %v648 = vpop.permute.xlu0 %647
    %649 = vrot.lane.b32.xlu0 %v598, 1
    %v650 = vpop.permute.xlu0 %649
    %651 = vrot.lane.b32.xlu0 %v600, 1
    %v652 = vpop.permute.xlu0 %651
    %vm653 = vcmp.lt.s32.totalorder %v325, 1
    %v654 = vsel %vm653, %v622, %v638
    %v655 = vsel %vm653, %v624, %v640
    %v656 = vsel %vm653, %v626, %v642
    %v657 = vsel %vm653, %v628, %v644
    %v658 = vsel %vm653, %v630, %v646
    %v659 = vsel %vm653, %v632, %v648
    %v660 = vsel %vm653, %v634, %v650
    %v661 = vsel %vm653, %v636, %v652
    %v662 = vsel %vm653, %v638, %v622
    %v663 = vsel %vm653, %v640, %v624
    %v664 = vsel %vm653, %v642, %v626
    %v665 = vsel %vm653, %v644, %v628
    %v666 = vsel %vm653, %v646, %v630
    %v667 = vsel %vm653, %v648, %v632
    %v668 = vsel %vm653, %v650, %v634
    %v669 = vsel %vm653, %v652, %v636
    %v670 = vsel %vm619, 1, 0
    %v671 = vsel %vm620, 1, 0
    %vm672 = vcmp.eq.s32.totalorder %v670, 1
    %vm673 = vcmp.eq.s32.totalorder %v671, 1
    %v674 = vsel %vm672, %v662, 0.0
    %v675 = vsel %vm673, %v654, 0.0
    %v676 = vsel %vm672, %v663, 0.0
    %v677 = vsel %vm673, %v655, 0.0
    %v678 = vsel %vm672, %v664, 0.0
    %v679 = vsel %vm673, %v656, 0.0
    %v680 = vsel %vm672, %v665, 0.0
    %v681 = vsel %vm673, %v657, 0.0
    %v682 = vsel %vm672, %v666, 0.0
    %v683 = vsel %vm673, %v658, 0.0
    %v684 = vsel %vm672, %v667, 0.0
    %v685 = vsel %vm673, %v659, 0.0
    %v686 = vsel %vm672, %v668, 0.0
    %v687 = vsel %vm673, %v660, 0.0
    %v688 = vsel %vm672, %v669, 0.0
    %v689 = vsel %vm673, %v661, 0.0
    %v690 = vpack.c.bf16 %v676, %v674
    %v691 = vpack.c.bf16 %v677, %v675
    %v692 = vpack.c.bf16 %v680, %v678
    %v693 = vpack.c.bf16 %v681, %v679
    %v694 = vpack.c.bf16 %v684, %v682
    %v695 = vpack.c.bf16 %v685, %v683
    %v696 = vpack.c.bf16 %v688, %v686
    %v697 = vpack.c.bf16 %v689, %v687
    %698 = vst [vmem:[#allocation2] sm:$0xff] %v690
    %699 = vst [vmem:[#allocation2 + $0x8] sm:$0xff] %v691
    %700 = vst [vmem:[#allocation2 + $0x10] sm:$0xff] %v692
    %701 = vst [vmem:[#allocation2 + $0x18] sm:$0xff] %v693
    %702 = vst [vmem:[#allocation2 + $0x20] sm:$0xff] %v694
    %703 = vst [vmem:[#allocation2 + $0x28] sm:$0xff] %v695
    %704 = vst [vmem:[#allocation2 + $0x30] sm:$0xff] %v696
    %705 = vst [vmem:[#allocation2 + $0x38] sm:$0xff] %v697
    %v706 = vpack.c.bf16 %v587, %v585
    %v707 = vpack.c.bf16 %v588, %v586
    %v708 = vpack.c.bf16 %v591, %v589
    %v709 = vpack.c.bf16 %v592, %v590
    %v710 = vpack.c.bf16 %v595, %v593
    %v711 = vpack.c.bf16 %v596, %v594
    %v712 = vpack.c.bf16 %v599, %v597
    %v713 = vpack.c.bf16 %v600, %v598
    %714 = vst [vmem:[#allocation2 + $0x40] sm:$0xff] %v706
    %715 = vst [vmem:[#allocation2 + $0x48] sm:$0xff] %v707
    %716 = vst [vmem:[#allocation2 + $0x50] sm:$0xff] %v708
    %717 = vst [vmem:[#allocation2 + $0x58] sm:$0xff] %v709
    %718 = vst [vmem:[#allocation2 + $0x60] sm:$0xff] %v710
    %719 = vst [vmem:[#allocation2 + $0x68] sm:$0xff] %v711
    %720 = vst [vmem:[#allocation2 + $0x70] sm:$0xff] %v712
    %721 = vst [vmem:[#allocation2 + $0x78] sm:$0xff] %v713
    %722 = vrot.lane.b32.xlu0 %v585, 127
    %v723 = vpop.permute.xlu0 %722
    %724 = vrot.lane.b32.xlu0 %v587, 127
    %v725 = vpop.permute.xlu0 %724
    %726 = vrot.lane.b32.xlu0 %v589, 127
    %v727 = vpop.permute.xlu0 %726
    %728 = vrot.lane.b32.xlu0 %v591, 127
    %v729 = vpop.permute.xlu0 %728
    %730 = vrot.lane.b32.xlu0 %v593, 127
    %v731 = vpop.permute.xlu0 %730
    %732 = vrot.lane.b32.xlu0 %v595, 127
    %v733 = vpop.permute.xlu0 %732
    %734 = vrot.lane.b32.xlu0 %v597, 127
    %v735 = vpop.permute.xlu0 %734
    %736 = vrot.lane.b32.xlu0 %v599, 127
    %v737 = vpop.permute.xlu0 %736
    %738 = vrot.lane.b32.xlu0 %v586, 127
    %v739 = vpop.permute.xlu0 %738
    %740 = vrot.lane.b32.xlu0 %v588, 127
    %v741 = vpop.permute.xlu0 %740
    %742 = vrot.lane.b32.xlu0 %v590, 127
    %v743 = vpop.permute.xlu0 %742
    %744 = vrot.lane.b32.xlu0 %v592, 127
    %v745 = vpop.permute.xlu0 %744
    %746 = vrot.lane.b32.xlu0 %v594, 127
    %v747 = vpop.permute.xlu0 %746
    %748 = vrot.lane.b32.xlu0 %v596, 127
    %v749 = vpop.permute.xlu0 %748
    %750 = vrot.lane.b32.xlu0 %v598, 127
    %v751 = vpop.permute.xlu0 %750
    %752 = vrot.lane.b32.xlu0 %v600, 127
    %v753 = vpop.permute.xlu0 %752
    %vm754 = vcmp.lt.s32.totalorder %v325, 127
    %v755 = vsel %vm754, %v723, %v739
    %v756 = vsel %vm754, %v725, %v741
    %v757 = vsel %vm754, %v727, %v743
    %v758 = vsel %vm754, %v729, %v745
    %v759 = vsel %vm754, %v731, %v747
    %v760 = vsel %vm754, %v733, %v749
    %v761 = vsel %vm754, %v735, %v751
    %v762 = vsel %vm754, %v737, %v753
    %v763 = vsel %vm754, %v739, %v723
    %v764 = vsel %vm754, %v741, %v725
    %v765 = vsel %vm754, %v743, %v727
    %v766 = vsel %vm754, %v745, %v729
    %v767 = vsel %vm754, %v747, %v731
    %v768 = vsel %vm754, %v749, %v733
    %v769 = vsel %vm754, %v751, %v735
    %v770 = vsel %vm754, %v753, %v737
    %v771 = vsel %vm617, 1, 0
    %v772 = vsel %vm618, 1, 0
    %vm773 = vcmp.eq.s32.totalorder %v771, 1
    %vm774 = vcmp.eq.s32.totalorder %v772, 1
    %v775 = vsel %vm773, %v755, 0.0
    %v776 = vsel %vm774, %v763, 0.0
    %v777 = vsel %vm773, %v756, 0.0
    %v778 = vsel %vm774, %v764, 0.0
    %v779 = vsel %vm773, %v757, 0.0
    %v780 = vsel %vm774, %v765, 0.0
    %v781 = vsel %vm773, %v758, 0.0
    %v782 = vsel %vm774, %v766, 0.0
    %v783 = vsel %vm773, %v759, 0.0
    %v784 = vsel %vm774, %v767, 0.0
    %v785 = vsel %vm773, %v760, 0.0
    %v786 = vsel %vm774, %v768, 0.0
    %v787 = vsel %vm773, %v761, 0.0
    %v788 = vsel %vm774, %v769, 0.0
    %v789 = vsel %vm773, %v762, 0.0
    %v790 = vsel %vm774, %v770, 0.0
    %v791 = vpack.c.bf16 %v777, %v775
    %v792 = vpack.c.bf16 %v778, %v776
    %v793 = vpack.c.bf16 %v781, %v779
    %v794 = vpack.c.bf16 %v782, %v780
    %v795 = vpack.c.bf16 %v785, %v783
    %v796 = vpack.c.bf16 %v786, %v784
    %v797 = vpack.c.bf16 %v789, %v787
    %v798 = vpack.c.bf16 %v790, %v788
    %799 = vst [vmem:[#allocation2 + $0x80] sm:$0xff] %v791
    %800 = vst [vmem:[#allocation2 + $0x88] sm:$0xff] %v792
    %801 = vst [vmem:[#allocation2 + $0x90] sm:$0xff] %v793
    %802 = vst [vmem:[#allocation2 + $0x98] sm:$0xff] %v794
    %803 = vst [vmem:[#allocation2 + $0xa0] sm:$0xff] %v795
    %804 = vst [vmem:[#allocation2 + $0xa8] sm:$0xff] %v796
    %805 = vst [vmem:[#allocation2 + $0xb0] sm:$0xff] %v797
    %806 = vst [vmem:[#allocation2 + $0xb8] sm:$0xff] %v798
    %807 = vrot.lane.b32.xlu0 %v83, 1
    %v808 = vpop.permute.xlu0 %807
    %809 = vrot.lane.b32.xlu0 %v85, 1
    %v810 = vpop.permute.xlu0 %809
    %811 = vrot.lane.b32.xlu0 %v87, 1
    %v812 = vpop.permute.xlu0 %811
    %813 = vrot.lane.b32.xlu0 %v89, 1
    %v814 = vpop.permute.xlu0 %813
    %815 = vrot.lane.b32.xlu0 %v91, 1
    %v816 = vpop.permute.xlu0 %815
    %817 = vrot.lane.b32.xlu0 %v93, 1
    %v818 = vpop.permute.xlu0 %817
    %819 = vrot.lane.b32.xlu0 %v95, 1
    %v820 = vpop.permute.xlu0 %819
    %821 = vrot.lane.b32.xlu0 %v97, 1
    %v822 = vpop.permute.xlu0 %821
    %823 = vrot.lane.b32.xlu0 %v84, 1
    %v824 = vpop.permute.xlu0 %823
    %825 = vrot.lane.b32.xlu0 %v86, 1
    %v826 = vpop.permute.xlu0 %825
    %827 = vrot.lane.b32.xlu0 %v88, 1
    %v828 = vpop.permute.xlu0 %827
    %829 = vrot.lane.b32.xlu0 %v90, 1
    %v830 = vpop.permute.xlu0 %829
    %831 = vrot.lane.b32.xlu0 %v92, 1
    %v832 = vpop.permute.xlu0 %831
    %833 = vrot.lane.b32.xlu0 %v94, 1
    %v834 = vpop.permute.xlu0 %833
    %835 = vrot.lane.b32.xlu0 %v96, 1
    %v836 = vpop.permute.xlu0 %835
    %837 = vrot.lane.b32.xlu0 %v98, 1
    %v838 = vpop.permute.xlu0 %837
    %v839 = vsel %vm653, %v808, %v824
    %v840 = vsel %vm653, %v810, %v826
    %v841 = vsel %vm653, %v812, %v828
    %v842 = vsel %vm653, %v814, %v830
    %v843 = vsel %vm653, %v816, %v832
    %v844 = vsel %vm653, %v818, %v834
    %v845 = vsel %vm653, %v820, %v836
    %v846 = vsel %vm653, %v822, %v838
    %v847 = vsel %vm653, %v824, %v808
    %v848 = vsel %vm653, %v826, %v810
    %v849 = vsel %vm653, %v828, %v812
    %v850 = vsel %vm653, %v830, %v814
    %v851 = vsel %vm653, %v832, %v816
    %v852 = vsel %vm653, %v834, %v818
    %v853 = vsel %vm653, %v836, %v820
    %v854 = vsel %vm653, %v838, %v822
    %v855 = vsel %vm672, %v847, 0.0
    %v856 = vsel %vm673, %v839, 0.0
    %v857 = vsel %vm672, %v848, 0.0
    %v858 = vsel %vm673, %v840, 0.0
    %v859 = vsel %vm672, %v849, 0.0
    %v860 = vsel %vm673, %v841, 0.0
    %v861 = vsel %vm672, %v850, 0.0
    %v862 = vsel %vm673, %v842, 0.0
    %v863 = vsel %vm672, %v851, 0.0
    %v864 = vsel %vm673, %v843, 0.0
    %v865 = vsel %vm672, %v852, 0.0
    %v866 = vsel %vm673, %v844, 0.0
    %v867 = vsel %vm672, %v853, 0.0
    %v868 = vsel %vm673, %v845, 0.0
    %v869 = vsel %vm672, %v854, 0.0
    %v870 = vsel %vm673, %v846, 0.0
    %v871 = vpack.c.bf16 %v857, %v855
    %v872 = vpack.c.bf16 %v858, %v856
    %v873 = vpack.c.bf16 %v861, %v859
    %v874 = vpack.c.bf16 %v862, %v860
    %v875 = vpack.c.bf16 %v865, %v863
    %v876 = vpack.c.bf16 %v866, %v864
    %v877 = vpack.c.bf16 %v869, %v867
    %v878 = vpack.c.bf16 %v870, %v868
    %879 = vst [vmem:[#allocation2 + $0xc0] sm:$0xff] %v871
    %880 = vst [vmem:[#allocation2 + $0xc8] sm:$0xff] %v872
    %881 = vst [vmem:[#allocation2 + $0xd0] sm:$0xff] %v873
    %882 = vst [vmem:[#allocation2 + $0xd8] sm:$0xff] %v874
    %883 = vst [vmem:[#allocation2 + $0xe0] sm:$0xff] %v875
    %884 = vst [vmem:[#allocation2 + $0xe8] sm:$0xff] %v876
    %885 = vst [vmem:[#allocation2 + $0xf0] sm:$0xff] %v877
    %886 = vst [vmem:[#allocation2 + $0xf8] sm:$0xff] %v878
    %v887 = vpack.c.bf16 %v85, %v83
    %v888 = vpack.c.bf16 %v86, %v84
    %v889 = vpack.c.bf16 %v89, %v87
    %v890 = vpack.c.bf16 %v90, %v88
    %v891 = vpack.c.bf16 %v93, %v91
    %v892 = vpack.c.bf16 %v94, %v92
    %v893 = vpack.c.bf16 %v97, %v95
    %v894 = vpack.c.bf16 %v98, %v96
    %895 = vst [vmem:[#allocation2 + $0x100] sm:$0xff] %v887
    %896 = vst [vmem:[#allocation2 + $0x108] sm:$0xff] %v888
    %897 = vst [vmem:[#allocation2 + $0x110] sm:$0xff] %v889
    %898 = vst [vmem:[#allocation2 + $0x118] sm:$0xff] %v890
    %899 = vst [vmem:[#allocation2 + $0x120] sm:$0xff] %v891
    %900 = vst [vmem:[#allocation2 + $0x128] sm:$0xff] %v892
    %901 = vst [vmem:[#allocation2 + $0x130] sm:$0xff] %v893
    %902 = vst [vmem:[#allocation2 + $0x138] sm:$0xff] %v894
    %903 = vrot.lane.b32.xlu0 %v83, 127
    %v904 = vpop.permute.xlu0 %903
    %905 = vrot.lane.b32.xlu0 %v85, 127
    %v906 = vpop.permute.xlu0 %905
    %907 = vrot.lane.b32.xlu0 %v87, 127
    %v908 = vpop.permute.xlu0 %907
    %909 = vrot.lane.b32.xlu0 %v89, 127
    %v910 = vpop.permute.xlu0 %909
    %911 = vrot.lane.b32.xlu0 %v91, 127
    %v912 = vpop.permute.xlu0 %911
    %913 = vrot.lane.b32.xlu0 %v93, 127
    %v914 = vpop.permute.xlu0 %913
    %915 = vrot.lane.b32.xlu0 %v95, 127
    %v916 = vpop.permute.xlu0 %915
    %917 = vrot.lane.b32.xlu0 %v97, 127
    %v918 = vpop.permute.xlu0 %917
    %919 = vrot.lane.b32.xlu0 %v84, 127
    %v920 = vpop.permute.xlu0 %919
    %921 = vrot.lane.b32.xlu0 %v86, 127
    %v922 = vpop.permute.xlu0 %921
    %923 = vrot.lane.b32.xlu0 %v88, 127
    %v924 = vpop.permute.xlu0 %923
    %925 = vrot.lane.b32.xlu0 %v90, 127
    %v926 = vpop.permute.xlu0 %925
    %927 = vrot.lane.b32.xlu0 %v92, 127
    %v928 = vpop.permute.xlu0 %927
    %929 = vrot.lane.b32.xlu0 %v94, 127
    %v930 = vpop.permute.xlu0 %929
    %931 = vrot.lane.b32.xlu0 %v96, 127
    %v932 = vpop.permute.xlu0 %931
    %933 = vrot.lane.b32.xlu0 %v98, 127
    %v934 = vpop.permute.xlu0 %933
    %v935 = vsel %vm754, %v904, %v920
    %v936 = vsel %vm754, %v906, %v922
    %v937 = vsel %vm754, %v908, %v924
    %v938 = vsel %vm754, %v910, %v926
    %v939 = vsel %vm754, %v912, %v928
    %v940 = vsel %vm754, %v914, %v930
    %v941 = vsel %vm754, %v916, %v932
    %v942 = vsel %vm754, %v918, %v934
    %v943 = vsel %vm754, %v920, %v904
    %v944 = vsel %vm754, %v922, %v906
    %v945 = vsel %vm754, %v924, %v908
    %v946 = vsel %vm754, %v926, %v910
    %v947 = vsel %vm754, %v928, %v912
    %v948 = vsel %vm754, %v930, %v914
    %v949 = vsel %vm754, %v932, %v916
    %v950 = vsel %vm754, %v934, %v918
    %v951 = vsel %vm773, %v935, 0.0
    %v952 = vsel %vm774, %v943, 0.0
    %v953 = vsel %vm773, %v936, 0.0
    %v954 = vsel %vm774, %v944, 0.0
    %v955 = vsel %vm773, %v937, 0.0
    %v956 = vsel %vm774, %v945, 0.0
    %v957 = vsel %vm773, %v938, 0.0
    %v958 = vsel %vm774, %v946, 0.0
    %v959 = vsel %vm773, %v939, 0.0
    %v960 = vsel %vm774, %v947, 0.0
    %v961 = vsel %vm773, %v940, 0.0
    %v962 = vsel %vm774, %v948, 0.0
    %v963 = vsel %vm773, %v941, 0.0
    %v964 = vsel %vm774, %v949, 0.0
    %v965 = vsel %vm773, %v942, 0.0
    %v966 = vsel %vm774, %v950, 0.0
    %v967 = vpack.c.bf16 %v953, %v951
    %v968 = vpack.c.bf16 %v954, %v952
    %v969 = vpack.c.bf16 %v957, %v955
    %v970 = vpack.c.bf16 %v958, %v956
    %v971 = vpack.c.bf16 %v961, %v959
    %v972 = vpack.c.bf16 %v962, %v960
    %v973 = vpack.c.bf16 %v965, %v963
    %v974 = vpack.c.bf16 %v966, %v964
    %975 = vst [vmem:[#allocation2 + $0x140] sm:$0xff] %v967
    %976 = vst [vmem:[#allocation2 + $0x148] sm:$0xff] %v968
    %977 = vst [vmem:[#allocation2 + $0x150] sm:$0xff] %v969
    %978 = vst [vmem:[#allocation2 + $0x158] sm:$0xff] %v970
    %979 = vst [vmem:[#allocation2 + $0x160] sm:$0xff] %v971
    %980 = vst [vmem:[#allocation2 + $0x168] sm:$0xff] %v972
    %981 = vst [vmem:[#allocation2 + $0x170] sm:$0xff] %v973
    %982 = vst [vmem:[#allocation2 + $0x178] sm:$0xff] %v974
    %983 = vrot.lane.b32.xlu0 %v440, 1
    %v984 = vpop.permute.xlu0 %983
    %985 = vrot.lane.b32.xlu0 %v442, 1
    %v986 = vpop.permute.xlu0 %985
    %987 = vrot.lane.b32.xlu0 %v444, 1
    %v988 = vpop.permute.xlu0 %987
    %989 = vrot.lane.b32.xlu0 %v446, 1
    %v990 = vpop.permute.xlu0 %989
    %991 = vrot.lane.b32.xlu0 %v448, 1
    %v992 = vpop.permute.xlu0 %991
    %993 = vrot.lane.b32.xlu0 %v450, 1
    %v994 = vpop.permute.xlu0 %993
    %995 = vrot.lane.b32.xlu0 %v452, 1
    %v996 = vpop.permute.xlu0 %995
    %997 = vrot.lane.b32.xlu0 %v454, 1
    %v998 = vpop.permute.xlu0 %997
    %999 = vrot.lane.b32.xlu0 %v441, 1
    %v1000 = vpop.permute.xlu0 %999
    %1001 = vrot.lane.b32.xlu0 %v443, 1
    %v1002 = vpop.permute.xlu0 %1001
    %1003 = vrot.lane.b32.xlu0 %v445, 1
    %v1004 = vpop.permute.xlu0 %1003
    %1005 = vrot.lane.b32.xlu0 %v447, 1
    %v1006 = vpop.permute.xlu0 %1005
    %1007 = vrot.lane.b32.xlu0 %v449, 1
    %v1008 = vpop.permute.xlu0 %1007
    %1009 = vrot.lane.b32.xlu0 %v451, 1
    %v1010 = vpop.permute.xlu0 %1009
    %1011 = vrot.lane.b32.xlu0 %v453, 1
    %v1012 = vpop.permute.xlu0 %1011
    %1013 = vrot.lane.b32.xlu0 %v455, 1
    %v1014 = vpop.permute.xlu0 %1013
    %v1015 = vsel %vm653, %v984, %v1000
    %v1016 = vsel %vm653, %v986, %v1002
    %v1017 = vsel %vm653, %v988, %v1004
    %v1018 = vsel %vm653, %v990, %v1006
    %v1019 = vsel %vm653, %v992, %v1008
    %v1020 = vsel %vm653, %v994, %v1010
    %v1021 = vsel %vm653, %v996, %v1012
    %v1022 = vsel %vm653, %v998, %v1014
    %v1023 = vsel %vm653, %v1000, %v984
    %v1024 = vsel %vm653, %v1002, %v986
    %v1025 = vsel %vm653, %v1004, %v988
    %v1026 = vsel %vm653, %v1006, %v990
    %v1027 = vsel %vm653, %v1008, %v992
    %v1028 = vsel %vm653, %v1010, %v994
    %v1029 = vsel %vm653, %v1012, %v996
    %v1030 = vsel %vm653, %v1014, %v998
    %v1031 = vsel %vm672, %v1023, 0.0
    %v1032 = vsel %vm673, %v1015, 0.0
    %v1033 = vsel %vm672, %v1024, 0.0
    %v1034 = vsel %vm673, %v1016, 0.0
    %v1035 = vsel %vm672, %v1025, 0.0
    %v1036 = vsel %vm673, %v1017, 0.0
    %v1037 = vsel %vm672, %v1026, 0.0
    %v1038 = vsel %vm673, %v1018, 0.0
    %v1039 = vsel %vm672, %v1027, 0.0
    %v1040 = vsel %vm673, %v1019, 0.0
    %v1041 = vsel %vm672, %v1028, 0.0
    %v1042 = vsel %vm673, %v1020, 0.0
    %v1043 = vsel %vm672, %v1029, 0.0
    %v1044 = vsel %vm673, %v1021, 0.0
    %v1045 = vsel %vm672, %v1030, 0.0
    %v1046 = vsel %vm673, %v1022, 0.0
    %v1047 = vpack.c.bf16 %v1033, %v1031
    %v1048 = vpack.c.bf16 %v1034, %v1032
    %v1049 = vpack.c.bf16 %v1037, %v1035
    %v1050 = vpack.c.bf16 %v1038, %v1036
    %v1051 = vpack.c.bf16 %v1041, %v1039
    %v1052 = vpack.c.bf16 %v1042, %v1040
    %v1053 = vpack.c.bf16 %v1045, %v1043
    %v1054 = vpack.c.bf16 %v1046, %v1044
    %1055 = vst [vmem:[#allocation2 + $0x180] sm:$0xff] %v1047
    %1056 = vst [vmem:[#allocation2 + $0x188] sm:$0xff] %v1048
    %1057 = vst [vmem:[#allocation2 + $0x190] sm:$0xff] %v1049
    %1058 = vst [vmem:[#allocation2 + $0x198] sm:$0xff] %v1050
    %1059 = vst [vmem:[#allocation2 + $0x1a0] sm:$0xff] %v1051
    %1060 = vst [vmem:[#allocation2 + $0x1a8] sm:$0xff] %v1052
    %1061 = vst [vmem:[#allocation2 + $0x1b0] sm:$0xff] %v1053
    %1062 = vst [vmem:[#allocation2 + $0x1b8] sm:$0xff] %v1054
    %v1063 = vpack.c.bf16 %v442, %v440
    %v1064 = vpack.c.bf16 %v443, %v441
    %v1065 = vpack.c.bf16 %v446, %v444
    %v1066 = vpack.c.bf16 %v447, %v445
    %v1067 = vpack.c.bf16 %v450, %v448
    %v1068 = vpack.c.bf16 %v451, %v449
    %v1069 = vpack.c.bf16 %v454, %v452
    %v1070 = vpack.c.bf16 %v455, %v453
    %1071 = vst [vmem:[#allocation2 + $0x1c0] sm:$0xff] %v1063
    %1072 = vst [vmem:[#allocation2 + $0x1c8] sm:$0xff] %v1064
    %1073 = vst [vmem:[#allocation2 + $0x1d0] sm:$0xff] %v1065
    %1074 = vst [vmem:[#allocation2 + $0x1d8] sm:$0xff] %v1066
    %1075 = vst [vmem:[#allocation2 + $0x1e0] sm:$0xff] %v1067
    %1076 = vst [vmem:[#allocation2 + $0x1e8] sm:$0xff] %v1068
    %1077 = vst [vmem:[#allocation2 + $0x1f0] sm:$0xff] %v1069
    %1078 = vst [vmem:[#allocation2 + $0x1f8] sm:$0xff] %v1070
    %1079 = vrot.lane.b32.xlu0 %v440, 127
    %v1080 = vpop.permute.xlu0 %1079
    %1081 = vrot.lane.b32.xlu0 %v442, 127
    %v1082 = vpop.permute.xlu0 %1081
    %1083 = vrot.lane.b32.xlu0 %v444, 127
    %v1084 = vpop.permute.xlu0 %1083
    %1085 = vrot.lane.b32.xlu0 %v446, 127
    %v1086 = vpop.permute.xlu0 %1085
    %1087 = vrot.lane.b32.xlu0 %v448, 127
    %v1088 = vpop.permute.xlu0 %1087
    %1089 = vrot.lane.b32.xlu0 %v450, 127
    %v1090 = vpop.permute.xlu0 %1089
    %1091 = vrot.lane.b32.xlu0 %v452, 127
    %v1092 = vpop.permute.xlu0 %1091
    %1093 = vrot.lane.b32.xlu0 %v454, 127
    %v1094 = vpop.permute.xlu0 %1093
    %1095 = vrot.lane.b32.xlu0 %v441, 127
    %v1096 = vpop.permute.xlu0 %1095
    %1097 = vrot.lane.b32.xlu0 %v443, 127
    %v1098 = vpop.permute.xlu0 %1097
    %1099 = vrot.lane.b32.xlu0 %v445, 127
    %v1100 = vpop.permute.xlu0 %1099
    %1101 = vrot.lane.b32.xlu0 %v447, 127
    %v1102 = vpop.permute.xlu0 %1101
    %1103 = vrot.lane.b32.xlu0 %v449, 127
    %v1104 = vpop.permute.xlu0 %1103
    %1105 = vrot.lane.b32.xlu0 %v451, 127
    %v1106 = vpop.permute.xlu0 %1105
    %1107 = vrot.lane.b32.xlu0 %v453, 127
    %v1108 = vpop.permute.xlu0 %1107
    %1109 = vrot.lane.b32.xlu0 %v455, 127
    %v1110 = vpop.permute.xlu0 %1109
    %v1111 = vsel %vm754, %v1080, %v1096
    %v1112 = vsel %vm754, %v1082, %v1098
    %v1113 = vsel %vm754, %v1084, %v1100
    %v1114 = vsel %vm754, %v1086, %v1102
    %v1115 = vsel %vm754, %v1088, %v1104
    %v1116 = vsel %vm754, %v1090, %v1106
    %v1117 = vsel %vm754, %v1092, %v1108
    %v1118 = vsel %vm754, %v1094, %v1110
    %v1119 = vsel %vm754, %v1096, %v1080
    %v1120 = vsel %vm754, %v1098, %v1082
    %v1121 = vsel %vm754, %v1100, %v1084
    %v1122 = vsel %vm754, %v1102, %v1086
    %v1123 = vsel %vm754, %v1104, %v1088
    %v1124 = vsel %vm754, %v1106, %v1090
    %v1125 = vsel %vm754, %v1108, %v1092
    %v1126 = vsel %vm754, %v1110, %v1094
    %v1127 = vsel %vm773, %v1111, 0.0
    %v1128 = vsel %vm774, %v1119, 0.0
    %v1129 = vsel %vm773, %v1112, 0.0
    %v1130 = vsel %vm774, %v1120, 0.0
    %v1131 = vsel %vm773, %v1113, 0.0
    %v1132 = vsel %vm774, %v1121, 0.0
    %v1133 = vsel %vm773, %v1114, 0.0
    %v1134 = vsel %vm774, %v1122, 0.0
    %v1135 = vsel %vm773, %v1115, 0.0
    %v1136 = vsel %vm774, %v1123, 0.0
    %v1137 = vsel %vm773, %v1116, 0.0
    %v1138 = vsel %vm774, %v1124, 0.0
    %v1139 = vsel %vm773, %v1117, 0.0
    %v1140 = vsel %vm774, %v1125, 0.0
    %v1141 = vsel %vm773, %v1118, 0.0
    %v1142 = vsel %vm774, %v1126, 0.0
    %v1143 = vpack.c.bf16 %v1129, %v1127
    %v1144 = vpack.c.bf16 %v1130, %v1128
    %v1145 = vpack.c.bf16 %v1133, %v1131
    %v1146 = vpack.c.bf16 %v1134, %v1132
    %v1147 = vpack.c.bf16 %v1137, %v1135
    %v1148 = vpack.c.bf16 %v1138, %v1136
    %v1149 = vpack.c.bf16 %v1141, %v1139
    %v1150 = vpack.c.bf16 %v1142, %v1140
    %1151 = vst [vmem:[#allocation2 + $0x200] sm:$0xff] %v1143
    %1152 = vst [vmem:[#allocation2 + $0x208] sm:$0xff] %v1144
    %1153 = vst [vmem:[#allocation2 + $0x210] sm:$0xff] %v1145
    %1154 = vst [vmem:[#allocation2 + $0x218] sm:$0xff] %v1146
    %1155 = vst [vmem:[#allocation2 + $0x220] sm:$0xff] %v1147
    %1156 = vst [vmem:[#allocation2 + $0x228] sm:$0xff] %v1148
    %1157 = vst [vmem:[#allocation2 + $0x230] sm:$0xff] %v1149
    %1158 = vst [vmem:[#allocation2 + $0x238] sm:$0xff] %v1150
    %v1159 = vld [vmem:[#allocation6] sm:$0xff]
    %v1160 = vld [vmem:[#allocation6 + $0x8] sm:$0xff]
    %v1161 = vld [vmem:[#allocation6 + $0x10] sm:$0xf]
    %v1162 = vld [vmem:[#allocation6 + $0x14] sm:$0xff]
    %v1163 = vld [vmem:[#allocation6 + $0x1c] sm:$0xff]
    %v1164 = vld [vmem:[#allocation6 + $0x24] sm:$0xf]
    %v1165 = vld [vmem:[#allocation6 + $0x28] sm:$0xff]
    %v1166 = vld [vmem:[#allocation6 + $0x30] sm:$0xff]
    %v1167 = vld [vmem:[#allocation6 + $0x38] sm:$0xf]
    %v1168 = vld [vmem:[#allocation6 + $0x3c] sm:$0xff]
    %v1169 = vld [vmem:[#allocation6 + $0x44] sm:$0xff]
    %v1170 = vld [vmem:[#allocation6 + $0x4c] sm:$0xf]
    %v1171 = vld [vmem:[#allocation6 + $0x50] sm:$0xff]
    %v1172 = vld [vmem:[#allocation6 + $0x58] sm:$0xff]
    %v1173 = vld [vmem:[#allocation6 + $0x60] sm:$0xf]
    %v1174 = vld [vmem:[#allocation6 + $0x64] sm:$0xff]
    %v1175 = vld [vmem:[#allocation6 + $0x6c] sm:$0xff]
    %v1176 = vld [vmem:[#allocation6 + $0x74] sm:$0xf]
    %v1177 = vld [vmem:[#allocation6 + $0x78] sm:$0xff]
    %v1178 = vld [vmem:[#allocation6 + $0x80] sm:$0xff]
    %v1179 = vld [vmem:[#allocation6 + $0x88] sm:$0xf]
    %v1180 = vld [vmem:[#allocation6 + $0x8c] sm:$0xff]
    %v1181 = vld [vmem:[#allocation6 + $0x94] sm:$0xff]
    %v1182 = vld [vmem:[#allocation6 + $0x9c] sm:$0xf]
    %v1183 = vld [vmem:[#allocation2] sm:$0xff]
    %v1184 = vld [vmem:[#allocation2 + $0x8] sm:$0xff]
    %v1185 = vld [vmem:[#allocation2 + $0x10] sm:$0xff]
    %v1186 = vld [vmem:[#allocation2 + $0x18] sm:$0xff]
    %v1187 = vld [vmem:[#allocation2 + $0x20] sm:$0xff]
    %v1188 = vld [vmem:[#allocation2 + $0x28] sm:$0xff]
    %v1189 = vld [vmem:[#allocation2 + $0x30] sm:$0xff]
    %v1190 = vld [vmem:[#allocation2 + $0x38] sm:$0xff]
    %v1191 = vld [vmem:[#allocation2 + $0x40] sm:$0xff]
    %v1192 = vld [vmem:[#allocation2 + $0x48] sm:$0xff]
    %v1193 = vld [vmem:[#allocation2 + $0x50] sm:$0xff]
    %v1194 = vld [vmem:[#allocation2 + $0x58] sm:$0xff]
    %v1195 = vld [vmem:[#allocation2 + $0x60] sm:$0xff]
    %v1196 = vld [vmem:[#allocation2 + $0x68] sm:$0xff]
    %v1197 = vld [vmem:[#allocation2 + $0x70] sm:$0xff]
    %v1198 = vld [vmem:[#allocation2 + $0x78] sm:$0xff]
    %v1199 = vld [vmem:[#allocation2 + $0x80] sm:$0xff]
    %v1200 = vld [vmem:[#allocation2 + $0x88] sm:$0xff]
    %v1201 = vld [vmem:[#allocation2 + $0x90] sm:$0xff]
    %v1202 = vld [vmem:[#allocation2 + $0x98] sm:$0xff]
    %v1203 = vld [vmem:[#allocation2 + $0xa0] sm:$0xff]
    %v1204 = vld [vmem:[#allocation2 + $0xa8] sm:$0xff]
    %v1205 = vld [vmem:[#allocation2 + $0xb0] sm:$0xff]
    %v1206 = vld [vmem:[#allocation2 + $0xb8] sm:$0xff]
    %v1207 = vld [vmem:[#allocation2 + $0xc0] sm:$0xff]
    %v1208 = vld [vmem:[#allocation2 + $0xc8] sm:$0xff]
    %v1209 = vld [vmem:[#allocation2 + $0xd0] sm:$0xff]
    %v1210 = vld [vmem:[#allocation2 + $0xd8] sm:$0xff]
    %v1211 = vld [vmem:[#allocation2 + $0xe0] sm:$0xff]
    %v1212 = vld [vmem:[#allocation2 + $0xe8] sm:$0xff]
    %v1213 = vld [vmem:[#allocation2 + $0xf0] sm:$0xff]
    %v1214 = vld [vmem:[#allocation2 + $0xf8] sm:$0xff]
    %v1215 = vld [vmem:[#allocation2 + $0x100] sm:$0xff]
    %v1216 = vld [vmem:[#allocation2 + $0x108] sm:$0xff]
    %v1217 = vld [vmem:[#allocation2 + $0x110] sm:$0xff]
    %v1218 = vld [vmem:[#allocation2 + $0x118] sm:$0xff]
    %v1219 = vld [vmem:[#allocation2 + $0x120] sm:$0xff]
    %v1220 = vld [vmem:[#allocation2 + $0x128] sm:$0xff]
    %v1221 = vld [vmem:[#allocation2 + $0x130] sm:$0xff]
    %v1222 = vld [vmem:[#allocation2 + $0x138] sm:$0xff]
    %v1223 = vld [vmem:[#allocation2 + $0x140] sm:$0xff]
    %v1224 = vld [vmem:[#allocation2 + $0x148] sm:$0xff]
    %v1225 = vld [vmem:[#allocation2 + $0x150] sm:$0xff]
    %v1226 = vld [vmem:[#allocation2 + $0x158] sm:$0xff]
    %v1227 = vld [vmem:[#allocation2 + $0x160] sm:$0xff]
    %v1228 = vld [vmem:[#allocation2 + $0x168] sm:$0xff]
    %v1229 = vld [vmem:[#allocation2 + $0x170] sm:$0xff]
    %v1230 = vld [vmem:[#allocation2 + $0x178] sm:$0xff]
    %v1231 = vld [vmem:[#allocation2 + $0x180] sm:$0xff]
    %v1232 = vld [vmem:[#allocation2 + $0x188] sm:$0xff]
    %v1233 = vld [vmem:[#allocation2 + $0x190] sm:$0xff]
    %v1234 = vld [vmem:[#allocation2 + $0x198] sm:$0xff]
    %v1235 = vld [vmem:[#allocation2 + $0x1a0] sm:$0xff]
    %v1236 = vld [vmem:[#allocation2 + $0x1a8] sm:$0xff]
    %v1237 = vld [vmem:[#allocation2 + $0x1b0] sm:$0xff]
    %v1238 = vld [vmem:[#allocation2 + $0x1b8] sm:$0xff]
    %v1239 = vld [vmem:[#allocation2 + $0x1c0] sm:$0xff]
    %v1240 = vld [vmem:[#allocation2 + $0x1c8] sm:$0xff]
    %v1241 = vld [vmem:[#allocation2 + $0x1d0] sm:$0xff]
    %v1242 = vld [vmem:[#allocation2 + $0x1d8] sm:$0xff]
    %v1243 = vld [vmem:[#allocation2 + $0x1e0] sm:$0xff]
    %v1244 = vld [vmem:[#allocation2 + $0x1e8] sm:$0xff]
    %v1245 = vld [vmem:[#allocation2 + $0x1f0] sm:$0xff]
    %v1246 = vld [vmem:[#allocation2 + $0x1f8] sm:$0xff]
    %v1247 = vld [vmem:[#allocation2 + $0x200] sm:$0xff]
    %v1248 = vld [vmem:[#allocation2 + $0x208] sm:$0xff]
    %v1249 = vld [vmem:[#allocation2 + $0x210] sm:$0xff]
    %v1250 = vld [vmem:[#allocation2 + $0x218] sm:$0xff]
    %v1251 = vld [vmem:[#allocation2 + $0x220] sm:$0xff]
    %v1252 = vld [vmem:[#allocation2 + $0x228] sm:$0xff]
    %v1253 = vld [vmem:[#allocation2 + $0x230] sm:$0xff]
    %v1254 = vld [vmem:[#allocation2 + $0x238] sm:$0xff]
    %v1255 = vld [vmem:[%s2] sm:$0xff]
    %v1256 = vld [vmem:[%s2 + $0x8] sm:$0xff]
    %v1257 = vld [vmem:[%s2 + $0x10] sm:$0xff]
    %v1258 = vld [vmem:[%s2 + $0x18] sm:$0xff]
    %v1259 = vld [vmem:[%s2 + $0x20] sm:$0xff]
    %v1260 = vld [vmem:[%s2 + $0x28] sm:$0xff]
    %v1261 = vld [vmem:[%s2 + $0x30] sm:$0xff]
    %v1262 = vld [vmem:[%s2 + $0x38] sm:$0xff]
    %1264 = vset.pattern.permute.xlu0 0
    %1265 = vperm.xlu0 %1264, %v1255
    %v1266 = vpop.permute.xlu0 %1265
    %1269 = vset.pattern.permute.xlu0 0
    %1270 = vperm.xlu0 %1269, %v1256
    %v1271 = vpop.permute.xlu0 %1270
    %1274 = vset.pattern.permute.xlu0 0
    %1275 = vperm.xlu0 %1274, %v1257
    %v1276 = vpop.permute.xlu0 %1275
    %1279 = vset.pattern.permute.xlu0 0
    %1280 = vperm.xlu0 %1279, %v1258
    %v1281 = vpop.permute.xlu0 %1280
    %1284 = vset.pattern.permute.xlu0 0
    %1285 = vperm.xlu0 %1284, %v1259
    %v1286 = vpop.permute.xlu0 %1285
    %1289 = vset.pattern.permute.xlu0 0
    %1290 = vperm.xlu0 %1289, %v1260
    %v1291 = vpop.permute.xlu0 %1290
    %1294 = vset.pattern.permute.xlu0 0
    %1295 = vperm.xlu0 %1294, %v1261
    %v1296 = vpop.permute.xlu0 %1295
    %1299 = vset.pattern.permute.xlu0 0
    %1300 = vperm.xlu0 %1299, %v1262
    %v1301 = vpop.permute.xlu0 %1300
    %v1327 = vunpack.c.l.b16 %v1159
    %v1328 = vunpack.c.h.b16 %v1159
    %v1329 = vunpack.c.l.b16 %v1160
    %v1330 = vunpack.c.h.b16 %v1160
    %v1331 = vunpack.c.l.b16 %v1161
    %v1332 = vunpack.c.l.b16 %v1162
    %v1333 = vunpack.c.h.b16 %v1162
    %v1334 = vunpack.c.l.b16 %v1163
    %v1335 = vunpack.c.h.b16 %v1163
    %v1336 = vunpack.c.l.b16 %v1164
    %v1337 = vunpack.c.l.b16 %v1165
    %v1338 = vunpack.c.h.b16 %v1165
    %v1339 = vunpack.c.l.b16 %v1166
    %v1340 = vunpack.c.h.b16 %v1166
    %v1341 = vunpack.c.l.b16 %v1167
    %v1342 = vunpack.c.l.b16 %v1168
    %v1343 = vunpack.c.h.b16 %v1168
    %v1344 = vunpack.c.l.b16 %v1169
    %v1345 = vunpack.c.h.b16 %v1169
    %v1346 = vunpack.c.l.b16 %v1170
    %v1347 = vunpack.c.l.b16 %v1171
    %v1348 = vunpack.c.h.b16 %v1171
    %v1349 = vunpack.c.l.b16 %v1172
    %v1350 = vunpack.c.h.b16 %v1172
    %v1351 = vunpack.c.l.b16 %v1173
    %v1352 = vunpack.c.l.b16 %v1174
    %v1353 = vunpack.c.h.b16 %v1174
    %v1354 = vunpack.c.l.b16 %v1175
    %v1355 = vunpack.c.h.b16 %v1175
    %v1356 = vunpack.c.l.b16 %v1176
    %v1357 = vunpack.c.l.b16 %v1177
    %v1358 = vunpack.c.h.b16 %v1177
    %v1359 = vunpack.c.l.b16 %v1178
    %v1360 = vunpack.c.h.b16 %v1178
    %v1361 = vunpack.c.l.b16 %v1179
    %v1362 = vunpack.c.l.b16 %v1180
    %v1363 = vunpack.c.h.b16 %v1180
    %v1364 = vunpack.c.l.b16 %v1181
    %v1365 = vunpack.c.h.b16 %v1181
    %v1366 = vunpack.c.l.b16 %v1182
    %v1367 = vpack.c.b16 %v1332, %v1327
    %v1368 = vpack.c.b16 %v1333, %v1328
    %v1369 = vpack.c.b16 %v1334, %v1329
    %v1370 = vpack.c.b16 %v1335, %v1330
    %v1371 = vpack.c.b16 %v1336, %v1331
    %v1372 = vpack.c.b16 %v1342, %v1337
    %v1373 = vpack.c.b16 %v1343, %v1338
    %v1374 = vpack.c.b16 %v1344, %v1339
    %v1375 = vpack.c.b16 %v1345, %v1340
    %v1376 = vpack.c.b16 %v1346, %v1341
    %v1377 = vpack.c.b16 %v1352, %v1347
    %v1378 = vpack.c.b16 %v1353, %v1348
    %v1379 = vpack.c.b16 %v1354, %v1349
    %v1380 = vpack.c.b16 %v1355, %v1350
    %v1381 = vpack.c.b16 %v1356, %v1351
    %v1382 = vpack.c.b16 %v1362, %v1357
    %v1383 = vpack.c.b16 %v1363, %v1358
    %v1384 = vpack.c.b16 %v1364, %v1359
    %v1385 = vpack.c.b16 %v1365, %v1360
    %v1386 = vpack.c.b16 %v1366, %v1361
    %vm1403 = vcmask 523264
    %v1405 = vsel %vm1403, %v1371, 0
    %v1408 = vsel %vm1403, %v1376, 0
    %v1411 = vsel %vm1403, %v1381, 0
    %v1414 = vsel %vm1403, %v1386, 0
    %1416 = vmatprep.subr.bf16.mxu0 %v1184
    %1417 = vmatpush1.bf16.msra.mxu0 %v1183
    %1418 = vmatprep.subr.bf16.mxu0 %v1186
    %1419 = vmatpush1.bf16.msra.mxu0 %v1185
    %1420 = vmatprep.subr.bf16.mxu0 %v1188
    %1421 = vmatpush1.bf16.msra.mxu0 %v1187
    %1422 = vmatprep.subr.bf16.mxu0 %v1190
    %1423 = vmatpush1.bf16.msra.mxu0 %v1189
    %1424 = vmatprep.subr.bf16.mxu0 %v1192
    %1425 = vmatpush1.bf16.msra.mxu0 %v1191
    %1426 = vmatprep.subr.bf16.mxu0 %v1194
    %1427 = vmatpush1.bf16.msra.mxu0 %v1193
    %1428 = vmatprep.subr.bf16.mxu0 %v1196
    %1429 = vmatpush1.bf16.msra.mxu0 %v1195
    %1430 = vmatprep.subr.bf16.mxu0 %v1198
    %1431 = vmatpush1.bf16.msra.mxu0 %v1197
    %1432 = vmatprep.subr.bf16.mxu0 %v1200
    %1433 = vmatpush1.bf16.msra.mxu0 %v1199
    %1434 = vmatprep.subr.bf16.mxu0 %v1202
    %1435 = vmatpush1.bf16.msra.mxu0 %v1201
    %1436 = vmatprep.subr.bf16.mxu0 %v1204
    %1437 = vmatpush1.bf16.msra.mxu0 %v1203
    %1438 = vmatprep.subr.bf16.mxu0 %v1206
    %1439 = vmatpush1.bf16.msra.mxu0 %v1205
    %1440 = vmatprep.subr.bf16.mxu0 %v1208
    %1441 = vmatpush1.bf16.msra.mxu0 %v1207
    %1442 = vmatprep.subr.bf16.mxu0 %v1210
    %1443 = vmatpush1.bf16.msra.mxu0 %v1209
    %1444 = vmatprep.subr.bf16.mxu0 %v1212
    %1445 = vmatpush1.bf16.msra.mxu0 %v1211
    %1446 = vmatprep.subr.bf16.mxu0 %v1214
    %1447 = vmatpush1.bf16.msra.mxu0 %v1213
    %1448 = vmatprep.mubr.bf16.mxu0 %v1368
    %1449 = vmatmul.mubr.bf16.gmra.mrb[0].mxu0 %v1367
    %v1450 = vpop.f32.mrb[0].mxu0
    %v1451 = vadd.f32 %v1266, %v1450
    %v1452 = vpop.f32.mrb[0].mxu0
    %v1453 = vadd.f32 %v1266, %v1452
    %v1454 = vpop.f32.mrb[0].mxu0
    %v1455 = vadd.f32 %v1271, %v1454
    %v1456 = vpop.f32.mrb[0].mxu0
    %v1457 = vadd.f32 %v1271, %v1456
    %1458 = vmatprep.mubr.bf16.mxu0 %v1373
    %1459 = vmatmul.mubr.bf16.gmra.mrb[0].mxu0 %v1372
    %v1460 = vpop.f32.mrb[0].mxu0
    %v1461 = vadd.f32 %v1276, %v1460
    %v1462 = vpop.f32.mrb[0].mxu0
    %v1463 = vadd.f32 %v1276, %v1462
    %v1464 = vpop.f32.mrb[0].mxu0
    %v1465 = vadd.f32 %v1281, %v1464
    %v1466 = vpop.f32.mrb[0].mxu0
    %v1467 = vadd.f32 %v1281, %v1466
    %1468 = vmatprep.mubr.bf16.mxu0 %v1378
    %1469 = vmatmul.mubr.bf16.gmra.mrb[0].mxu0 %v1377
    %v1470 = vpop.f32.mrb[0].mxu0
    %v1471 = vadd.f32 %v1286, %v1470
    %v1472 = vpop.f32.mrb[0].mxu0
    %v1473 = vadd.f32 %v1286, %v1472
    %v1474 = vpop.f32.mrb[0].mxu0
    %v1475 = vadd.f32 %v1291, %v1474
    %v1476 = vpop.f32.mrb[0].mxu0
    %v1477 = vadd.f32 %v1291, %v1476
    %1478 = vmatprep.mubr.bf16.mxu0 %v1383
    %1479 = vmatmul.mubr.bf16.gmra.mrb[0].mxu0 %v1382
    %v1480 = vpop.f32.mrb[0].mxu0
    %v1481 = vadd.f32 %v1296, %v1480
    %v1482 = vpop.f32.mrb[0].mxu0
    %v1483 = vadd.f32 %v1296, %v1482
    %v1484 = vpop.f32.mrb[0].mxu0
    %v1485 = vadd.f32 %v1301, %v1484
    %v1486 = vpop.f32.mrb[0].mxu0
    %v1487 = vadd.f32 %v1301, %v1486
    %1488 = vdwg.mxu0
    %1489 = vmatprep.subr.bf16.mxu0 %v1216
    %1490 = vmatpush1.bf16.msra.mxu0 %v1215
    %1491 = vmatprep.subr.bf16.mxu0 %v1218
    %1492 = vmatpush1.bf16.msra.mxu0 %v1217
    %1493 = vmatprep.subr.bf16.mxu0 %v1220
    %1494 = vmatpush1.bf16.msra.mxu0 %v1219
    %1495 = vmatprep.subr.bf16.mxu0 %v1222
    %1496 = vmatpush1.bf16.msra.mxu0 %v1221
    %1497 = vmatprep.subr.bf16.mxu0 %v1224
    %1498 = vmatpush1.bf16.msra.mxu0 %v1223
    %1499 = vmatprep.subr.bf16.mxu0 %v1226
    %1500 = vmatpush1.bf16.msra.mxu0 %v1225
    %1501 = vmatprep.subr.bf16.mxu0 %v1228
    %1502 = vmatpush1.bf16.msra.mxu0 %v1227
    %1503 = vmatprep.subr.bf16.mxu0 %v1230
    %1504 = vmatpush1.bf16.msra.mxu0 %v1229
    %1505 = vmatprep.subr.bf16.mxu0 %v1232
    %1506 = vmatpush1.bf16.msra.mxu0 %v1231
    %1507 = vmatprep.subr.bf16.mxu0 %v1234
    %1508 = vmatpush1.bf16.msra.mxu0 %v1233
    %1509 = vmatprep.subr.bf16.mxu0 %v1236
    %1510 = vmatpush1.bf16.msra.mxu0 %v1235
    %1511 = vmatprep.subr.bf16.mxu0 %v1238
    %1512 = vmatpush1.bf16.msra.mxu0 %v1237
    %1513 = vmatprep.subr.bf16.mxu0 %v1240
    %1514 = vmatpush1.bf16.msra.mxu0 %v1239
    %1515 = vmatprep.subr.bf16.mxu0 %v1242
    %1516 = vmatpush1.bf16.msra.mxu0 %v1241
    %1517 = vmatprep.subr.bf16.mxu0 %v1244
    %1518 = vmatpush1.bf16.msra.mxu0 %v1243
    %1519 = vmatprep.subr.bf16.mxu0 %v1246
    %1520 = vmatpush1.bf16.msra.mxu0 %v1245
    %1521 = vmatprep.mubr.bf16.mxu0 %v1370
    %1522 = vmatmul.mubr.bf16.gmra.mrb[0].mxu0 %v1369
    %v1523 = vpop.f32.mrb[0].mxu0
    %v1524 = vadd.f32 %v1451, %v1523
    %v1525 = vpop.f32.mrb[0].mxu0
    %v1526 = vadd.f32 %v1453, %v1525
    %v1527 = vpop.f32.mrb[0].mxu0
    %v1528 = vadd.f32 %v1455, %v1527
    %v1529 = vpop.f32.mrb[0].mxu0
    %v1530 = vadd.f32 %v1457, %v1529
    %1531 = vmatprep.mubr.bf16.mxu0 %v1375
    %1532 = vmatmul.mubr.bf16.gmra.mrb[0].mxu0 %v1374
    %v1533 = vpop.f32.mrb[0].mxu0
    %v1534 = vadd.f32 %v1461, %v1533
    %v1535 = vpop.f32.mrb[0].mxu0
    %v1536 = vadd.f32 %v1463, %v1535
    %v1537 = vpop.f32.mrb[0].mxu0
    %v1538 = vadd.f32 %v1465, %v1537
    %v1539 = vpop.f32.mrb[0].mxu0
    %v1540 = vadd.f32 %v1467, %v1539
    %1541 = vmatprep.mubr.bf16.mxu0 %v1380
    %1542 = vmatmul.mubr.bf16.gmra.mrb[0].mxu0 %v1379
    %v1543 = vpop.f32.mrb[0].mxu0
    %v1544 = vadd.f32 %v1471, %v1543
    %v1545 = vpop.f32.mrb[0].mxu0
    %v1546 = vadd.f32 %v1473, %v1545
    %v1547 = vpop.f32.mrb[0].mxu0
    %v1548 = vadd.f32 %v1475, %v1547
    %v1549 = vpop.f32.mrb[0].mxu0
    %v1550 = vadd.f32 %v1477, %v1549
    %1551 = vmatprep.mubr.bf16.mxu0 %v1385
    %1552 = vmatmul.mubr.bf16.gmra.mrb[0].mxu0 %v1384
    %v1553 = vpop.f32.mrb[0].mxu0
    %v1554 = vadd.f32 %v1481, %v1553
    %v1555 = vpop.f32.mrb[0].mxu0
    %v1556 = vadd.f32 %v1483, %v1555
    %v1557 = vpop.f32.mrb[0].mxu0
    %v1558 = vadd.f32 %v1485, %v1557
    %v1559 = vpop.f32.mrb[0].mxu0
    %v1560 = vadd.f32 %v1487, %v1559
    %1561 = vdwg.mxu0
    %1562 = vmatprep.subr.bf16.mxu0 %v1248
    %1563 = vmatpush1.bf16.msra.mxu0 %v1247
    %1564 = vmatprep.subr.bf16.mxu0 %v1250
    %1565 = vmatpush1.bf16.msra.mxu0 %v1249
    %1566 = vmatprep.subr.bf16.mxu0 %v1252
    %1567 = vmatpush1.bf16.msra.mxu0 %v1251
    %1568 = vmatprep.subr.bf16.mxu0 %v1254
    %1569 = vmatpush1.bf16.msra.mxu0 %v1253
    %1570 = vmatprep.subr.bf16.mxu0 0
    %1571 = vmatpush1.bf16.msra.mxu0 0
    %1572 = vmatprep.subr.bf16.mxu0 0
    %1573 = vmatpush1.bf16.msra.mxu0 0
    %1574 = vmatprep.subr.bf16.mxu0 0
    %1575 = vmatpush1.bf16.msra.mxu0 0
    %1576 = vmatprep.subr.bf16.mxu0 0
    %1577 = vmatpush1.bf16.msra.mxu0 0
    %1578 = vmatprep.subr.bf16.mxu0 0
    %1579 = vmatpush1.bf16.msra.mxu0 0
    %1580 = vmatprep.subr.bf16.mxu0 0
    %1581 = vmatpush1.bf16.msra.mxu0 0
    %1582 = vmatprep.subr.bf16.mxu0 0
    %1583 = vmatpush1.bf16.msra.mxu0 0
    %1584 = vmatprep.subr.bf16.mxu0 0
    %1585 = vmatpush1.bf16.msra.mxu0 0
    %1586 = vmatprep.subr.bf16.mxu0 0
    %1587 = vmatpush1.bf16.msra.mxu0 0
    %1588 = vmatprep.subr.bf16.mxu0 0
    %1589 = vmatpush1.bf16.msra.mxu0 0
    %1590 = vmatprep.subr.bf16.mxu0 0
    %1591 = vmatpush1.bf16.msra.mxu0 0
    %1592 = vmatprep.subr.bf16.mxu0 0
    %1593 = vmatpush1.bf16.msra.mxu0 0
    %1594 = vmatprep.mubr.bf16.mxu0 0
    %1595 = vmatmul.mubr.bf16.gmra.mrb[0].mxu0 %v1405
    %v1596 = vpop.f32.mrb[0].mxu0
    %v1597 = vadd.f32 %v1524, %v1596
    %v1598 = vpop.f32.mrb[0].mxu0
    %v1599 = vadd.f32 %v1526, %v1598
    %v1600 = vpop.f32.mrb[0].mxu0
    %v1601 = vadd.f32 %v1528, %v1600
    %v1602 = vpop.f32.mrb[0].mxu0
    %v1603 = vadd.f32 %v1530, %v1602
    %1604 = vmatprep.mubr.bf16.mxu0 0
    %1605 = vmatmul.mubr.bf16.gmra.mrb[0].mxu0 %v1408
    %v1606 = vpop.f32.mrb[0].mxu0
    %v1607 = vadd.f32 %v1534, %v1606
    %v1608 = vpop.f32.mrb[0].mxu0
    %v1609 = vadd.f32 %v1536, %v1608
    %v1610 = vpop.f32.mrb[0].mxu0
    %v1611 = vadd.f32 %v1538, %v1610
    %v1612 = vpop.f32.mrb[0].mxu0
    %v1613 = vadd.f32 %v1540, %v1612
    %1614 = vmatprep.mubr.bf16.mxu0 0
    %1615 = vmatmul.mubr.bf16.gmra.mrb[0].mxu0 %v1411
    %v1616 = vpop.f32.mrb[0].mxu0
    %v1617 = vadd.f32 %v1544, %v1616
    %v1618 = vpop.f32.mrb[0].mxu0
    %v1619 = vadd.f32 %v1546, %v1618
    %v1620 = vpop.f32.mrb[0].mxu0
    %v1621 = vadd.f32 %v1548, %v1620
    %v1622 = vpop.f32.mrb[0].mxu0
    %v1623 = vadd.f32 %v1550, %v1622
    %1624 = vmatprep.mubr.bf16.mxu0 0
    %1625 = vmatmul.mubr.bf16.gmra.mrb[0].mxu0 %v1414
    %v1626 = vpop.f32.mrb[0].mxu0
    %v1627 = vadd.f32 %v1554, %v1626
    %v1628 = vpop.f32.mrb[0].mxu0
    %v1629 = vadd.f32 %v1556, %v1628
    %v1630 = vpop.f32.mrb[0].mxu0
    %v1631 = vadd.f32 %v1558, %v1630
    %v1632 = vpop.f32.mrb[0].mxu0
    %v1633 = vadd.f32 %v1560, %v1632
    %1634 = vdwg.mxu0
    %1635 = vrot.lane.b32.xlu0 %v601, 1
    %v1636 = vpop.permute.xlu0 %1635
    %1637 = vrot.lane.b32.xlu0 %v603, 1
    %v1638 = vpop.permute.xlu0 %1637
    %1639 = vrot.lane.b32.xlu0 %v605, 1
    %v1640 = vpop.permute.xlu0 %1639
    %1641 = vrot.lane.b32.xlu0 %v607, 1
    %v1642 = vpop.permute.xlu0 %1641
    %1643 = vrot.lane.b32.xlu0 %v609, 1
    %v1644 = vpop.permute.xlu0 %1643
    %1645 = vrot.lane.b32.xlu0 %v611, 1
    %v1646 = vpop.permute.xlu0 %1645
    %1647 = vrot.lane.b32.xlu0 %v613, 1
    %v1648 = vpop.permute.xlu0 %1647
    %1649 = vrot.lane.b32.xlu0 %v615, 1
    %v1650 = vpop.permute.xlu0 %1649
    %1651 = vrot.lane.b32.xlu0 %v602, 1
    %v1652 = vpop.permute.xlu0 %1651
    %1653 = vrot.lane.b32.xlu0 %v604, 1
    %v1654 = vpop.permute.xlu0 %1653
    %1655 = vrot.lane.b32.xlu0 %v606, 1
    %v1656 = vpop.permute.xlu0 %1655
    %1657 = vrot.lane.b32.xlu0 %v608, 1
    %v1658 = vpop.permute.xlu0 %1657
    %1659 = vrot.lane.b32.xlu0 %v610, 1
    %v1660 = vpop.permute.xlu0 %1659
    %1661 = vrot.lane.b32.xlu0 %v612, 1
    %v1662 = vpop.permute.xlu0 %1661
    %1663 = vrot.lane.b32.xlu0 %v614, 1
    %v1664 = vpop.permute.xlu0 %1663
    %1665 = vrot.lane.b32.xlu0 %v616, 1
    %v1666 = vpop.permute.xlu0 %1665
    %v1667 = vsel %vm653, %v1636, %v1652
    %v1668 = vsel %vm653, %v1638, %v1654
    %v1669 = vsel %vm653, %v1640, %v1656
    %v1670 = vsel %vm653, %v1642, %v1658
    %v1671 = vsel %vm653, %v1644, %v1660
    %v1672 = vsel %vm653, %v1646, %v1662
    %v1673 = vsel %vm653, %v1648, %v1664
    %v1674 = vsel %vm653, %v1650, %v1666
    %v1675 = vsel %vm653, %v1652, %v1636
    %v1676 = vsel %vm653, %v1654, %v1638
    %v1677 = vsel %vm653, %v1656, %v1640
    %v1678 = vsel %vm653, %v1658, %v1642
    %v1679 = vsel %vm653, %v1660, %v1644
    %v1680 = vsel %vm653, %v1662, %v1646
    %v1681 = vsel %vm653, %v1664, %v1648
    %v1682 = vsel %vm653, %v1666, %v1650
    %v1683 = vsel %vm672, %v1675, 0.0
    %v1684 = vsel %vm673, %v1667, 0.0
    %v1685 = vsel %vm672, %v1676, 0.0
    %v1686 = vsel %vm673, %v1668, 0.0
    %v1687 = vsel %vm672, %v1677, 0.0
    %v1688 = vsel %vm673, %v1669, 0.0
    %v1689 = vsel %vm672, %v1678, 0.0
    %v1690 = vsel %vm673, %v1670, 0.0
    %v1691 = vsel %vm672, %v1679, 0.0
    %v1692 = vsel %vm673, %v1671, 0.0
    %v1693 = vsel %vm672, %v1680, 0.0
    %v1694 = vsel %vm673, %v1672, 0.0
    %v1695 = vsel %vm672, %v1681, 0.0
    %v1696 = vsel %vm673, %v1673, 0.0
    %v1697 = vsel %vm672, %v1682, 0.0
    %v1698 = vsel %vm673, %v1674, 0.0
    %v1699 = vpack.c.bf16 %v1685, %v1683
    %v1700 = vpack.c.bf16 %v1686, %v1684
    %v1701 = vpack.c.bf16 %v1689, %v1687
    %v1702 = vpack.c.bf16 %v1690, %v1688
    %v1703 = vpack.c.bf16 %v1693, %v1691
    %v1704 = vpack.c.bf16 %v1694, %v1692
    %v1705 = vpack.c.bf16 %v1697, %v1695
    %v1706 = vpack.c.bf16 %v1698, %v1696
    %1707 = vst [vmem:[#allocation2] sm:$0xff] %v1699
    %1708 = vst [vmem:[#allocation2 + $0x8] sm:$0xff] %v1700
    %1709 = vst [vmem:[#allocation2 + $0x10] sm:$0xff] %v1701
    %1710 = vst [vmem:[#allocation2 + $0x18] sm:$0xff] %v1702
    %1711 = vst [vmem:[#allocation2 + $0x20] sm:$0xff] %v1703
    %1712 = vst [vmem:[#allocation2 + $0x28] sm:$0xff] %v1704
    %1713 = vst [vmem:[#allocation2 + $0x30] sm:$0xff] %v1705
    %1714 = vst [vmem:[#allocation2 + $0x38] sm:$0xff] %v1706
    %v1715 = vpack.c.bf16 %v603, %v601
    %v1716 = vpack.c.bf16 %v604, %v602
    %v1717 = vpack.c.bf16 %v607, %v605
    %v1718 = vpack.c.bf16 %v608, %v606
    %v1719 = vpack.c.bf16 %v611, %v609
    %v1720 = vpack.c.bf16 %v612, %v610
    %v1721 = vpack.c.bf16 %v615, %v613
    %v1722 = vpack.c.bf16 %v616, %v614
    %1723 = vst [vmem:[#allocation2 + $0x40] sm:$0xff] %v1715
    %1724 = vst [vmem:[#allocation2 + $0x48] sm:$0xff] %v1716
    %1725 = vst [vmem:[#allocation2 + $0x50] sm:$0xff] %v1717
    %1726 = vst [vmem:[#allocation2 + $0x58] sm:$0xff] %v1718
    %1727 = vst [vmem:[#allocation2 + $0x60] sm:$0xff] %v1719
    %1728 = vst [vmem:[#allocation2 + $0x68] sm:$0xff] %v1720
    %1729 = vst [vmem:[#allocation2 + $0x70] sm:$0xff] %v1721
    %1730 = vst [vmem:[#allocation2 + $0x78] sm:$0xff] %v1722
    %1731 = vrot.lane.b32.xlu0 %v601, 127
    %v1732 = vpop.permute.xlu0 %1731
    %1733 = vrot.lane.b32.xlu0 %v603, 127
    %v1734 = vpop.permute.xlu0 %1733
    %1735 = vrot.lane.b32.xlu0 %v605, 127
    %v1736 = vpop.permute.xlu0 %1735
    %1737 = vrot.lane.b32.xlu0 %v607, 127
    %v1738 = vpop.permute.xlu0 %1737
    %1739 = vrot.lane.b32.xlu0 %v609, 127
    %v1740 = vpop.permute.xlu0 %1739
    %1741 = vrot.lane.b32.xlu0 %v611, 127
    %v1742 = vpop.permute.xlu0 %1741
    %1743 = vrot.lane.b32.xlu0 %v613, 127
    %v1744 = vpop.permute.xlu0 %1743
    %1745 = vrot.lane.b32.xlu0 %v615, 127
    %v1746 = vpop.permute.xlu0 %1745
    %1747 = vrot.lane.b32.xlu0 %v602, 127
    %v1748 = vpop.permute.xlu0 %1747
    %1749 = vrot.lane.b32.xlu0 %v604, 127
    %v1750 = vpop.permute.xlu0 %1749
    %1751 = vrot.lane.b32.xlu0 %v606, 127
    %v1752 = vpop.permute.xlu0 %1751
    %1753 = vrot.lane.b32.xlu0 %v608, 127
    %v1754 = vpop.permute.xlu0 %1753
    %1755 = vrot.lane.b32.xlu0 %v610, 127
    %v1756 = vpop.permute.xlu0 %1755
    %1757 = vrot.lane.b32.xlu0 %v612, 127
    %v1758 = vpop.permute.xlu0 %1757
    %1759 = vrot.lane.b32.xlu0 %v614, 127
    %v1760 = vpop.permute.xlu0 %1759
    %1761 = vrot.lane.b32.xlu0 %v616, 127
    %v1762 = vpop.permute.xlu0 %1761
    %v1763 = vsel %vm754, %v1732, %v1748
    %v1764 = vsel %vm754, %v1734, %v1750
    %v1765 = vsel %vm754, %v1736, %v1752
    %v1766 = vsel %vm754, %v1738, %v1754
    %v1767 = vsel %vm754, %v1740, %v1756
    %v1768 = vsel %vm754, %v1742, %v1758
    %v1769 = vsel %vm754, %v1744, %v1760
    %v1770 = vsel %vm754, %v1746, %v1762
    %v1771 = vsel %vm754, %v1748, %v1732
    %v1772 = vsel %vm754, %v1750, %v1734
    %v1773 = vsel %vm754, %v1752, %v1736
    %v1774 = vsel %vm754, %v1754, %v1738
    %v1775 = vsel %vm754, %v1756, %v1740
    %v1776 = vsel %vm754, %v1758, %v1742
    %v1777 = vsel %vm754, %v1760, %v1744
    %v1778 = vsel %vm754, %v1762, %v1746
    %v1779 = vsel %vm773, %v1763, 0.0
    %v1780 = vsel %vm774, %v1771, 0.0
    %v1781 = vsel %vm773, %v1764, 0.0
    %v1782 = vsel %vm774, %v1772, 0.0
    %v1783 = vsel %vm773, %v1765, 0.0
    %v1784 = vsel %vm774, %v1773, 0.0
    %v1785 = vsel %vm773, %v1766, 0.0
    %v1786 = vsel %vm774, %v1774, 0.0
    %v1787 = vsel %vm773, %v1767, 0.0
    %v1788 = vsel %vm774, %v1775, 0.0
    %v1789 = vsel %vm773, %v1768, 0.0
    %v1790 = vsel %vm774, %v1776, 0.0
    %v1791 = vsel %vm773, %v1769, 0.0
    %v1792 = vsel %vm774, %v1777, 0.0
    %v1793 = vsel %vm773, %v1770, 0.0
    %v1794 = vsel %vm774, %v1778, 0.0
    %v1795 = vpack.c.bf16 %v1781, %v1779
    %v1796 = vpack.c.bf16 %v1782, %v1780
    %v1797 = vpack.c.bf16 %v1785, %v1783
    %v1798 = vpack.c.bf16 %v1786, %v1784
    %v1799 = vpack.c.bf16 %v1789, %v1787
    %v1800 = vpack.c.bf16 %v1790, %v1788
    %v1801 = vpack.c.bf16 %v1793, %v1791
    %v1802 = vpack.c.bf16 %v1794, %v1792
    %1803 = vst [vmem:[#allocation2 + $0x80] sm:$0xff] %v1795
    %1804 = vst [vmem:[#allocation2 + $0x88] sm:$0xff] %v1796
    %1805 = vst [vmem:[#allocation2 + $0x90] sm:$0xff] %v1797
    %1806 = vst [vmem:[#allocation2 + $0x98] sm:$0xff] %v1798
    %1807 = vst [vmem:[#allocation2 + $0xa0] sm:$0xff] %v1799
    %1808 = vst [vmem:[#allocation2 + $0xa8] sm:$0xff] %v1800
    %1809 = vst [vmem:[#allocation2 + $0xb0] sm:$0xff] %v1801
    %1810 = vst [vmem:[#allocation2 + $0xb8] sm:$0xff] %v1802
    %1811 = vrot.lane.b32.xlu0 %v99, 1
    %v1812 = vpop.permute.xlu0 %1811
    %1813 = vrot.lane.b32.xlu0 %v101, 1
    %v1814 = vpop.permute.xlu0 %1813
    %1815 = vrot.lane.b32.xlu0 %v103, 1
    %v1816 = vpop.permute.xlu0 %1815
    %1817 = vrot.lane.b32.xlu0 %v105, 1
    %v1818 = vpop.permute.xlu0 %1817
    %1819 = vrot.lane.b32.xlu0 %v107, 1
    %v1820 = vpop.permute.xlu0 %1819
    %1821 = vrot.lane.b32.xlu0 %v109, 1
    %v1822 = vpop.permute.xlu0 %1821
    %1823 = vrot.lane.b32.xlu0 %v111, 1
    %v1824 = vpop.permute.xlu0 %1823
    %1825 = vrot.lane.b32.xlu0 %v113, 1
    %v1826 = vpop.permute.xlu0 %1825
    %1827 = vrot.lane.b32.xlu0 %v100, 1
    %v1828 = vpop.permute.xlu0 %1827
    %1829 = vrot.lane.b32.xlu0 %v102, 1
    %v1830 = vpop.permute.xlu0 %1829
    %1831 = vrot.lane.b32.xlu0 %v104, 1
    %v1832 = vpop.permute.xlu0 %1831
    %1833 = vrot.lane.b32.xlu0 %v106, 1
    %v1834 = vpop.permute.xlu0 %1833
    %1835 = vrot.lane.b32.xlu0 %v108, 1
    %v1836 = vpop.permute.xlu0 %1835
    %1837 = vrot.lane.b32.xlu0 %v110, 1
    %v1838 = vpop.permute.xlu0 %1837
    %1839 = vrot.lane.b32.xlu0 %v112, 1
    %v1840 = vpop.permute.xlu0 %1839
    %1841 = vrot.lane.b32.xlu0 %v114, 1
    %v1842 = vpop.permute.xlu0 %1841
    %v1843 = vsel %vm653, %v1812, %v1828
    %v1844 = vsel %vm653, %v1814, %v1830
    %v1845 = vsel %vm653, %v1816, %v1832
    %v1846 = vsel %vm653, %v1818, %v1834
    %v1847 = vsel %vm653, %v1820, %v1836
    %v1848 = vsel %vm653, %v1822, %v1838
    %v1849 = vsel %vm653, %v1824, %v1840
    %v1850 = vsel %vm653, %v1826, %v1842
    %v1851 = vsel %vm653, %v1828, %v1812
    %v1852 = vsel %vm653, %v1830, %v1814
    %v1853 = vsel %vm653, %v1832, %v1816
    %v1854 = vsel %vm653, %v1834, %v1818
    %v1855 = vsel %vm653, %v1836, %v1820
    %v1856 = vsel %vm653, %v1838, %v1822
    %v1857 = vsel %vm653, %v1840, %v1824
    %v1858 = vsel %vm653, %v1842, %v1826
    %v1859 = vsel %vm672, %v1851, 0.0
    %v1860 = vsel %vm673, %v1843, 0.0
    %v1861 = vsel %vm672, %v1852, 0.0
    %v1862 = vsel %vm673, %v1844, 0.0
    %v1863 = vsel %vm672, %v1853, 0.0
    %v1864 = vsel %vm673, %v1845, 0.0
    %v1865 = vsel %vm672, %v1854, 0.0
    %v1866 = vsel %vm673, %v1846, 0.0
    %v1867 = vsel %vm672, %v1855, 0.0
    %v1868 = vsel %vm673, %v1847, 0.0
    %v1869 = vsel %vm672, %v1856, 0.0
    %v1870 = vsel %vm673, %v1848, 0.0
    %v1871 = vsel %vm672, %v1857, 0.0
    %v1872 = vsel %vm673, %v1849, 0.0
    %v1873 = vsel %vm672, %v1858, 0.0
    %v1874 = vsel %vm673, %v1850, 0.0
    %v1875 = vpack.c.bf16 %v1861, %v1859
    %v1876 = vpack.c.bf16 %v1862, %v1860
    %v1877 = vpack.c.bf16 %v1865, %v1863
    %v1878 = vpack.c.bf16 %v1866, %v1864
    %v1879 = vpack.c.bf16 %v1869, %v1867
    %v1880 = vpack.c.bf16 %v1870, %v1868
    %v1881 = vpack.c.bf16 %v1873, %v1871
    %v1882 = vpack.c.bf16 %v1874, %v1872
    %1883 = vst [vmem:[#allocation2 + $0xc0] sm:$0xff] %v1875
    %1884 = vst [vmem:[#allocation2 + $0xc8] sm:$0xff] %v1876
    %1885 = vst [vmem:[#allocation2 + $0xd0] sm:$0xff] %v1877
    %1886 = vst [vmem:[#allocation2 + $0xd8] sm:$0xff] %v1878
    %1887 = vst [vmem:[#allocation2 + $0xe0] sm:$0xff] %v1879
    %1888 = vst [vmem:[#allocation2 + $0xe8] sm:$0xff] %v1880
    %1889 = vst [vmem:[#allocation2 + $0xf0] sm:$0xff] %v1881
    %1890 = vst [vmem:[#allocation2 + $0xf8] sm:$0xff] %v1882
    %v1891 = vpack.c.bf16 %v101, %v99
    %v1892 = vpack.c.bf16 %v102, %v100
    %v1893 = vpack.c.bf16 %v105, %v103
    %v1894 = vpack.c.bf16 %v106, %v104
    %v1895 = vpack.c.bf16 %v109, %v107
    %v1896 = vpack.c.bf16 %v110, %v108
    %v1897 = vpack.c.bf16 %v113, %v111
    %v1898 = vpack.c.bf16 %v114, %v112
    %1899 = vst [vmem:[#allocation2 + $0x100] sm:$0xff] %v1891
    %1900 = vst [vmem:[#allocation2 + $0x108] sm:$0xff] %v1892
    %1901 = vst [vmem:[#allocation2 + $0x110] sm:$0xff] %v1893
    %1902 = vst [vmem:[#allocation2 + $0x118] sm:$0xff] %v1894
    %1903 = vst [vmem:[#allocation2 + $0x120] sm:$0xff] %v1895
    %1904 = vst [vmem:[#allocation2 + $0x128] sm:$0xff] %v1896
    %1905 = vst [vmem:[#allocation2 + $0x130] sm:$0xff] %v1897
    %1906 = vst [vmem:[#allocation2 + $0x138] sm:$0xff] %v1898
    %1907 = vrot.lane.b32.xlu0 %v99, 127
    %v1908 = vpop.permute.xlu0 %1907
    %1909 = vrot.lane.b32.xlu0 %v101, 127
    %v1910 = vpop.permute.xlu0 %1909
    %1911 = vrot.lane.b32.xlu0 %v103, 127
    %v1912 = vpop.permute.xlu0 %1911
    %1913 = vrot.lane.b32.xlu0 %v105, 127
    %v1914 = vpop.permute.xlu0 %1913
    %1915 = vrot.lane.b32.xlu0 %v107, 127
    %v1916 = vpop.permute.xlu0 %1915
    %1917 = vrot.lane.b32.xlu0 %v109, 127
    %v1918 = vpop.permute.xlu0 %1917
    %1919 = vrot.lane.b32.xlu0 %v111, 127
    %v1920 = vpop.permute.xlu0 %1919
    %1921 = vrot.lane.b32.xlu0 %v113, 127
    %v1922 = vpop.permute.xlu0 %1921
    %1923 = vrot.lane.b32.xlu0 %v100, 127
    %v1924 = vpop.permute.xlu0 %1923
    %1925 = vrot.lane.b32.xlu0 %v102, 127
    %v1926 = vpop.permute.xlu0 %1925
    %1927 = vrot.lane.b32.xlu0 %v104, 127
    %v1928 = vpop.permute.xlu0 %1927
    %1929 = vrot.lane.b32.xlu0 %v106, 127
    %v1930 = vpop.permute.xlu0 %1929
    %1931 = vrot.lane.b32.xlu0 %v108, 127
    %v1932 = vpop.permute.xlu0 %1931
    %1933 = vrot.lane.b32.xlu0 %v110, 127
    %v1934 = vpop.permute.xlu0 %1933
    %1935 = vrot.lane.b32.xlu0 %v112, 127
    %v1936 = vpop.permute.xlu0 %1935
    %1937 = vrot.lane.b32.xlu0 %v114, 127
    %v1938 = vpop.permute.xlu0 %1937
    %v1939 = vsel %vm754, %v1908, %v1924
    %v1940 = vsel %vm754, %v1910, %v1926
    %v1941 = vsel %vm754, %v1912, %v1928
    %v1942 = vsel %vm754, %v1914, %v1930
    %v1943 = vsel %vm754, %v1916, %v1932
    %v1944 = vsel %vm754, %v1918, %v1934
    %v1945 = vsel %vm754, %v1920, %v1936
    %v1946 = vsel %vm754, %v1922, %v1938
    %v1947 = vsel %vm754, %v1924, %v1908
    %v1948 = vsel %vm754, %v1926, %v1910
    %v1949 = vsel %vm754, %v1928, %v1912
    %v1950 = vsel %vm754, %v1930, %v1914
    %v1951 = vsel %vm754, %v1932, %v1916
    %v1952 = vsel %vm754, %v1934, %v1918
    %v1953 = vsel %vm754, %v1936, %v1920
    %v1954 = vsel %vm754, %v1938, %v1922
    %v1955 = vsel %vm773, %v1939, 0.0
    %v1956 = vsel %vm774, %v1947, 0.0
    %v1957 = vsel %vm773, %v1940, 0.0
    %v1958 = vsel %vm774, %v1948, 0.0
    %v1959 = vsel %vm773, %v1941, 0.0
    %v1960 = vsel %vm774, %v1949, 0.0
    %v1961 = vsel %vm773, %v1942, 0.0
    %v1962 = vsel %vm774, %v1950, 0.0
    %v1963 = vsel %vm773, %v1943, 0.0
    %v1964 = vsel %vm774, %v1951, 0.0
    %v1965 = vsel %vm773, %v1944, 0.0
    %v1966 = vsel %vm774, %v1952, 0.0
    %v1967 = vsel %vm773, %v1945, 0.0
    %v1968 = vsel %vm774, %v1953, 0.0
    %v1969 = vsel %vm773, %v1946, 0.0
    %v1970 = vsel %vm774, %v1954, 0.0
    %v1971 = vpack.c.bf16 %v1957, %v1955
    %v1972 = vpack.c.bf16 %v1958, %v1956
    %v1973 = vpack.c.bf16 %v1961, %v1959
    %v1974 = vpack.c.bf16 %v1962, %v1960
    %v1975 = vpack.c.bf16 %v1965, %v1963
    %v1976 = vpack.c.bf16 %v1966, %v1964
    %v1977 = vpack.c.bf16 %v1969, %v1967
    %v1978 = vpack.c.bf16 %v1970, %v1968
    %1979 = vst [vmem:[#allocation2 + $0x140] sm:$0xff] %v1971
    %1980 = vst [vmem:[#allocation2 + $0x148] sm:$0xff] %v1972
    %1981 = vst [vmem:[#allocation2 + $0x150] sm:$0xff] %v1973
    %1982 = vst [vmem:[#allocation2 + $0x158] sm:$0xff] %v1974
    %1983 = vst [vmem:[#allocation2 + $0x160] sm:$0xff] %v1975
    %1984 = vst [vmem:[#allocation2 + $0x168] sm:$0xff] %v1976
    %1985 = vst [vmem:[#allocation2 + $0x170] sm:$0xff] %v1977
    %1986 = vst [vmem:[#allocation2 + $0x178] sm:$0xff] %v1978
    %1987 = vrot.lane.b32.xlu0 %v456, 1
    %v1988 = vpop.permute.xlu0 %1987
    %1989 = vrot.lane.b32.xlu0 %v458, 1
    %v1990 = vpop.permute.xlu0 %1989
    %1991 = vrot.lane.b32.xlu0 %v460, 1
    %v1992 = vpop.permute.xlu0 %1991
    %1993 = vrot.lane.b32.xlu0 %v462, 1
    %v1994 = vpop.permute.xlu0 %1993
    %1995 = vrot.lane.b32.xlu0 %v464, 1
    %v1996 = vpop.permute.xlu0 %1995
    %1997 = vrot.lane.b32.xlu0 %v466, 1
    %v1998 = vpop.permute.xlu0 %1997
    %1999 = vrot.lane.b32.xlu0 %v468, 1
    %v2000 = vpop.permute.xlu0 %1999
    %2001 = vrot.lane.b32.xlu0 %v470, 1
    %v2002 = vpop.permute.xlu0 %2001
    %2003 = vrot.lane.b32.xlu0 %v457, 1
    %v2004 = vpop.permute.xlu0 %2003
    %2005 = vrot.lane.b32.xlu0 %v459, 1
    %v2006 = vpop.permute.xlu0 %2005
    %2007 = vrot.lane.b32.xlu0 %v461, 1
    %v2008 = vpop.permute.xlu0 %2007
    %2009 = vrot.lane.b32.xlu0 %v463, 1
    %v2010 = vpop.permute.xlu0 %2009
    %2011 = vrot.lane.b32.xlu0 %v465, 1
    %v2012 = vpop.permute.xlu0 %2011
    %2013 = vrot.lane.b32.xlu0 %v467, 1
    %v2014 = vpop.permute.xlu0 %2013
    %2015 = vrot.lane.b32.xlu0 %v469, 1
    %v2016 = vpop.permute.xlu0 %2015
    %2017 = vrot.lane.b32.xlu0 %v471, 1
    %v2018 = vpop.permute.xlu0 %2017
    %v2019 = vsel %vm653, %v1988, %v2004
    %v2020 = vsel %vm653, %v1990, %v2006
    %v2021 = vsel %vm653, %v1992, %v2008
    %v2022 = vsel %vm653, %v1994, %v2010
    %v2023 = vsel %vm653, %v1996, %v2012
    %v2024 = vsel %vm653, %v1998, %v2014
    %v2025 = vsel %vm653, %v2000, %v2016
    %v2026 = vsel %vm653, %v2002, %v2018
    %v2027 = vsel %vm653, %v2004, %v1988
    %v2028 = vsel %vm653, %v2006, %v1990
    %v2029 = vsel %vm653, %v2008, %v1992
    %v2030 = vsel %vm653, %v2010, %v1994
    %v2031 = vsel %vm653, %v2012, %v1996
    %v2032 = vsel %vm653, %v2014, %v1998
    %v2033 = vsel %vm653, %v2016, %v2000
    %v2034 = vsel %vm653, %v2018, %v2002
    %v2035 = vsel %vm672, %v2027, 0.0
    %v2036 = vsel %vm673, %v2019, 0.0
    %v2037 = vsel %vm672, %v2028, 0.0
    %v2038 = vsel %vm673, %v2020, 0.0
    %v2039 = vsel %vm672, %v2029, 0.0
    %v2040 = vsel %vm673, %v2021, 0.0
    %v2041 = vsel %vm672, %v2030, 0.0
    %v2042 = vsel %vm673, %v2022, 0.0
    %v2043 = vsel %vm672, %v2031, 0.0
    %v2044 = vsel %vm673, %v2023, 0.0
    %v2045 = vsel %vm672, %v2032, 0.0
    %v2046 = vsel %vm673, %v2024, 0.0
    %v2047 = vsel %vm672, %v2033, 0.0
    %v2048 = vsel %vm673, %v2025, 0.0
    %v2049 = vsel %vm672, %v2034, 0.0
    %v2050 = vsel %vm673, %v2026, 0.0
    %v2051 = vpack.c.bf16 %v2037, %v2035
    %v2052 = vpack.c.bf16 %v2038, %v2036
    %v2053 = vpack.c.bf16 %v2041, %v2039
    %v2054 = vpack.c.bf16 %v2042, %v2040
    %v2055 = vpack.c.bf16 %v2045, %v2043
    %v2056 = vpack.c.bf16 %v2046, %v2044
    %v2057 = vpack.c.bf16 %v2049, %v2047
    %v2058 = vpack.c.bf16 %v2050, %v2048
    %2059 = vst [vmem:[#allocation2 + $0x180] sm:$0xff] %v2051
    %2060 = vst [vmem:[#allocation2 + $0x188] sm:$0xff] %v2052
    %2061 = vst [vmem:[#allocation2 + $0x190] sm:$0xff] %v2053
    %2062 = vst [vmem:[#allocation2 + $0x198] sm:$0xff] %v2054
    %2063 = vst [vmem:[#allocation2 + $0x1a0] sm:$0xff] %v2055
    %2064 = vst [vmem:[#allocation2 + $0x1a8] sm:$0xff] %v2056
    %2065 = vst [vmem:[#allocation2 + $0x1b0] sm:$0xff] %v2057
    %2066 = vst [vmem:[#allocation2 + $0x1b8] sm:$0xff] %v2058
    %v2067 = vpack.c.bf16 %v458, %v456
    %v2068 = vpack.c.bf16 %v459, %v457
    %v2069 = vpack.c.bf16 %v462, %v460
    %v2070 = vpack.c.bf16 %v463, %v461
    %v2071 = vpack.c.bf16 %v466, %v464
    %v2072 = vpack.c.bf16 %v467, %v465
    %v2073 = vpack.c.bf16 %v470, %v468
    %v2074 = vpack.c.bf16 %v471, %v469
    %2075 = vst [vmem:[#allocation2 + $0x1c0] sm:$0xff] %v2067
    %2076 = vst [vmem:[#allocation2 + $0x1c8] sm:$0xff] %v2068
    %2077 = vst [vmem:[#allocation2 + $0x1d0] sm:$0xff] %v2069
    %2078 = vst [vmem:[#allocation2 + $0x1d8] sm:$0xff] %v2070
    %2079 = vst [vmem:[#allocation2 + $0x1e0] sm:$0xff] %v2071
    %2080 = vst [vmem:[#allocation2 + $0x1e8] sm:$0xff] %v2072
    %2081 = vst [vmem:[#allocation2 + $0x1f0] sm:$0xff] %v2073
    %2082 = vst [vmem:[#allocation2 + $0x1f8] sm:$0xff] %v2074
    %2083 = vrot.lane.b32.xlu0 %v456, 127
    %v2084 = vpop.permute.xlu0 %2083
    %2085 = vrot.lane.b32.xlu0 %v458, 127
    %v2086 = vpop.permute.xlu0 %2085
    %2087 = vrot.lane.b32.xlu0 %v460, 127
    %v2088 = vpop.permute.xlu0 %2087
    %2089 = vrot.lane.b32.xlu0 %v462, 127
    %v2090 = vpop.permute.xlu0 %2089
    %2091 = vrot.lane.b32.xlu0 %v464, 127
    %v2092 = vpop.permute.xlu0 %2091
    %2093 = vrot.lane.b32.xlu0 %v466, 127
    %v2094 = vpop.permute.xlu0 %2093
    %2095 = vrot.lane.b32.xlu0 %v468, 127
    %v2096 = vpop.permute.xlu0 %2095
    %2097 = vrot.lane.b32.xlu0 %v470, 127
    %v2098 = vpop.permute.xlu0 %2097
    %2099 = vrot.lane.b32.xlu0 %v457, 127
    %v2100 = vpop.permute.xlu0 %2099
    %2101 = vrot.lane.b32.xlu0 %v459, 127
    %v2102 = vpop.permute.xlu0 %2101
    %2103 = vrot.lane.b32.xlu0 %v461, 127
    %v2104 = vpop.permute.xlu0 %2103
    %2105 = vrot.lane.b32.xlu0 %v463, 127
    %v2106 = vpop.permute.xlu0 %2105
    %2107 = vrot.lane.b32.xlu0 %v465, 127
    %v2108 = vpop.permute.xlu0 %2107
    %2109 = vrot.lane.b32.xlu0 %v467, 127
    %v2110 = vpop.permute.xlu0 %2109
    %2111 = vrot.lane.b32.xlu0 %v469, 127
    %v2112 = vpop.permute.xlu0 %2111
    %2113 = vrot.lane.b32.xlu0 %v471, 127
    %v2114 = vpop.permute.xlu0 %2113
    %v2115 = vsel %vm754, %v2084, %v2100
    %v2116 = vsel %vm754, %v2086, %v2102
    %v2117 = vsel %vm754, %v2088, %v2104
    %v2118 = vsel %vm754, %v2090, %v2106
    %v2119 = vsel %vm754, %v2092, %v2108
    %v2120 = vsel %vm754, %v2094, %v2110
    %v2121 = vsel %vm754, %v2096, %v2112
    %v2122 = vsel %vm754, %v2098, %v2114
    %v2123 = vsel %vm754, %v2100, %v2084
    %v2124 = vsel %vm754, %v2102, %v2086
    %v2125 = vsel %vm754, %v2104, %v2088
    %v2126 = vsel %vm754, %v2106, %v2090
    %v2127 = vsel %vm754, %v2108, %v2092
    %v2128 = vsel %vm754, %v2110, %v2094
    %v2129 = vsel %vm754, %v2112, %v2096
    %v2130 = vsel %vm754, %v2114, %v2098
    %v2131 = vsel %vm773, %v2115, 0.0
    %v2132 = vsel %vm774, %v2123, 0.0
    %v2133 = vsel %vm773, %v2116, 0.0
    %v2134 = vsel %vm774, %v2124, 0.0
    %v2135 = vsel %vm773, %v2117, 0.0
    %v2136 = vsel %vm774, %v2125, 0.0
    %v2137 = vsel %vm773, %v2118, 0.0
    %v2138 = vsel %vm774, %v2126, 0.0
    %v2139 = vsel %vm773, %v2119, 0.0
    %v2140 = vsel %vm774, %v2127, 0.0
    %v2141 = vsel %vm773, %v2120, 0.0
    %v2142 = vsel %vm774, %v2128, 0.0
    %v2143 = vsel %vm773, %v2121, 0.0
    %v2144 = vsel %vm774, %v2129, 0.0
    %v2145 = vsel %vm773, %v2122, 0.0
    %v2146 = vsel %vm774, %v2130, 0.0
    %v2147 = vpack.c.bf16 %v2133, %v2131
    %v2148 = vpack.c.bf16 %v2134, %v2132
    %v2149 = vpack.c.bf16 %v2137, %v2135
    %v2150 = vpack.c.bf16 %v2138, %v2136
    %v2151 = vpack.c.bf16 %v2141, %v2139
    %v2152 = vpack.c.bf16 %v2142, %v2140
    %v2153 = vpack.c.bf16 %v2145, %v2143
    %v2154 = vpack.c.bf16 %v2146, %v2144
    %2155 = vst [vmem:[#allocation2 + $0x200] sm:$0xff] %v2147
    %2156 = vst [vmem:[#allocation2 + $0x208] sm:$0xff] %v2148
    %2157 = vst [vmem:[#allocation2 + $0x210] sm:$0xff] %v2149
    %2158 = vst [vmem:[#allocation2 + $0x218] sm:$0xff] %v2150
    %2159 = vst [vmem:[#allocation2 + $0x220] sm:$0xff] %v2151
    %2160 = vst [vmem:[#allocation2 + $0x228] sm:$0xff] %v2152
    %2161 = vst [vmem:[#allocation2 + $0x230] sm:$0xff] %v2153
    %2162 = vst [vmem:[#allocation2 + $0x238] sm:$0xff] %v2154
    %v2163 = vld [vmem:[#allocation6] sm:$0xff]
    %v2164 = vld [vmem:[#allocation6 + $0x8] sm:$0xff]
    %v2165 = vld [vmem:[#allocation6 + $0x10] sm:$0xf]
    %v2166 = vld [vmem:[#allocation6 + $0x14] sm:$0xff]
    %v2167 = vld [vmem:[#allocation6 + $0x1c] sm:$0xff]
    %v2168 = vld [vmem:[#allocation6 + $0x24] sm:$0xf]
    %v2169 = vld [vmem:[#allocation6 + $0x28] sm:$0xff]
    %v2170 = vld [vmem:[#allocation6 + $0x30] sm:$0xff]
    %v2171 = vld [vmem:[#allocation6 + $0x38] sm:$0xf]
    %v2172 = vld [vmem:[#allocation6 + $0x3c] sm:$0xff]
    %v2173 = vld [vmem:[#allocation6 + $0x44] sm:$0xff]
    %v2174 = vld [vmem:[#allocation6 + $0x4c] sm:$0xf]
    %v2175 = vld [vmem:[#allocation6 + $0x50] sm:$0xff]
    %v2176 = vld [vmem:[#allocation6 + $0x58] sm:$0xff]
    %v2177 = vld [vmem:[#allocation6 + $0x60] sm:$0xf]
    %v2178 = vld [vmem:[#allocation6 + $0x64] sm:$0xff]
    %v2179 = vld [vmem:[#allocation6 + $0x6c] sm:$0xff]
    %v2180 = vld [vmem:[#allocation6 + $0x74] sm:$0xf]
    %v2181 = vld [vmem:[#allocation6 + $0x78] sm:$0xff]
    %v2182 = vld [vmem:[#allocation6 + $0x80] sm:$0xff]
    %v2183 = vld [vmem:[#allocation6 + $0x88] sm:$0xf]
    %v2184 = vld [vmem:[#allocation6 + $0x8c] sm:$0xff]
    %v2185 = vld [vmem:[#allocation6 + $0x94] sm:$0xff]
    %v2186 = vld [vmem:[#allocation6 + $0x9c] sm:$0xf]
    %v2187 = vld [vmem:[#allocation2] sm:$0xff]
    %v2188 = vld [vmem:[#allocation2 + $0x8] sm:$0xff]
    %v2189 = vld [vmem:[#allocation2 + $0x10] sm:$0xff]
    %v2190 = vld [vmem:[#allocation2 + $0x18] sm:$0xff]
    %v2191 = vld [vmem:[#allocation2 + $0x20] sm:$0xff]
    %v2192 = vld [vmem:[#allocation2 + $0x28] sm:$0xff]
    %v2193 = vld [vmem:[#allocation2 + $0x30] sm:$0xff]
    %v2194 = vld [vmem:[#allocation2 + $0x38] sm:$0xff]
    %v2195 = vld [vmem:[#allocation2 + $0x40] sm:$0xff]
    %v2196 = vld [vmem:[#allocation2 + $0x48] sm:$0xff]
    %v2197 = vld [vmem:[#allocation2 + $0x50] sm:$0xff]
    %v2198 = vld [vmem:[#allocation2 + $0x58] sm:$0xff]
    %v2199 = vld [vmem:[#allocation2 + $0x60] sm:$0xff]
    %v2200 = vld [vmem:[#allocation2 + $0x68] sm:$0xff]
    %v2201 = vld [vmem:[#allocation2 + $0x70] sm:$0xff]
    %v2202 = vld [vmem:[#allocation2 + $0x78] sm:$0xff]
    %v2203 = vld [vmem:[#allocation2 + $0x80] sm:$0xff]
    %v2204 = vld [vmem:[#allocation2 + $0x88] sm:$0xff]
    %v2205 = vld [vmem:[#allocation2 + $0x90] sm:$0xff]
    %v2206 = vld [vmem:[#allocation2 + $0x98] sm:$0xff]
    %v2207 = vld [vmem:[#allocation2 + $0xa0] sm:$0xff]
    %v2208 = vld [vmem:[#allocation2 + $0xa8] sm:$0xff]
    %v2209 = vld [vmem:[#allocation2 + $0xb0] sm:$0xff]
    %v2210 = vld [vmem:[#allocation2 + $0xb8] sm:$0xff]
    %v2211 = vld [vmem:[#allocation2 + $0xc0] sm:$0xff]
    %v2212 = vld [vmem:[#allocation2 + $0xc8] sm:$0xff]
    %v2213 = vld [vmem:[#allocation2 + $0xd0] sm:$0xff]
    %v2214 = vld [vmem:[#allocation2 + $0xd8] sm:$0xff]
    %v2215 = vld [vmem:[#allocation2 + $0xe0] sm:$0xff]
    %v2216 = vld [vmem:[#allocation2 + $0xe8] sm:$0xff]
    %v2217 = vld [vmem:[#allocation2 + $0xf0] sm:$0xff]
    %v2218 = vld [vmem:[#allocation2 + $0xf8] sm:$0xff]
    %v2219 = vld [vmem:[#allocation2 + $0x100] sm:$0xff]
    %v2220 = vld [vmem:[#allocation2 + $0x108] sm:$0xff]
    %v2221 = vld [vmem:[#allocation2 + $0x110] sm:$0xff]
    %v2222 = vld [vmem:[#allocation2 + $0x118] sm:$0xff]
    %v2223 = vld [vmem:[#allocation2 + $0x120] sm:$0xff]
    %v2224 = vld [vmem:[#allocation2 + $0x128] sm:$0xff]
    %v2225 = vld [vmem:[#allocation2 + $0x130] sm:$0xff]
    %v2226 = vld [vmem:[#allocation2 + $0x138] sm:$0xff]
    %v2227 = vld [vmem:[#allocation2 + $0x140] sm:$0xff]
    %v2228 = vld [vmem:[#allocation2 + $0x148] sm:$0xff]
    %v2229 = vld [vmem:[#allocation2 + $0x150] sm:$0xff]
    %v2230 = vld [vmem:[#allocation2 + $0x158] sm:$0xff]
    %v2231 = vld [vmem:[#allocation2 + $0x160] sm:$0xff]
    %v2232 = vld [vmem:[#allocation2 + $0x168] sm:$0xff]
    %v2233 = vld [vmem:[#allocation2 + $0x170] sm:$0xff]
    %v2234 = vld [vmem:[#allocation2 + $0x178] sm:$0xff]
    %v2235 = vld [vmem:[#allocation2 + $0x180] sm:$0xff]
    %v2236 = vld [vmem:[#allocation2 + $0x188] sm:$0xff]
    %v2237 = vld [vmem:[#allocation2 + $0x190] sm:$0xff]
    %v2238 = vld [vmem:[#allocation2 + $0x198] sm:$0xff]
    %v2239 = vld [vmem:[#allocation2 + $0x1a0] sm:$0xff]
    %v2240 = vld [vmem:[#allocation2 + $0x1a8] sm:$0xff]
    %v2241 = vld [vmem:[#allocation2 + $0x1b0] sm:$0xff]
    %v2242 = vld [vmem:[#allocation2 + $0x1b8] sm:$0xff]
    %v2243 = vld [vmem:[#allocation2 + $0x1c0] sm:$0xff]
    %v2244 = vld [vmem:[#allocation2 + $0x1c8] sm:$0xff]
    %v2245 = vld [vmem:[#allocation2 + $0x1d0] sm:$0xff]
    %v2246 = vld [vmem:[#allocation2 + $0x1d8] sm:$0xff]
    %v2247 = vld [vmem:[#allocation2 + $0x1e0] sm:$0xff]
    %v2248 = vld [vmem:[#allocation2 + $0x1e8] sm:$0xff]
    %v2249 = vld [vmem:[#allocation2 + $0x1f0] sm:$0xff]
    %v2250 = vld [vmem:[#allocation2 + $0x1f8] sm:$0xff]
    %v2251 = vld [vmem:[#allocation2 + $0x200] sm:$0xff]
    %v2252 = vld [vmem:[#allocation2 + $0x208] sm:$0xff]
    %v2253 = vld [vmem:[#allocation2 + $0x210] sm:$0xff]
    %v2254 = vld [vmem:[#allocation2 + $0x218] sm:$0xff]
    %v2255 = vld [vmem:[#allocation2 + $0x220] sm:$0xff]
    %v2256 = vld [vmem:[#allocation2 + $0x228] sm:$0xff]
    %v2257 = vld [vmem:[#allocation2 + $0x230] sm:$0xff]
    %v2258 = vld [vmem:[#allocation2 + $0x238] sm:$0xff]
    %v2259 = vld [vmem:[%s2] sm:$0xff]
    %v2260 = vld [vmem:[%s2 + $0x8] sm:$0xff]
    %v2261 = vld [vmem:[%s2 + $0x10] sm:$0xff]
    %v2262 = vld [vmem:[%s2 + $0x18] sm:$0xff]
    %v2263 = vld [vmem:[%s2 + $0x20] sm:$0xff]
    %v2264 = vld [vmem:[%s2 + $0x28] sm:$0xff]
    %v2265 = vld [vmem:[%s2 + $0x30] sm:$0xff]
    %v2266 = vld [vmem:[%s2 + $0x38] sm:$0xff]
    %2268 = vset.pattern.permute.xlu0 0
    %2269 = vperm.xlu0 %2268, %v2259
    %v2270 = vpop.permute.xlu0 %2269
    %2273 = vset.pattern.permute.xlu0 0
    %2274 = vperm.xlu0 %2273, %v2260
    %v2275 = vpop.permute.xlu0 %2274
    %2278 = vset.pattern.permute.xlu0 0
    %2279 = vperm.xlu0 %2278, %v2261
    %v2280 = vpop.permute.xlu0 %2279
    %2283 = vset.pattern.permute.xlu0 0
    %2284 = vperm.xlu0 %2283, %v2262
    %v2285 = vpop.permute.xlu0 %2284
    %2288 = vset.pattern.permute.xlu0 0
    %2289 = vperm.xlu0 %2288, %v2263
    %v2290 = vpop.permute.xlu0 %2289
    %2293 = vset.pattern.permute.xlu0 0
    %2294 = vperm.xlu0 %2293, %v2264
    %v2295 = vpop.permute.xlu0 %2294
    %2298 = vset.pattern.permute.xlu0 0
    %2299 = vperm.xlu0 %2298, %v2265
    %v2300 = vpop.permute.xlu0 %2299
    %2303 = vset.pattern.permute.xlu0 0
    %2304 = vperm.xlu0 %2303, %v2266
    %v2305 = vpop.permute.xlu0 %2304
    %v2331 = vunpack.c.l.b16 %v2163
    %v2332 = vunpack.c.h.b16 %v2163
    %v2333 = vunpack.c.l.b16 %v2164
    %v2334 = vunpack.c.h.b16 %v2164
    %v2335 = vunpack.c.l.b16 %v2165
    %v2336 = vunpack.c.l.b16 %v2166
    %v2337 = vunpack.c.h.b16 %v2166
    %v2338 = vunpack.c.l.b16 %v2167
    %v2339 = vunpack.c.h.b16 %v2167
    %v2340 = vunpack.c.l.b16 %v2168
    %v2341 = vunpack.c.l.b16 %v2169
    %v2342 = vunpack.c.h.b16 %v2169
    %v2343 = vunpack.c.l.b16 %v2170
    %v2344 = vunpack.c.h.b16 %v2170
    %v2345 = vunpack.c.l.b16 %v2171
    %v2346 = vunpack.c.l.b16 %v2172
    %v2347 = vunpack.c.h.b16 %v2172
    %v2348 = vunpack.c.l.b16 %v2173
    %v2349 = vunpack.c.h.b16 %v2173
    %v2350 = vunpack.c.l.b16 %v2174
    %v2351 = vunpack.c.l.b16 %v2175
    %v2352 = vunpack.c.h.b16 %v2175
    %v2353 = vunpack.c.l.b16 %v2176
    %v2354 = vunpack.c.h.b16 %v2176
    %v2355 = vunpack.c.l.b16 %v2177
    %v2356 = vunpack.c.l.b16 %v2178
    %v2357 = vunpack.c.h.b16 %v2178
    %v2358 = vunpack.c.l.b16 %v2179
    %v2359 = vunpack.c.h.b16 %v2179
    %v2360 = vunpack.c.l.b16 %v2180
    %v2361 = vunpack.c.l.b16 %v2181
    %v2362 = vunpack.c.h.b16 %v2181
    %v2363 = vunpack.c.l.b16 %v2182
    %v2364 = vunpack.c.h.b16 %v2182
    %v2365 = vunpack.c.l.b16 %v2183
    %v2366 = vunpack.c.l.b16 %v2184
    %v2367 = vunpack.c.h.b16 %v2184
    %v2368 = vunpack.c.l.b16 %v2185
    %v2369 = vunpack.c.h.b16 %v2185
    %v2370 = vunpack.c.l.b16 %v2186
    %v2371 = vpack.c.b16 %v2336, %v2331
    %v2372 = vpack.c.b16 %v2337, %v2332
    %v2373 = vpack.c.b16 %v2338, %v2333
    %v2374 = vpack.c.b16 %v2339, %v2334
    %v2375 = vpack.c.b16 %v2340, %v2335
    %v2376 = vpack.c.b16 %v2346, %v2341
    %v2377 = vpack.c.b16 %v2347, %v2342
    %v2378 = vpack.c.b16 %v2348, %v2343
    %v2379 = vpack.c.b16 %v2349, %v2344
    %v2380 = vpack.c.b16 %v2350, %v2345
    %v2381 = vpack.c.b16 %v2356, %v2351
    %v2382 = vpack.c.b16 %v2357, %v2352
    %v2383 = vpack.c.b16 %v2358, %v2353
    %v2384 = vpack.c.b16 %v2359, %v2354
    %v2385 = vpack.c.b16 %v2360, %v2355
    %v2386 = vpack.c.b16 %v2366, %v2361
    %v2387 = vpack.c.b16 %v2367, %v2362
    %v2388 = vpack.c.b16 %v2368, %v2363
    %v2389 = vpack.c.b16 %v2369, %v2364
    %v2390 = vpack.c.b16 %v2370, %v2365
    %v2408 = vsel %vm1403, %v2375, 0
    %v2411 = vsel %vm1403, %v2380, 0
    %v2414 = vsel %vm1403, %v2385, 0
    %v2417 = vsel %vm1403, %v2390, 0
    %2419 = vmatprep.subr.bf16.mxu0 %v2188
    %2420 = vmatpush1.bf16.msra.mxu0 %v2187
    %2421 = vmatprep.subr.bf16.mxu0 %v2190
    %2422 = vmatpush1.bf16.msra.mxu0 %v2189
    %2423 = vmatprep.subr.bf16.mxu0 %v2192
    %2424 = vmatpush1.bf16.msra.mxu0 %v2191
    %2425 = vmatprep.subr.bf16.mxu0 %v2194
    %2426 = vmatpush1.bf16.msra.mxu0 %v2193
    %2427 = vmatprep.subr.bf16.mxu0 %v2196
    %2428 = vmatpush1.bf16.msra.mxu0 %v2195
    %2429 = vmatprep.subr.bf16.mxu0 %v2198
    %2430 = vmatpush1.bf16.msra.mxu0 %v2197
    %2431 = vmatprep.subr.bf16.mxu0 %v2200
    %2432 = vmatpush1.bf16.msra.mxu0 %v2199
    %2433 = vmatprep.subr.bf16.mxu0 %v2202
    %2434 = vmatpush1.bf16.msra.mxu0 %v2201
    %2435 = vmatprep.subr.bf16.mxu0 %v2204
    %2436 = vmatpush1.bf16.msra.mxu0 %v2203
    %2437 = vmatprep.subr.bf16.mxu0 %v2206
    %2438 = vmatpush1.bf16.msra.mxu0 %v2205
    %2439 = vmatprep.subr.bf16.mxu0 %v2208
    %2440 = vmatpush1.bf16.msra.mxu0 %v2207
    %2441 = vmatprep.subr.bf16.mxu0 %v2210
    %2442 = vmatpush1.bf16.msra.mxu0 %v2209
    %2443 = vmatprep.subr.bf16.mxu0 %v2212
    %2444 = vmatpush1.bf16.msra.mxu0 %v2211
    %2445 = vmatprep.subr.bf16.mxu0 %v2214
    %2446 = vmatpush1.bf16.msra.mxu0 %v2213
    %2447 = vmatprep.subr.bf16.mxu0 %v2216
    %2448 = vmatpush1.bf16.msra.mxu0 %v2215
    %2449 = vmatprep.subr.bf16.mxu0 %v2218
    %2450 = vmatpush1.bf16.msra.mxu0 %v2217
    %2451 = vmatprep.mubr.bf16.mxu0 %v2372
    %2452 = vmatmul.mubr.bf16.gmra.mrb[0].mxu0 %v2371
    %v2453 = vpop.f32.mrb[0].mxu0
    %v2454 = vadd.f32 %v2270, %v2453
    %v2455 = vpop.f32.mrb[0].mxu0
    %v2456 = vadd.f32 %v2270, %v2455
    %v2457 = vpop.f32.mrb[0].mxu0
    %v2458 = vadd.f32 %v2275, %v2457
    %v2459 = vpop.f32.mrb[0].mxu0
    %v2460 = vadd.f32 %v2275, %v2459
    %2461 = vmatprep.mubr.bf16.mxu0 %v2377
    %2462 = vmatmul.mubr.bf16.gmra.mrb[0].mxu0 %v2376
    %v2463 = vpop.f32.mrb[0].mxu0
    %v2464 = vadd.f32 %v2280, %v2463
    %v2465 = vpop.f32.mrb[0].mxu0
    %v2466 = vadd.f32 %v2280, %v2465
    %v2467 = vpop.f32.mrb[0].mxu0
    %v2468 = vadd.f32 %v2285, %v2467
    %v2469 = vpop.f32.mrb[0].mxu0
    %v2470 = vadd.f32 %v2285, %v2469
    %2471 = vmatprep.mubr.bf16.mxu0 %v2382
    %2472 = vmatmul.mubr.bf16.gmra.mrb[0].mxu0 %v2381
    %v2473 = vpop.f32.mrb[0].mxu0
    %v2474 = vadd.f32 %v2290, %v2473
    %v2475 = vpop.f32.mrb[0].mxu0
    %v2476 = vadd.f32 %v2290, %v2475
    %v2477 = vpop.f32.mrb[0].mxu0
    %v2478 = vadd.f32 %v2295, %v2477
    %v2479 = vpop.f32.mrb[0].mxu0
    %v2480 = vadd.f32 %v2295, %v2479
    %2481 = vmatprep.mubr.bf16.mxu0 %v2387
    %2482 = vmatmul.mubr.bf16.gmra.mrb[0].mxu0 %v2386
    %v2483 = vpop.f32.mrb[0].mxu0
    %v2484 = vadd.f32 %v2300, %v2483
    %v2485 = vpop.f32.mrb[0].mxu0
    %v2486 = vadd.f32 %v2300, %v2485
    %v2487 = vpop.f32.mrb[0].mxu0
    %v2488 = vadd.f32 %v2305, %v2487
    %v2489 = vpop.f32.mrb[0].mxu0
    %v2490 = vadd.f32 %v2305, %v2489
    %2491 = vdwg.mxu0
    %2492 = vmatprep.subr.bf16.mxu0 %v2220
    %2493 = vmatpush1.bf16.msra.mxu0 %v2219
    %2494 = vmatprep.subr.bf16.mxu0 %v2222
    %2495 = vmatpush1.bf16.msra.mxu0 %v2221
    %2496 = vmatprep.subr.bf16.mxu0 %v2224
    %2497 = vmatpush1.bf16.msra.mxu0 %v2223
    %2498 = vmatprep.subr.bf16.mxu0 %v2226
    %2499 = vmatpush1.bf16.msra.mxu0 %v2225
    %2500 = vmatprep.subr.bf16.mxu0 %v2228
    %2501 = vmatpush1.bf16.msra.mxu0 %v2227
    %2502 = vmatprep.subr.bf16.mxu0 %v2230
    %2503 = vmatpush1.bf16.msra.mxu0 %v2229
    %2504 = vmatprep.subr.bf16.mxu0 %v2232
    %2505 = vmatpush1.bf16.msra.mxu0 %v2231
    %2506 = vmatprep.subr.bf16.mxu0 %v2234
    %2507 = vmatpush1.bf16.msra.mxu0 %v2233
    %2508 = vmatprep.subr.bf16.mxu0 %v2236
    %2509 = vmatpush1.bf16.msra.mxu0 %v2235
    %2510 = vmatprep.subr.bf16.mxu0 %v2238
    %2511 = vmatpush1.bf16.msra.mxu0 %v2237
    %2512 = vmatprep.subr.bf16.mxu0 %v2240
    %2513 = vmatpush1.bf16.msra.mxu0 %v2239
    %2514 = vmatprep.subr.bf16.mxu0 %v2242
    %2515 = vmatpush1.bf16.msra.mxu0 %v2241
    %2516 = vmatprep.subr.bf16.mxu0 %v2244
    %2517 = vmatpush1.bf16.msra.mxu0 %v2243
    %2518 = vmatprep.subr.bf16.mxu0 %v2246
    %2519 = vmatpush1.bf16.msra.mxu0 %v2245
    %2520 = vmatprep.subr.bf16.mxu0 %v2248
    %2521 = vmatpush1.bf16.msra.mxu0 %v2247
    %2522 = vmatprep.subr.bf16.mxu0 %v2250
    %2523 = vmatpush1.bf16.msra.mxu0 %v2249
    %2524 = vmatprep.mubr.bf16.mxu0 %v2374
    %2525 = vmatmul.mubr.bf16.gmra.mrb[0].mxu0 %v2373
    %v2526 = vpop.f32.mrb[0].mxu0
    %v2527 = vadd.f32 %v2454, %v2526
    %v2528 = vpop.f32.mrb[0].mxu0
    %v2529 = vadd.f32 %v2456, %v2528
    %v2530 = vpop.f32.mrb[0].mxu0
    %v2531 = vadd.f32 %v2458, %v2530
    %v2532 = vpop.f32.mrb[0].mxu0
    %v2533 = vadd.f32 %v2460, %v2532
    %2534 = vmatprep.mubr.bf16.mxu0 %v2379
    %2535 = vmatmul.mubr.bf16.gmra.mrb[0].mxu0 %v2378
    %v2536 = vpop.f32.mrb[0].mxu0
    %v2537 = vadd.f32 %v2464, %v2536
    %v2538 = vpop.f32.mrb[0].mxu0
    %v2539 = vadd.f32 %v2466, %v2538
    %v2540 = vpop.f32.mrb[0].mxu0
    %v2541 = vadd.f32 %v2468, %v2540
    %v2542 = vpop.f32.mrb[0].mxu0
    %v2543 = vadd.f32 %v2470, %v2542
    %2544 = vmatprep.mubr.bf16.mxu0 %v2384
    %2545 = vmatmul.mubr.bf16.gmra.mrb[0].mxu0 %v2383
    %v2546 = vpop.f32.mrb[0].mxu0
    %v2547 = vadd.f32 %v2474, %v2546
    %v2548 = vpop.f32.mrb[0].mxu0
    %v2549 = vadd.f32 %v2476, %v2548
    %v2550 = vpop.f32.mrb[0].mxu0
    %v2551 = vadd.f32 %v2478, %v2550
    %v2552 = vpop.f32.mrb[0].mxu0
    %v2553 = vadd.f32 %v2480, %v2552
    %2554 = vmatprep.mubr.bf16.mxu0 %v2389
    %2555 = vmatmul.mubr.bf16.gmra.mrb[0].mxu0 %v2388
    %v2556 = vpop.f32.mrb[0].mxu0
    %v2557 = vadd.f32 %v2484, %v2556
    %v2558 = vpop.f32.mrb[0].mxu0
    %v2559 = vadd.f32 %v2486, %v2558
    %v2560 = vpop.f32.mrb[0].mxu0
    %v2561 = vadd.f32 %v2488, %v2560
    %v2562 = vpop.f32.mrb[0].mxu0
    %v2563 = vadd.f32 %v2490, %v2562
    %2564 = vdwg.mxu0
    %2565 = vmatprep.subr.bf16.mxu0 %v2252
    %2566 = vmatpush1.bf16.msra.mxu0 %v2251
    %2567 = vmatprep.subr.bf16.mxu0 %v2254
    %2568 = vmatpush1.bf16.msra.mxu0 %v2253
    %2569 = vmatprep.subr.bf16.mxu0 %v2256
    %2570 = vmatpush1.bf16.msra.mxu0 %v2255
    %2571 = vmatprep.subr.bf16.mxu0 %v2258
    %2572 = vmatpush1.bf16.msra.mxu0 %v2257
    %2573 = vmatprep.subr.bf16.mxu0 0
    %2574 = vmatpush1.bf16.msra.mxu0 0
    %2575 = vmatprep.subr.bf16.mxu0 0
    %2576 = vmatpush1.bf16.msra.mxu0 0
    %2577 = vmatprep.subr.bf16.mxu0 0
    %2578 = vmatpush1.bf16.msra.mxu0 0
    %2579 = vmatprep.subr.bf16.mxu0 0
    %2580 = vmatpush1.bf16.msra.mxu0 0
    %2581 = vmatprep.subr.bf16.mxu0 0
    %2582 = vmatpush1.bf16.msra.mxu0 0
    %2583 = vmatprep.subr.bf16.mxu0 0
    %2584 = vmatpush1.bf16.msra.mxu0 0
    %2585 = vmatprep.subr.bf16.mxu0 0
    %2586 = vmatpush1.bf16.msra.mxu0 0
    %2587 = vmatprep.subr.bf16.mxu0 0
    %2588 = vmatpush1.bf16.msra.mxu0 0
    %2589 = vmatprep.subr.bf16.mxu0 0
    %2590 = vmatpush1.bf16.msra.mxu0 0
    %2591 = vmatprep.subr.bf16.mxu0 0
    %2592 = vmatpush1.bf16.msra.mxu0 0
    %2593 = vmatprep.subr.bf16.mxu0 0
    %2594 = vmatpush1.bf16.msra.mxu0 0
    %2595 = vmatprep.subr.bf16.mxu0 0
    %2596 = vmatpush1.bf16.msra.mxu0 0
    %2597 = vmatprep.mubr.bf16.mxu0 0
    %2598 = vmatmul.mubr.bf16.gmra.mrb[0].mxu0 %v2408
    %v2599 = vpop.f32.mrb[0].mxu0
    %v2600 = vadd.f32 %v2527, %v2599
    %v2601 = vpop.f32.mrb[0].mxu0
    %v2602 = vadd.f32 %v2529, %v2601
    %v2603 = vpop.f32.mrb[0].mxu0
    %v2604 = vadd.f32 %v2531, %v2603
    %v2605 = vpop.f32.mrb[0].mxu0
    %v2606 = vadd.f32 %v2533, %v2605
    %2607 = vmatprep.mubr.bf16.mxu0 0
    %2608 = vmatmul.mubr.bf16.gmra.mrb[0].mxu0 %v2411
    %v2609 = vpop.f32.mrb[0].mxu0
    %v2610 = vadd.f32 %v2537, %v2609
    %v2611 = vpop.f32.mrb[0].mxu0
    %v2612 = vadd.f32 %v2539, %v2611
    %v2613 = vpop.f32.mrb[0].mxu0
    %v2614 = vadd.f32 %v2541, %v2613
    %v2615 = vpop.f32.mrb[0].mxu0
    %v2616 = vadd.f32 %v2543, %v2615
    %2617 = vmatprep.mubr.bf16.mxu0 0
    %2618 = vmatmul.mubr.bf16.gmra.mrb[0].mxu0 %v2414
    %v2619 = vpop.f32.mrb[0].mxu0
    %v2620 = vadd.f32 %v2547, %v2619
    %v2621 = vpop.f32.mrb[0].mxu0
    %v2622 = vadd.f32 %v2549, %v2621
    %v2623 = vpop.f32.mrb[0].mxu0
    %v2624 = vadd.f32 %v2551, %v2623
    %v2625 = vpop.f32.mrb[0].mxu0
    %v2626 = vadd.f32 %v2553, %v2625
    %2627 = vmatprep.mubr.bf16.mxu0 0
    %2628 = vmatmul.mubr.bf16.gmra.mrb[0].mxu0 %v2417
    %v2629 = vpop.f32.mrb[0].mxu0
    %v2630 = vadd.f32 %v2557, %v2629
    %v2631 = vpop.f32.mrb[0].mxu0
    %v2632 = vadd.f32 %v2559, %v2631
    %v2633 = vpop.f32.mrb[0].mxu0
    %v2634 = vadd.f32 %v2561, %v2633
    %v2635 = vpop.f32.mrb[0].mxu0
    %v2636 = vadd.f32 %v2563, %v2635
    %2637 = vdwg.mxu0
    %v2638 = vpack.c.bf16 %v1601, %v1597
    %v2639 = vpack.c.bf16 %v1603, %v1599
    %v2640 = vpack.c.bf16 %v1611, %v1607
    %v2641 = vpack.c.bf16 %v1613, %v1609
    %v2642 = vpack.c.bf16 %v1621, %v1617
    %v2643 = vpack.c.bf16 %v1623, %v1619
    %v2644 = vpack.c.bf16 %v1631, %v1627
    %v2645 = vpack.c.bf16 %v1633, %v1629
    %v2646 = vpack.c.bf16 %v2604, %v2600
    %v2647 = vpack.c.bf16 %v2606, %v2602
    %v2648 = vpack.c.bf16 %v2614, %v2610
    %v2649 = vpack.c.bf16 %v2616, %v2612
    %v2650 = vpack.c.bf16 %v2624, %v2620
    %v2651 = vpack.c.bf16 %v2626, %v2622
    %v2652 = vpack.c.bf16 %v2634, %v2630
    %v2653 = vpack.c.bf16 %v2636, %v2632
    %v2654 = vld [vmem:[#allocation8] sm:$0xff]
    %v2655 = vld [vmem:[#allocation8 + $0x8] sm:$0xff]
    %v2656 = vld [vmem:[#allocation8 + $0x10] sm:$0xff]
    %v2657 = vld [vmem:[#allocation8 + $0x18] sm:$0xff]
    %v2658 = vld [vmem:[#allocation8 + $0x20] sm:$0xff]
    %v2659 = vld [vmem:[#allocation8 + $0x28] sm:$0xff]
    %v2660 = vld [vmem:[#allocation8 + $0x30] sm:$0xff]
    %v2661 = vld [vmem:[#allocation8 + $0x38] sm:$0xff]
    %v2662 = vld [vmem:[#allocation8 + $0x40] sm:$0xff]
    %v2663 = vld [vmem:[#allocation8 + $0x48] sm:$0xff]
    %v2664 = vld [vmem:[#allocation8 + $0x50] sm:$0xff]
    %v2665 = vld [vmem:[#allocation8 + $0x58] sm:$0xff]
    %v2666 = vld [vmem:[#allocation8 + $0x60] sm:$0xff]
    %v2667 = vld [vmem:[#allocation8 + $0x68] sm:$0xff]
    %v2668 = vld [vmem:[#allocation8 + $0x70] sm:$0xff]
    %v2669 = vld [vmem:[#allocation8 + $0x78] sm:$0xff]
    %v2670 = vld [vmem:[#allocation8 + $0x80] sm:$0xff]
    %v2671 = vld [vmem:[#allocation8 + $0x88] sm:$0xff]
    %v2672 = vld [vmem:[#allocation8 + $0x90] sm:$0xff]
    %v2673 = vld [vmem:[#allocation8 + $0x98] sm:$0xff]
    %v2674 = vld [vmem:[#allocation8 + $0xa0] sm:$0xff]
    %v2675 = vld [vmem:[#allocation8 + $0xa8] sm:$0xff]
    %v2676 = vld [vmem:[#allocation8 + $0xb0] sm:$0xff]
    %v2677 = vld [vmem:[#allocation8 + $0xb8] sm:$0xff]
    %v2678 = vld [vmem:[#allocation8 + $0xc0] sm:$0xff]
    %v2679 = vld [vmem:[#allocation8 + $0xc8] sm:$0xff]
    %v2680 = vld [vmem:[#allocation8 + $0xd0] sm:$0xff]
    %v2681 = vld [vmem:[#allocation8 + $0xd8] sm:$0xff]
    %v2682 = vld [vmem:[#allocation8 + $0xe0] sm:$0xff]
    %v2683 = vld [vmem:[#allocation8 + $0xe8] sm:$0xff]
    %v2684 = vld [vmem:[#allocation8 + $0xf0] sm:$0xff]
    %v2685 = vld [vmem:[#allocation8 + $0xf8] sm:$0xff]
    %v2686 = vld [vmem:[%s4] sm:$0x3]
    %v2688 = vlaneseq
    %v2689 = vshrl.u32 %v2688, 7
    %v2690 = vsub.s32 0, %v2689
    %v2691 = vrot.slane %v2686, %v2690
    %v2692 = vlaneseq
    %v2693 = vshrl.u32 %v2692, 7
    %v2694 = vsub.s32 1, %v2693
    %v2695 = vrot.slane %v2686, %v2694
    %v2730 = vunpack.c.l.b16 %v2654
    %v2731 = vunpack.c.h.b16 %v2654
    %v2732 = vunpack.c.l.b16 %v2655
    %v2733 = vunpack.c.h.b16 %v2655
    %v2734 = vunpack.c.l.b16 %v2656
    %v2735 = vunpack.c.h.b16 %v2656
    %v2736 = vunpack.c.l.b16 %v2657
    %v2737 = vunpack.c.h.b16 %v2657
    %v2738 = vunpack.c.l.b16 %v2658
    %v2739 = vunpack.c.h.b16 %v2658
    %v2740 = vunpack.c.l.b16 %v2659
    %v2741 = vunpack.c.h.b16 %v2659
    %v2742 = vunpack.c.l.b16 %v2660
    %v2743 = vunpack.c.h.b16 %v2660
    %v2744 = vunpack.c.l.b16 %v2661
    %v2745 = vunpack.c.h.b16 %v2661
    %v2746 = vunpack.c.l.b16 %v2662
    %v2747 = vunpack.c.h.b16 %v2662
    %v2748 = vunpack.c.l.b16 %v2663
    %v2749 = vunpack.c.h.b16 %v2663
    %v2750 = vunpack.c.l.b16 %v2664
    %v2751 = vunpack.c.h.b16 %v2664
    %v2752 = vunpack.c.l.b16 %v2665
    %v2753 = vunpack.c.h.b16 %v2665
    %v2754 = vunpack.c.l.b16 %v2666
    %v2755 = vunpack.c.h.b16 %v2666
    %v2756 = vunpack.c.l.b16 %v2667
    %v2757 = vunpack.c.h.b16 %v2667
    %v2758 = vunpack.c.l.b16 %v2668
    %v2759 = vunpack.c.h.b16 %v2668
    %v2760 = vunpack.c.l.b16 %v2669
    %v2761 = vunpack.c.h.b16 %v2669
    %v2762 = vunpack.c.l.b16 %v2670
    %v2763 = vunpack.c.h.b16 %v2670
    %v2764 = vunpack.c.l.b16 %v2671
    %v2765 = vunpack.c.h.b16 %v2671
    %v2766 = vunpack.c.l.b16 %v2672
    %v2767 = vunpack.c.h.b16 %v2672
    %v2768 = vunpack.c.l.b16 %v2673
    %v2769 = vunpack.c.h.b16 %v2673
    %v2770 = vunpack.c.l.b16 %v2674
    %v2771 = vunpack.c.h.b16 %v2674
    %v2772 = vunpack.c.l.b16 %v2675
    %v2773 = vunpack.c.h.b16 %v2675
    %v2774 = vunpack.c.l.b16 %v2676
    %v2775 = vunpack.c.h.b16 %v2676
    %v2776 = vunpack.c.l.b16 %v2677
    %v2777 = vunpack.c.h.b16 %v2677
    %v2778 = vunpack.c.l.b16 %v2678
    %v2779 = vunpack.c.h.b16 %v2678
    %v2780 = vunpack.c.l.b16 %v2679
    %v2781 = vunpack.c.h.b16 %v2679
    %v2782 = vunpack.c.l.b16 %v2680
    %v2783 = vunpack.c.h.b16 %v2680
    %v2784 = vunpack.c.l.b16 %v2681
    %v2785 = vunpack.c.h.b16 %v2681
    %v2786 = vunpack.c.l.b16 %v2682
    %v2787 = vunpack.c.h.b16 %v2682
    %v2788 = vunpack.c.l.b16 %v2683
    %v2789 = vunpack.c.h.b16 %v2683
    %v2790 = vunpack.c.l.b16 %v2684
    %v2791 = vunpack.c.h.b16 %v2684
    %v2792 = vunpack.c.l.b16 %v2685
    %v2793 = vunpack.c.h.b16 %v2685
    %v2794 = vpack.c.b16 %v2732, %v2730
    %v2795 = vpack.c.b16 %v2733, %v2731
    %v2796 = vpack.c.b16 %v2736, %v2734
    %v2797 = vpack.c.b16 %v2737, %v2735
    %v2798 = vpack.c.b16 %v2740, %v2738
    %v2799 = vpack.c.b16 %v2741, %v2739
    %v2800 = vpack.c.b16 %v2744, %v2742
    %v2801 = vpack.c.b16 %v2745, %v2743
    %v2802 = vpack.c.b16 %v2748, %v2746
    %v2803 = vpack.c.b16 %v2749, %v2747
    %v2804 = vpack.c.b16 %v2752, %v2750
    %v2805 = vpack.c.b16 %v2753, %v2751
    %v2806 = vpack.c.b16 %v2756, %v2754
    %v2807 = vpack.c.b16 %v2757, %v2755
    %v2808 = vpack.c.b16 %v2760, %v2758
    %v2809 = vpack.c.b16 %v2761, %v2759
    %v2810 = vpack.c.b16 %v2764, %v2762
    %v2811 = vpack.c.b16 %v2765, %v2763
    %v2812 = vpack.c.b16 %v2768, %v2766
    %v2813 = vpack.c.b16 %v2769, %v2767
    %v2814 = vpack.c.b16 %v2772, %v2770
    %v2815 = vpack.c.b16 %v2773, %v2771
    %v2816 = vpack.c.b16 %v2776, %v2774
    %v2817 = vpack.c.b16 %v2777, %v2775
    %v2818 = vpack.c.b16 %v2780, %v2778
    %v2819 = vpack.c.b16 %v2781, %v2779
    %v2820 = vpack.c.b16 %v2784, %v2782
    %v2821 = vpack.c.b16 %v2785, %v2783
    %v2822 = vpack.c.b16 %v2788, %v2786
    %v2823 = vpack.c.b16 %v2789, %v2787
    %v2824 = vpack.c.b16 %v2792, %v2790
    %v2825 = vpack.c.b16 %v2793, %v2791
    %2858 = vmatprep.subr.bf16.mxu0 %v2795
    %2859 = vmatpush1.bf16.msra.mxu0 %v2794
    %2860 = vmatprep.subr.bf16.mxu0 %v2797
    %2861 = vmatpush1.bf16.msra.mxu0 %v2796
    %2862 = vmatprep.subr.bf16.mxu0 %v2799
    %2863 = vmatpush1.bf16.msra.mxu0 %v2798
    %2864 = vmatprep.subr.bf16.mxu0 %v2801
    %2865 = vmatpush1.bf16.msra.mxu0 %v2800
    %2866 = vmatprep.subr.bf16.mxu0 %v2803
    %2867 = vmatpush1.bf16.msra.mxu0 %v2802
    %2868 = vmatprep.subr.bf16.mxu0 %v2805
    %2869 = vmatpush1.bf16.msra.mxu0 %v2804
    %2870 = vmatprep.subr.bf16.mxu0 %v2807
    %2871 = vmatpush1.bf16.msra.mxu0 %v2806
    %2872 = vmatprep.subr.bf16.mxu0 %v2809
    %2873 = vmatpush1.bf16.msra.mxu0 %v2808
    %2874 = vmatprep.subr.bf16.mxu0 %v2811
    %2875 = vmatpush1.bf16.msra.mxu0 %v2810
    %2876 = vmatprep.subr.bf16.mxu0 %v2813
    %2877 = vmatpush1.bf16.msra.mxu0 %v2812
    %2878 = vmatprep.subr.bf16.mxu0 %v2815
    %2879 = vmatpush1.bf16.msra.mxu0 %v2814
    %2880 = vmatprep.subr.bf16.mxu0 %v2817
    %2881 = vmatpush1.bf16.msra.mxu0 %v2816
    %2882 = vmatprep.subr.bf16.mxu0 %v2819
    %2883 = vmatpush1.bf16.msra.mxu0 %v2818
    %2884 = vmatprep.subr.bf16.mxu0 %v2821
    %2885 = vmatpush1.bf16.msra.mxu0 %v2820
    %2886 = vmatprep.subr.bf16.mxu0 %v2823
    %2887 = vmatpush1.bf16.msra.mxu0 %v2822
    %2888 = vmatprep.subr.bf16.mxu0 %v2825
    %2889 = vmatpush1.bf16.msra.mxu0 %v2824
    %2890 = vmatprep.mubr.bf16.mxu0 %v2639
    %2891 = vmatmul.mubr.bf16.gmra.mrb[0].mxu0 %v2638
    %v2892 = vpop.f32.mrb[0].mxu0
    %v2893 = vadd.f32 %v2691, %v2892
    %v2894 = vpop.f32.mrb[0].mxu0
    %v2895 = vadd.f32 %v2695, %v2894
    %v2896 = vpop.f32.mrb[0].mxu0
    %v2897 = vadd.f32 %v2691, %v2896
    %v2898 = vpop.f32.mrb[0].mxu0
    %v2899 = vadd.f32 %v2695, %v2898
    %2900 = vmatprep.mubr.bf16.mxu0 %v2641
    %2901 = vmatmul.mubr.bf16.gmra.mrb[0].mxu0 %v2640
    %v2902 = vpop.f32.mrb[0].mxu0
    %v2903 = vadd.f32 %v2691, %v2902
    %v2904 = vpop.f32.mrb[0].mxu0
    %v2905 = vadd.f32 %v2695, %v2904
    %v2906 = vpop.f32.mrb[0].mxu0
    %v2907 = vadd.f32 %v2691, %v2906
    %v2908 = vpop.f32.mrb[0].mxu0
    %v2909 = vadd.f32 %v2695, %v2908
    %2910 = vmatprep.mubr.bf16.mxu0 %v2643
    %2911 = vmatmul.mubr.bf16.gmra.mrb[0].mxu0 %v2642
    %v2912 = vpop.f32.mrb[0].mxu0
    %v2913 = vadd.f32 %v2691, %v2912
    %v2914 = vpop.f32.mrb[0].mxu0
    %v2915 = vadd.f32 %v2695, %v2914
    %v2916 = vpop.f32.mrb[0].mxu0
    %v2917 = vadd.f32 %v2691, %v2916
    %v2918 = vpop.f32.mrb[0].mxu0
    %v2919 = vadd.f32 %v2695, %v2918
    %2920 = vmatprep.mubr.bf16.mxu0 %v2645
    %2921 = vmatmul.mubr.bf16.gmra.mrb[0].mxu0 %v2644
    %v2922 = vpop.f32.mrb[0].mxu0
    %v2923 = vadd.f32 %v2691, %v2922
    %v2924 = vpop.f32.mrb[0].mxu0
    %v2925 = vadd.f32 %v2695, %v2924
    %v2926 = vpop.f32.mrb[0].mxu0
    %v2927 = vadd.f32 %v2691, %v2926
    %v2928 = vpop.f32.mrb[0].mxu0
    %v2929 = vadd.f32 %v2695, %v2928
    %2930 = vmatprep.mubr.bf16.mxu0 %v2647
    %2931 = vmatmul.mubr.bf16.gmra.mrb[0].mxu0 %v2646
    %v2932 = vpop.f32.mrb[0].mxu0
    %v2933 = vadd.f32 %v2691, %v2932
    %v2934 = vpop.f32.mrb[0].mxu0
    %v2935 = vadd.f32 %v2695, %v2934
    %v2936 = vpop.f32.mrb[0].mxu0
    %v2937 = vadd.f32 %v2691, %v2936
    %v2938 = vpop.f32.mrb[0].mxu0
    %v2939 = vadd.f32 %v2695, %v2938
    %2940 = vmatprep.mubr.bf16.mxu0 %v2649
    %2941 = vmatmul.mubr.bf16.gmra.mrb[0].mxu0 %v2648
    %v2942 = vpop.f32.mrb[0].mxu0
    %v2943 = vadd.f32 %v2691, %v2942
    %v2944 = vpop.f32.mrb[0].mxu0
    %v2945 = vadd.f32 %v2695, %v2944
    %v2946 = vpop.f32.mrb[0].mxu0
    %v2947 = vadd.f32 %v2691, %v2946
    %v2948 = vpop.f32.mrb[0].mxu0
    %v2949 = vadd.f32 %v2695, %v2948
    %2950 = vmatprep.mubr.bf16.mxu0 %v2651
    %2951 = vmatmul.mubr.bf16.gmra.mrb[0].mxu0 %v2650
    %v2952 = vpop.f32.mrb[0].mxu0
    %v2953 = vadd.f32 %v2691, %v2952
    %v2954 = vpop.f32.mrb[0].mxu0
    %v2955 = vadd.f32 %v2695, %v2954
    %v2956 = vpop.f32.mrb[0].mxu0
    %v2957 = vadd.f32 %v2691, %v2956
    %v2958 = vpop.f32.mrb[0].mxu0
    %v2959 = vadd.f32 %v2695, %v2958
    %2960 = vmatprep.mubr.bf16.mxu0 %v2653
    %2961 = vmatmul.mubr.bf16.gmra.mrb[0].mxu0 %v2652
    %v2962 = vpop.f32.mrb[0].mxu0
    %v2963 = vadd.f32 %v2691, %v2962
    %v2964 = vpop.f32.mrb[0].mxu0
    %v2965 = vadd.f32 %v2695, %v2964
    %v2966 = vpop.f32.mrb[0].mxu0
    %v2967 = vadd.f32 %v2691, %v2966
    %v2968 = vpop.f32.mrb[0].mxu0
    %v2969 = vadd.f32 %v2695, %v2968
    %2970 = vdwg.mxu0
    %v2971 = vpack.c.bf16 %v2897, %v2893
    %v2972 = vpack.c.bf16 %v2899, %v2895
    %v2973 = vpack.c.bf16 %v2907, %v2903
    %v2974 = vpack.c.bf16 %v2909, %v2905
    %v2975 = vpack.c.bf16 %v2917, %v2913
    %v2976 = vpack.c.bf16 %v2919, %v2915
    %v2977 = vpack.c.bf16 %v2927, %v2923
    %v2978 = vpack.c.bf16 %v2929, %v2925
    %v2979 = vpack.c.bf16 %v2937, %v2933
    %v2980 = vpack.c.bf16 %v2939, %v2935
    %v2981 = vpack.c.bf16 %v2947, %v2943
    %v2982 = vpack.c.bf16 %v2949, %v2945
    %v2983 = vpack.c.bf16 %v2957, %v2953
    %v2984 = vpack.c.bf16 %v2959, %v2955
    %v2985 = vpack.c.bf16 %v2967, %v2963
    %v2986 = vpack.c.bf16 %v2969, %v2965
    %v2987 = vld [vmem:[#allocation9] sm:$0xff]
    %v2988 = vld [vmem:[#allocation9 + $0x8] sm:$0xff]
    %v2989 = vld [vmem:[#allocation9 + $0x10] sm:$0xff]
    %v2990 = vld [vmem:[#allocation9 + $0x18] sm:$0xff]
    %v2991 = vld [vmem:[#allocation9 + $0x20] sm:$0xff]
    %v2992 = vld [vmem:[#allocation9 + $0x28] sm:$0xff]
    %v2993 = vld [vmem:[#allocation9 + $0x30] sm:$0xff]
    %v2994 = vld [vmem:[#allocation9 + $0x38] sm:$0xff]
    %v2995 = vld [vmem:[#allocation9 + $0x40] sm:$0xff]
    %v2996 = vld [vmem:[#allocation9 + $0x48] sm:$0xff]
    %v2997 = vld [vmem:[#allocation9 + $0x50] sm:$0xff]
    %v2998 = vld [vmem:[#allocation9 + $0x58] sm:$0xff]
    %v2999 = vld [vmem:[#allocation9 + $0x60] sm:$0xff]
    %v3000 = vld [vmem:[#allocation9 + $0x68] sm:$0xff]
    %v3001 = vld [vmem:[#allocation9 + $0x70] sm:$0xff]
    %v3002 = vld [vmem:[#allocation9 + $0x78] sm:$0xff]
    %v3003 = vld [vmem:[#allocation9 + $0x80] sm:$0xff]
    %v3004 = vld [vmem:[#allocation9 + $0x88] sm:$0xff]
    %v3005 = vld [vmem:[#allocation9 + $0x90] sm:$0xff]
    %v3006 = vld [vmem:[#allocation9 + $0x98] sm:$0xff]
    %v3007 = vld [vmem:[#allocation9 + $0xa0] sm:$0xff]
    %v3008 = vld [vmem:[#allocation9 + $0xa8] sm:$0xff]
    %v3009 = vld [vmem:[#allocation9 + $0xb0] sm:$0xff]
    %v3010 = vld [vmem:[#allocation9 + $0xb8] sm:$0xff]
    %v3011 = vld [vmem:[#allocation9 + $0xc0] sm:$0xff]
    %v3012 = vld [vmem:[#allocation9 + $0xc8] sm:$0xff]
    %v3013 = vld [vmem:[#allocation9 + $0xd0] sm:$0xff]
    %v3014 = vld [vmem:[#allocation9 + $0xd8] sm:$0xff]
    %v3015 = vld [vmem:[#allocation9 + $0xe0] sm:$0xff]
    %v3016 = vld [vmem:[#allocation9 + $0xe8] sm:$0xff]
    %v3017 = vld [vmem:[#allocation9 + $0xf0] sm:$0xff]
    %v3018 = vld [vmem:[#allocation9 + $0xf8] sm:$0xff]
    %v3019 = vld [vmem:[%s6] sm:$0x3]
    %v3021 = vlaneseq
    %v3022 = vshrl.u32 %v3021, 7
    %v3023 = vsub.s32 0, %v3022
    %v3024 = vrot.slane %v3019, %v3023
    %v3025 = vlaneseq
    %v3026 = vshrl.u32 %v3025, 7
    %v3027 = vsub.s32 1, %v3026
    %v3028 = vrot.slane %v3019, %v3027
    %v3063 = vunpack.c.l.b16 %v2987
    %v3064 = vunpack.c.h.b16 %v2987
    %v3065 = vunpack.c.l.b16 %v2988
    %v3066 = vunpack.c.h.b16 %v2988
    %v3067 = vunpack.c.l.b16 %v2989
    %v3068 = vunpack.c.h.b16 %v2989
    %v3069 = vunpack.c.l.b16 %v2990
    %v3070 = vunpack.c.h.b16 %v2990
    %v3071 = vunpack.c.l.b16 %v2991
    %v3072 = vunpack.c.h.b16 %v2991
    %v3073 = vunpack.c.l.b16 %v2992
    %v3074 = vunpack.c.h.b16 %v2992
    %v3075 = vunpack.c.l.b16 %v2993
    %v3076 = vunpack.c.h.b16 %v2993
    %v3077 = vunpack.c.l.b16 %v2994
    %v3078 = vunpack.c.h.b16 %v2994
    %v3079 = vunpack.c.l.b16 %v2995
    %v3080 = vunpack.c.h.b16 %v2995
    %v3081 = vunpack.c.l.b16 %v2996
    %v3082 = vunpack.c.h.b16 %v2996
    %v3083 = vunpack.c.l.b16 %v2997
    %v3084 = vunpack.c.h.b16 %v2997
    %v3085 = vunpack.c.l.b16 %v2998
    %v3086 = vunpack.c.h.b16 %v2998
    %v3087 = vunpack.c.l.b16 %v2999
    %v3088 = vunpack.c.h.b16 %v2999
    %v3089 = vunpack.c.l.b16 %v3000
    %v3090 = vunpack.c.h.b16 %v3000
    %v3091 = vunpack.c.l.b16 %v3001
    %v3092 = vunpack.c.h.b16 %v3001
    %v3093 = vunpack.c.l.b16 %v3002
    %v3094 = vunpack.c.h.b16 %v3002
    %v3095 = vunpack.c.l.b16 %v3003
    %v3096 = vunpack.c.h.b16 %v3003
    %v3097 = vunpack.c.l.b16 %v3004
    %v3098 = vunpack.c.h.b16 %v3004
    %v3099 = vunpack.c.l.b16 %v3005
    %v3100 = vunpack.c.h.b16 %v3005
    %v3101 = vunpack.c.l.b16 %v3006
    %v3102 = vunpack.c.h.b16 %v3006
    %v3103 = vunpack.c.l.b16 %v3007
    %v3104 = vunpack.c.h.b16 %v3007
    %v3105 = vunpack.c.l.b16 %v3008
    %v3106 = vunpack.c.h.b16 %v3008
    %v3107 = vunpack.c.l.b16 %v3009
    %v3108 = vunpack.c.h.b16 %v3009
    %v3109 = vunpack.c.l.b16 %v3010
    %v3110 = vunpack.c.h.b16 %v3010
    %v3111 = vunpack.c.l.b16 %v3011
    %v3112 = vunpack.c.h.b16 %v3011
    %v3113 = vunpack.c.l.b16 %v3012
    %v3114 = vunpack.c.h.b16 %v3012
    %v3115 = vunpack.c.l.b16 %v3013
    %v3116 = vunpack.c.h.b16 %v3013
    %v3117 = vunpack.c.l.b16 %v3014
    %v3118 = vunpack.c.h.b16 %v3014
    %v3119 = vunpack.c.l.b16 %v3015
    %v3120 = vunpack.c.h.b16 %v3015
    %v3121 = vunpack.c.l.b16 %v3016
    %v3122 = vunpack.c.h.b16 %v3016
    %v3123 = vunpack.c.l.b16 %v3017
    %v3124 = vunpack.c.h.b16 %v3017
    %v3125 = vunpack.c.l.b16 %v3018
    %v3126 = vunpack.c.h.b16 %v3018
    %v3127 = vpack.c.b16 %v3065, %v3063
    %v3128 = vpack.c.b16 %v3066, %v3064
    %v3129 = vpack.c.b16 %v3069, %v3067
    %v3130 = vpack.c.b16 %v3070, %v3068
    %v3131 = vpack.c.b16 %v3073, %v3071
    %v3132 = vpack.c.b16 %v3074, %v3072
    %v3133 = vpack.c.b16 %v3077, %v3075
    %v3134 = vpack.c.b16 %v3078, %v3076
    %v3135 = vpack.c.b16 %v3081, %v3079
    %v3136 = vpack.c.b16 %v3082, %v3080
    %v3137 = vpack.c.b16 %v3085, %v3083
    %v3138 = vpack.c.b16 %v3086, %v3084
    %v3139 = vpack.c.b16 %v3089, %v3087
    %v3140 = vpack.c.b16 %v3090, %v3088
    %v3141 = vpack.c.b16 %v3093, %v3091
    %v3142 = vpack.c.b16 %v3094, %v3092
    %v3143 = vpack.c.b16 %v3097, %v3095
    %v3144 = vpack.c.b16 %v3098, %v3096
    %v3145 = vpack.c.b16 %v3101, %v3099
    %v3146 = vpack.c.b16 %v3102, %v3100
    %v3147 = vpack.c.b16 %v3105, %v3103
    %v3148 = vpack.c.b16 %v3106, %v3104
    %v3149 = vpack.c.b16 %v3109, %v3107
    %v3150 = vpack.c.b16 %v3110, %v3108
    %v3151 = vpack.c.b16 %v3113, %v3111
    %v3152 = vpack.c.b16 %v3114, %v3112
    %v3153 = vpack.c.b16 %v3117, %v3115
    %v3154 = vpack.c.b16 %v3118, %v3116
    %v3155 = vpack.c.b16 %v3121, %v3119
    %v3156 = vpack.c.b16 %v3122, %v3120
    %v3157 = vpack.c.b16 %v3125, %v3123
    %v3158 = vpack.c.b16 %v3126, %v3124
    %3191 = vmatprep.subr.bf16.mxu0 %v3128
    %3192 = vmatpush1.bf16.msra.mxu0 %v3127
    %3193 = vmatprep.subr.bf16.mxu0 %v3130
    %3194 = vmatpush1.bf16.msra.mxu0 %v3129
    %3195 = vmatprep.subr.bf16.mxu0 %v3132
    %3196 = vmatpush1.bf16.msra.mxu0 %v3131
    %3197 = vmatprep.subr.bf16.mxu0 %v3134
    %3198 = vmatpush1.bf16.msra.mxu0 %v3133
    %3199 = vmatprep.subr.bf16.mxu0 %v3136
    %3200 = vmatpush1.bf16.msra.mxu0 %v3135
    %3201 = vmatprep.subr.bf16.mxu0 %v3138
    %3202 = vmatpush1.bf16.msra.mxu0 %v3137
    %3203 = vmatprep.subr.bf16.mxu0 %v3140
    %3204 = vmatpush1.bf16.msra.mxu0 %v3139
    %3205 = vmatprep.subr.bf16.mxu0 %v3142
    %3206 = vmatpush1.bf16.msra.mxu0 %v3141
    %3207 = vmatprep.subr.bf16.mxu0 %v3144
    %3208 = vmatpush1.bf16.msra.mxu0 %v3143
    %3209 = vmatprep.subr.bf16.mxu0 %v3146
    %3210 = vmatpush1.bf16.msra.mxu0 %v3145
    %3211 = vmatprep.subr.bf16.mxu0 %v3148
    %3212 = vmatpush1.bf16.msra.mxu0 %v3147
    %3213 = vmatprep.subr.bf16.mxu0 %v3150
    %3214 = vmatpush1.bf16.msra.mxu0 %v3149
    %3215 = vmatprep.subr.bf16.mxu0 %v3152
    %3216 = vmatpush1.bf16.msra.mxu0 %v3151
    %3217 = vmatprep.subr.bf16.mxu0 %v3154
    %3218 = vmatpush1.bf16.msra.mxu0 %v3153
    %3219 = vmatprep.subr.bf16.mxu0 %v3156
    %3220 = vmatpush1.bf16.msra.mxu0 %v3155
    %3221 = vmatprep.subr.bf16.mxu0 %v3158
    %3222 = vmatpush1.bf16.msra.mxu0 %v3157
    %3223 = vmatprep.mubr.bf16.mxu0 %v2972
    %3224 = vmatmul.mubr.bf16.gmra.mrb[0].mxu0 %v2971
    %v3225 = vpop.f32.mrb[0].mxu0
    %v3226 = vadd.f32 %v3024, %v3225
    %v3227 = vpop.f32.mrb[0].mxu0
    %v3228 = vadd.f32 %v3028, %v3227
    %v3229 = vpop.f32.mrb[0].mxu0
    %v3230 = vadd.f32 %v3024, %v3229
    %v3231 = vpop.f32.mrb[0].mxu0
    %v3232 = vadd.f32 %v3028, %v3231
    %3233 = vmatprep.mubr.bf16.mxu0 %v2974
    %3234 = vmatmul.mubr.bf16.gmra.mrb[0].mxu0 %v2973
    %v3235 = vpop.f32.mrb[0].mxu0
    %v3236 = vadd.f32 %v3024, %v3235
    %v3237 = vpop.f32.mrb[0].mxu0
    %v3238 = vadd.f32 %v3028, %v3237
    %v3239 = vpop.f32.mrb[0].mxu0
    %v3240 = vadd.f32 %v3024, %v3239
    %v3241 = vpop.f32.mrb[0].mxu0
    %v3242 = vadd.f32 %v3028, %v3241
    %3243 = vmatprep.mubr.bf16.mxu0 %v2976
    %3244 = vmatmul.mubr.bf16.gmra.mrb[0].mxu0 %v2975
    %v3245 = vpop.f32.mrb[0].mxu0
    %v3246 = vadd.f32 %v3024, %v3245
    %v3247 = vpop.f32.mrb[0].mxu0
    %v3248 = vadd.f32 %v3028, %v3247
    %v3249 = vpop.f32.mrb[0].mxu0
    %v3250 = vadd.f32 %v3024, %v3249
    %v3251 = vpop.f32.mrb[0].mxu0
    %v3252 = vadd.f32 %v3028, %v3251
    %3253 = vmatprep.mubr.bf16.mxu0 %v2978
    %3254 = vmatmul.mubr.bf16.gmra.mrb[0].mxu0 %v2977
    %v3255 = vpop.f32.mrb[0].mxu0
    %v3256 = vadd.f32 %v3024, %v3255
    %v3257 = vpop.f32.mrb[0].mxu0
    %v3258 = vadd.f32 %v3028, %v3257
    %v3259 = vpop.f32.mrb[0].mxu0
    %v3260 = vadd.f32 %v3024, %v3259
    %v3261 = vpop.f32.mrb[0].mxu0
    %v3262 = vadd.f32 %v3028, %v3261
    %3263 = vmatprep.mubr.bf16.mxu0 %v2980
    %3264 = vmatmul.mubr.bf16.gmra.mrb[0].mxu0 %v2979
    %v3265 = vpop.f32.mrb[0].mxu0
    %v3266 = vadd.f32 %v3024, %v3265
    %v3267 = vpop.f32.mrb[0].mxu0
    %v3268 = vadd.f32 %v3028, %v3267
    %v3269 = vpop.f32.mrb[0].mxu0
    %v3270 = vadd.f32 %v3024, %v3269
    %v3271 = vpop.f32.mrb[0].mxu0
    %v3272 = vadd.f32 %v3028, %v3271
    %3273 = vmatprep.mubr.bf16.mxu0 %v2982
    %3274 = vmatmul.mubr.bf16.gmra.mrb[0].mxu0 %v2981
    %v3275 = vpop.f32.mrb[0].mxu0
    %v3276 = vadd.f32 %v3024, %v3275
    %v3277 = vpop.f32.mrb[0].mxu0
    %v3278 = vadd.f32 %v3028, %v3277
    %v3279 = vpop.f32.mrb[0].mxu0
    %v3280 = vadd.f32 %v3024, %v3279
    %v3281 = vpop.f32.mrb[0].mxu0
    %v3282 = vadd.f32 %v3028, %v3281
    %3283 = vmatprep.mubr.bf16.mxu0 %v2984
    %3284 = vmatmul.mubr.bf16.gmra.mrb[0].mxu0 %v2983
    %v3285 = vpop.f32.mrb[0].mxu0
    %v3286 = vadd.f32 %v3024, %v3285
    %v3287 = vpop.f32.mrb[0].mxu0
    %v3288 = vadd.f32 %v3028, %v3287
    %v3289 = vpop.f32.mrb[0].mxu0
    %v3290 = vadd.f32 %v3024, %v3289
    %v3291 = vpop.f32.mrb[0].mxu0
    %v3292 = vadd.f32 %v3028, %v3291
    %3293 = vmatprep.mubr.bf16.mxu0 %v2986
    %3294 = vmatmul.mubr.bf16.gmra.mrb[0].mxu0 %v2985
    %v3295 = vpop.f32.mrb[0].mxu0
    %v3296 = vadd.f32 %v3024, %v3295
    %v3297 = vpop.f32.mrb[0].mxu0
    %v3298 = vadd.f32 %v3028, %v3297
    %v3299 = vpop.f32.mrb[0].mxu0
    %v3300 = vadd.f32 %v3024, %v3299
    %v3301 = vpop.f32.mrb[0].mxu0
    %v3302 = vadd.f32 %v3028, %v3301
    %3303 = vdwg.mxu0
    %v3304 = vmax.f32 %v3226, 0.0
    %v3305 = vmax.f32 %v3228, 0.0
    %v3306 = vmax.f32 %v3230, 0.0
    %v3307 = vmax.f32 %v3232, 0.0
    %v3308 = vmax.f32 %v3236, 0.0
    %v3309 = vmax.f32 %v3238, 0.0
    %v3310 = vmax.f32 %v3240, 0.0
    %v3311 = vmax.f32 %v3242, 0.0
    %v3312 = vmax.f32 %v3246, 0.0
    %v3313 = vmax.f32 %v3248, 0.0
    %v3314 = vmax.f32 %v3250, 0.0
    %v3315 = vmax.f32 %v3252, 0.0
    %v3316 = vmax.f32 %v3256, 0.0
    %v3317 = vmax.f32 %v3258, 0.0
    %v3318 = vmax.f32 %v3260, 0.0
    %v3319 = vmax.f32 %v3262, 0.0
    %v3320 = vmax.f32 %v3266, 0.0
    %v3321 = vmax.f32 %v3268, 0.0
    %v3322 = vmax.f32 %v3270, 0.0
    %v3323 = vmax.f32 %v3272, 0.0
    %v3324 = vmax.f32 %v3276, 0.0
    %v3325 = vmax.f32 %v3278, 0.0
    %v3326 = vmax.f32 %v3280, 0.0
    %v3327 = vmax.f32 %v3282, 0.0
    %v3328 = vmax.f32 %v3286, 0.0
    %v3329 = vmax.f32 %v3288, 0.0
    %v3330 = vmax.f32 %v3290, 0.0
    %v3331 = vmax.f32 %v3292, 0.0
    %v3332 = vmax.f32 %v3296, 0.0
    %v3333 = vmax.f32 %v3298, 0.0
    %v3334 = vmax.f32 %v3300, 0.0
    %v3335 = vmax.f32 %v3302, 0.0
    %3336 = vst [vmem:[#allocation11] sm:$0xff] %v3304
    %3337 = vst [vmem:[#allocation11 + $0x8] sm:$0xff] %v3305
    %3338 = vst [vmem:[#allocation11 + $0x10] sm:$0xff] %v3306
    %3339 = vst [vmem:[#allocation11 + $0x18] sm:$0xff] %v3307
    %3340 = vst [vmem:[#allocation11 + $0x20] sm:$0xff] %v3308
    %3341 = vst [vmem:[#allocation11 + $0x28] sm:$0xff] %v3309
    %3342 = vst [vmem:[#allocation11 + $0x30] sm:$0xff] %v3310
    %3343 = vst [vmem:[#allocation11 + $0x38] sm:$0xff] %v3311
    %3344 = vst [vmem:[#allocation11 + $0x40] sm:$0xff] %v3312
    %3345 = vst [vmem:[#allocation11 + $0x48] sm:$0xff] %v3313
    %3346 = vst [vmem:[#allocation11 + $0x50] sm:$0xff] %v3314
    %3347 = vst [vmem:[#allocation11 + $0x58] sm:$0xff] %v3315
    %3348 = vst [vmem:[#allocation11 + $0x60] sm:$0xff] %v3316
    %3349 = vst [vmem:[#allocation11 + $0x68] sm:$0xff] %v3317
    %3350 = vst [vmem:[#allocation11 + $0x70] sm:$0xff] %v3318
    %3351 = vst [vmem:[#allocation11 + $0x78] sm:$0xff] %v3319
    %3352 = vst [vmem:[#allocation11 + $0x80] sm:$0xff] %v3320
    %3353 = vst [vmem:[#allocation11 + $0x88] sm:$0xff] %v3321
    %3354 = vst [vmem:[#allocation11 + $0x90] sm:$0xff] %v3322
    %3355 = vst [vmem:[#allocation11 + $0x98] sm:$0xff] %v3323
    %3356 = vst [vmem:[#allocation11 + $0xa0] sm:$0xff] %v3324
    %3357 = vst [vmem:[#allocation11 + $0xa8] sm:$0xff] %v3325
    %3358 = vst [vmem:[#allocation11 + $0xb0] sm:$0xff] %v3326
    %3359 = vst [vmem:[#allocation11 + $0xb8] sm:$0xff] %v3327
    %3360 = vst [vmem:[#allocation11 + $0xc0] sm:$0xff] %v3328
    %3361 = vst [vmem:[#allocation11 + $0xc8] sm:$0xff] %v3329
    %3362 = vst [vmem:[#allocation11 + $0xd0] sm:$0xff] %v3330
    %3363 = vst [vmem:[#allocation11 + $0xd8] sm:$0xff] %v3331
    %3364 = vst [vmem:[#allocation11 + $0xe0] sm:$0xff] %v3332
    %3365 = vst [vmem:[#allocation11 + $0xe8] sm:$0xff] %v3333
    %3366 = vst [vmem:[#allocation11 + $0xf0] sm:$0xff] %v3334
    %3367 = vst [vmem:[#allocation11 + $0xf8] sm:$0xff] %v3335
    // Predicated region
    $region46: #{_block_forward_impl.1} parent=1 // pred_check
      _
    $region47: #{_block_forward_impl.1} parent=1 // pred_check_branch
      %3369 = sbr.rel (0) target = $region49
    $region48: #{_block_forward_impl.1} parent=1 // pred_region
      %s3371 = ssub.s32 4096, 4096
      %3372 = vsyncadd [#allocation5], %s3371
      %s3373 = sshll.u32 [#allocation11], 4
      %s3374 = int_to_ptr.vmem [resolvable:$true] %s3373
      %3379 = dma.vmem_to_hbm [thread:$0]  %s3374, 4096, %s7, [#allocation5], 256, 256, 16
    $region49: #{_block_forward_impl.1} parent=1 // pred_fallthru
      _
    // Predicated region
    $region50: #{_block_forward_impl.1} parent=1 // pred_check
      _
    $region51: #{_block_forward_impl.1} parent=1 // pred_check_branch
      %3381 = sbr.rel (0) target = $region53
    $region52: #{_block_forward_impl.1} parent=1 // pred_region
      %3382 = dma.done [#allocation5], 4096
    $region53: #{_block_forward_impl.1} parent=1 // pred_fallthru
      _
    %3383 = vsyncpa [#allocation4], 1
    %3384 = vsyncpa [#allocation7], 1
    %3385 = vsyncpa [#allocation10], 1
    %3386 = vsyncpa [#allocation5], 1

</llo_original>
